<compile_context>
chip_gen: v5e
topology: v5e:2x2
jax: 0.10.0
libtpu: 0.0.40
codegen_flags: <defaults>
</compile_context>

<pallas_src>
import functools

import jax
import jax.numpy as jnp
from jax.experimental import pallas as pl
from jax.experimental.pallas import tpu as pltpu


# ----------------------------------------------------------------------------
# In-kernel helper (plain traced JAX, called while tracing the kernel body)
# ----------------------------------------------------------------------------
def _lstm_recurrence(gx, whh_ref, hidden, seq_len, batch, *, time_varying,
                     collect):
    """Sequential LSTM recurrence with precomputed, gate-fused input terms.

    gx: if time_varying, (S*B, 4H) with time-major rows (row = t*B + b);
        otherwise (B, 4H) (time-constant input, e.g. repeated embedding).
    whh_ref: (H, 4H) fused recurrent weights, gate order (i, f, o, g).
    Returns (seq, h_last) where seq is (S*B, H) time-major (or None if not
    collected) and h_last is the final hidden state (B, H).
    """
    H = hidden
    whh = whh_ref[...]                                  # (H, 4H), loaded once
    h = jnp.zeros((batch, H), jnp.float32)
    c = jnp.zeros((batch, H), jnp.float32)
    outs = []
    for t in range(seq_len):      # statically unrolled: seq_len is a trace const
        g_t = gx[t * batch:(t + 1) * batch, :] if time_varying else gx
        # Single fused recurrent matmul on the critical path: (B,H)@(H,4H).
        z = g_t + jnp.dot(h, whh, preferred_element_type=jnp.float32)
        # Full-width activations (2 EUP pushes), then select gate columns.
        sg = jax.nn.sigmoid(z)                          # gates i, f, o live here
        th = jnp.tanh(z)                                # gate g lives here
        i = sg[:, 0:H]
        f = sg[:, H:2 * H]
        o = sg[:, 2 * H:3 * H]
        g = th[:, 3 * H:4 * H]
        c = f * c + i * g
        h = o * jnp.tanh(c)
        if collect:
            outs.append(h)
    seq = jnp.concatenate(outs, axis=0) if collect else None   # (S*B, H)
    return seq, h


# ----------------------------------------------------------------------------
# Fused Pallas kernel: full RecurrentAutoencoder forward pass
# ----------------------------------------------------------------------------
def _fused_autoencoder_kernel(
        x_ref,                                   # (S*B, F) time-major rows
        e1_wih, e1_whh, e1_b,                    # encoder rnn1: F  -> 2E
        e2_wih, e2_whh, e2_b,                    # encoder rnn2: 2E -> E
        d1_wih, d1_whh, d1_b,                    # decoder rnn1: E  -> E
        d2_wih, d2_whh, d2_b,                    # decoder rnn2: E  -> 2E
        out_w, out_b,                            # output linear: 2E -> F
        y_ref,                                   # (S*B, F) time-major rows
        *, seq_len, batch, embedding_dim, n_features):
    S, B = seq_len, batch
    E, H = embedding_dim, 2 * embedding_dim

    # ---------------- encoder ----------------
    # Encoder rnn1 input gates.  n_features == 1 makes the precompute a K=1
    # rank-1 outer product, so use a VPU broadcast multiply instead of the MXU.
    if n_features == 1:
        gx = x_ref[...] * e1_wih[...] + e1_b[...]        # (S*B,1)*(1,4H)+(1,4H)
    else:
        gx = (jnp.dot(x_ref[...], e1_wih[...],
                      preferred_element_type=jnp.float32) + e1_b[...])
    seq1, _ = _lstm_recurrence(gx, e1_whh, H, S, B,
                               time_varying=True, collect=True)    # (S*B, 2E)

    # Encoder rnn2: only the last-timestep hidden (the embedding) is needed.
    gx = (jnp.dot(seq1, e2_wih[...], preferred_element_type=jnp.float32)
          + e2_b[...])                                              # (S*B, 4E)
    _, emb = _lstm_recurrence(gx, e2_whh, E, S, B,
                              time_varying=True, collect=False)     # (B, E)

    # ---------------- decoder ----------------
    # dec rnn1 input is `emb` repeated over time -> its input-gate term is
    # time-constant: compute once; never materialize the (B, S, E) repeat.
    gc = (jnp.dot(emb, d1_wih[...], preferred_element_type=jnp.float32)
          + d1_b[...])                                              # (B, 4E)
    seq3, _ = _lstm_recurrence(gc, d1_whh, E, S, B,
                               time_varying=False, collect=True)    # (S*B, E)

    gx = (jnp.dot(seq3, d2_wih[...], preferred_element_type=jnp.float32)
          + d2_b[...])                                              # (S*B, 8E)
    seq4, _ = _lstm_recurrence(gx, d2_whh, H, S, B,
                               time_varying=True, collect=True)     # (S*B, 2E)

    # Fused TimeDistributed(Linear): one (S*B, 2E) @ (2E, F) matmul.
    # F=1 here, so the final store is a single-lane store (negligible at 64 B);
    # if F grows, keep this result lane-dense and slice in the wrapper.
    y_ref[...] = (jnp.dot(seq4, out_w[...],
                          preferred_element_type=jnp.float32) + out_b[...])


# ----------------------------------------------------------------------------
# Wrapper: one gridless pallas_call, everything VMEM-resident, no scratch
# ----------------------------------------------------------------------------
def recurrent_autoencoder_forward(params, x, *, embedding_dim):
    """x: (B, S, n_features) batch-first.  Returns (B, S, n_features)."""
    B, S, F = x.shape

    # Single tiny layout transform: time-major flattened rows (row = t*B + b).
    x2d = jnp.transpose(x, (1, 0, 2)).reshape(S * B, F)

    kernel = functools.partial(
        _fused_autoencoder_kernel,
        seq_len=S, batch=B, embedding_dim=embedding_dim, n_features=F)

    flat_args = (
        x2d,
        params["enc_rnn1"]["wih"], params["enc_rnn1"]["whh"], params["enc_rnn1"]["b"],
        params["enc_rnn2"]["wih"], params["enc_rnn2"]["whh"], params["enc_rnn2"]["b"],
        params["dec_rnn1"]["wih"], params["dec_rnn1"]["whh"], params["dec_rnn1"]["b"],
        params["dec_rnn2"]["wih"], params["dec_rnn2"]["whh"], params["dec_rnn2"]["b"],
        params["dec_out"]["w_t"], params["dec_out"]["b"],
    )

    y2d = pl.pallas_call(
        kernel,
        out_shape=jax.ShapeDtypeStruct((S * B, F), jnp.float32),
        in_specs=[pl.BlockSpec(memory_space=pltpu.MemorySpace.VMEM)
                  for _ in flat_args],
        out_specs=pl.BlockSpec(memory_space=pltpu.MemorySpace.VMEM),
    )(*flat_args)

    # Back to batch-first (B, S, F); kernel rows were time-major (t*B + b).
    return jnp.transpose(y2d.reshape(S, B, F), (1, 0, 2))


# ----------------------------------------------------------------------------
# Parameter init (deterministic, mimics PyTorch U(-1/sqrt(H), 1/sqrt(H)))
# ----------------------------------------------------------------------------
def init_lstm(key, in_dim, hidden):
    k = 1.0 / (hidden ** 0.5)
    k1, k2, k3, k4 = jax.random.split(key, 4)
    # PyTorch layout: (4H, In) / (4H, H), gate order (i, f, g, o).
    w_ih = jax.random.uniform(k1, (4 * hidden, in_dim), jnp.float32, -k, k)
    w_hh = jax.random.uniform(k2, (4 * hidden, hidden), jnp.float32, -k, k)
    b_ih = jax.random.uniform(k3, (4 * hidden,), jnp.float32, -k, k)
    b_hh = jax.random.uniform(k4, (4 * hidden,), jnp.float32, -k, k)

    # Reorder gates (i, f, g, o) -> (i, f, o, g) and fuse along the output
    # (lane) axis so every gate matmul is a single lane-dense (·, 4H) dot.
    perm = jnp.array([0, 1, 3, 2])

    def fuse(w):                                      # (4H, X) -> (X, 4H)
        return jnp.transpose(
            w.reshape(4, hidden, -1)[perm].reshape(4 * hidden, -1))

    wih = fuse(w_ih)                                  # (In, 4H)
    whh = fuse(w_hh)                                  # (H, 4H)
    b = (b_ih + b_hh).reshape(4, hidden)[perm].reshape(1, 4 * hidden)
    return {"wih": wih, "whh": whh, "b": b}


def init_linear(key, in_dim, out_dim):
    k = 1.0 / (in_dim ** 0.5)
    k1, k2 = jax.random.split(key, 2)
    w = jax.random.uniform(k1, (out_dim, in_dim), jnp.float32, -k, k)
    b = jax.random.uniform(k2, (out_dim,), jnp.float32, -k, k)
    return {"w_t": w.T, "b": b.reshape(1, out_dim)}


def init_recurrent_autoencoder(key, n_features, embedding_dim):
    hidden_dim = 2 * embedding_dim
    k1, k2, k3, k4, k5 = jax.random.split(key, 5)
    return {
        # Encoder: LSTM(n_features -> 2E), LSTM(2E -> E)
        "enc_rnn1": init_lstm(k1, n_features, hidden_dim),
        "enc_rnn2": init_lstm(k2, hidden_dim, embedding_dim),
        # Decoder: LSTM(E -> E), LSTM(E -> 2E), Linear(2E -> n_features)
        "dec_rnn1": init_lstm(k3, embedding_dim, embedding_dim),
        "dec_rnn2": init_lstm(k4, embedding_dim, hidden_dim),
        "dec_out": init_linear(k5, hidden_dim, n_features),
    }


# ----------------------------------------------------------------------------
# Pure-JAX reference (mirrors RecurrentAutoencoder.forward) for validation
# ----------------------------------------------------------------------------
def _reference_forward(params, x, *, embedding_dim):
    B, S, F = x.shape
    E, H2 = embedding_dim, 2 * embedding_dim
    hp = jax.lax.Precision.HIGHEST

    def lstm(xs, p, hidden):
        h = jnp.zeros((B, hidden), jnp.float32)
        c = jnp.zeros((B, hidden), jnp.float32)
        outs = []
        for t in range(S):
            xt = xs[:, t, :]
            z = (jnp.dot(xt, p["wih"], precision=hp)
                 + jnp.dot(h, p["whh"], precision=hp) + p["b"])
            i = jax.nn.sigmoid(z[:, 0:hidden])
            f = jax.nn.sigmoid(z[:, hidden:2 * hidden])
            o = jax.nn.sigmoid(z[:, 2 * hidden:3 * hidden])
            g = jnp.tanh(z[:, 3 * hidden:4 * hidden])
            c = f * c + i * g
            h = o * jnp.tanh(c)
            outs.append(h)
        return jnp.stack(outs, axis=1)  # (B, S, hidden)

    h = lstm(x, params["enc_rnn1"], H2)
    h = lstm(h, params["enc_rnn2"], E)
    emb = h[:, -1, :]
    rep = jnp.broadcast_to(emb[:, None, :], (B, S, E))
    h = lstm(rep, params["dec_rnn1"], E)
    h = lstm(h, params["dec_rnn2"], H2)
    y = (jnp.dot(h.reshape(B * S, H2), params["dec_out"]["w_t"], precision=hp)
         + params["dec_out"]["b"])
    return y.reshape(B, S, F)


if __name__ == "__main__":
    batch = 2
    seq_len = 8
    n_features = 1
    embedding_dim = 32

    key = jax.random.PRNGKey(0)
    k_params, k_x = jax.random.split(key)

    params = init_recurrent_autoencoder(k_params, n_features, embedding_dim)
    x = jax.random.normal(k_x, (batch, seq_len, n_features), jnp.float32)

    fwd = jax.jit(functools.partial(recurrent_autoencoder_forward,
                                    embedding_dim=embedding_dim))
    y = fwd(params, x)
    jax.block_until_ready(y)

    assert y.shape == (batch, seq_len, n_features), y.shape
    assert y.dtype == jnp.float32

    # Numerical sanity check against the plain-JAX reference of the same model
    # (kernel dots use default MXU f32 precision; reference uses HIGHEST).
    y_ref = _reference_forward(params, x, embedding_dim=embedding_dim)
    max_err = float(jnp.max(jnp.abs(y - y_ref)))
    assert max_err < 2e-3, f"kernel/reference mismatch: max|diff|={max_err}"

    print("KERNEL_OK")
</pallas_src>

<mosaic_0001>
module attributes {stable_mosaic.version = 11 : i64} {
  func.func @_fused_autoencoder_kernel(%arg0: memref<16x1xf32, #tpu.memory_space<vmem>>, %arg1: memref<1x256xf32, #tpu.memory_space<vmem>>, %arg2: memref<64x256xf32, #tpu.memory_space<vmem>>, %arg3: memref<1x256xf32, #tpu.memory_space<vmem>>, %arg4: memref<64x128xf32, #tpu.memory_space<vmem>>, %arg5: memref<32x128xf32, #tpu.memory_space<vmem>>, %arg6: memref<1x128xf32, #tpu.memory_space<vmem>>, %arg7: memref<32x128xf32, #tpu.memory_space<vmem>>, %arg8: memref<32x128xf32, #tpu.memory_space<vmem>>, %arg9: memref<1x128xf32, #tpu.memory_space<vmem>>, %arg10: memref<32x256xf32, #tpu.memory_space<vmem>>, %arg11: memref<64x256xf32, #tpu.memory_space<vmem>>, %arg12: memref<1x256xf32, #tpu.memory_space<vmem>>, %arg13: memref<64x1xf32, #tpu.memory_space<vmem>>, %arg14: memref<1x1xf32, #tpu.memory_space<vmem>>, %arg15: memref<16x1xf32, #tpu.memory_space<vmem>>) attributes {dimension_semantics = [], scalar_prefetch = 0 : i64, scratch_operands = 0 : i64, tpu.core_type = #tpu.core_type<tc>} {
    %c0 = arith.constant 0 : index
    %c0_0 = arith.constant 0 : index
    %0 = vector.load %arg0[%c0, %c0_0] : memref<16x1xf32, #tpu.memory_space<vmem>>, vector<16x1xf32>
    %c0_1 = arith.constant 0 : index
    %c0_2 = arith.constant 0 : index
    %1 = vector.load %arg1[%c0_1, %c0_2] : memref<1x256xf32, #tpu.memory_space<vmem>>, vector<1x256xf32>
    %2 = vector.broadcast %0 : vector<16x1xf32> to vector<16x256xf32>
    %3 = vector.broadcast %1 : vector<1x256xf32> to vector<16x256xf32>
    %4 = arith.mulf %2, %3 : vector<16x256xf32>
    %c0_3 = arith.constant 0 : index
    %c0_4 = arith.constant 0 : index
    %5 = vector.load %arg3[%c0_3, %c0_4] : memref<1x256xf32, #tpu.memory_space<vmem>>, vector<1x256xf32>
    %6 = vector.broadcast %5 : vector<1x256xf32> to vector<16x256xf32>
    %7 = arith.addf %4, %6 : vector<16x256xf32>
    %c0_5 = arith.constant 0 : index
    %c0_6 = arith.constant 0 : index
    %8 = vector.load %arg2[%c0_5, %c0_6] : memref<64x256xf32, #tpu.memory_space<vmem>>, vector<64x256xf32>
    %cst = arith.constant 0.000000e+00 : f32
    %9 = vector.broadcast %cst : f32 to vector<2x64xf32>
    %cst_7 = arith.constant 0.000000e+00 : f32
    %10 = vector.broadcast %cst_7 : f32 to vector<2x64xf32>
    %11 = vector.extract_strided_slice %7 {offsets = [0, 0], sizes = [2, 256], strides = [1, 1]} : vector<16x256xf32> to vector<2x256xf32>
    %cst_8 = arith.constant dense<0.000000e+00> : vector<2x256xf32>
    %12 = tpu.matmul %9, %8, %cst_8 {dimension_numbers = #tpu.dot_dimension_numbers<[1], [0], [0], [1], [0, 0, 1, 1], [], []>} : vector<2x64xf32>, vector<64x256xf32>, vector<2x256xf32> -> vector<2x256xf32>
    %13 = arith.addf %11, %12 : vector<2x256xf32>
    %14 = arith.negf %13 : vector<2x256xf32>
    %15 = math.exp %14 : vector<2x256xf32>
    %cst_9 = arith.constant 1.000000e+00 : f32
    %16 = vector.broadcast %cst_9 : f32 to vector<2x256xf32>
    %17 = arith.addf %16, %15 : vector<2x256xf32>
    %18 = arith.divf %16, %17 : vector<2x256xf32>
    %19 = math.tanh %13 : vector<2x256xf32>
    %20 = vector.extract_strided_slice %18 {offsets = [0, 0], sizes = [2, 64], strides = [1, 1]} : vector<2x256xf32> to vector<2x64xf32>
    %21 = vector.extract_strided_slice %18 {offsets = [0, 64], sizes = [2, 64], strides = [1, 1]} : vector<2x256xf32> to vector<2x64xf32>
    %22 = vector.extract_strided_slice %18 {offsets = [0, 128], sizes = [2, 64], strides = [1, 1]} : vector<2x256xf32> to vector<2x64xf32>
    %23 = vector.extract_strided_slice %19 {offsets = [0, 192], sizes = [2, 64], strides = [1, 1]} : vector<2x256xf32> to vector<2x64xf32>
    %24 = arith.mulf %21, %10 : vector<2x64xf32>
    %25 = arith.mulf %20, %23 : vector<2x64xf32>
    %26 = arith.addf %24, %25 : vector<2x64xf32>
    %27 = math.tanh %26 : vector<2x64xf32>
    %28 = arith.mulf %22, %27 : vector<2x64xf32>
    %29 = vector.extract_strided_slice %7 {offsets = [2, 0], sizes = [2, 256], strides = [1, 1]} : vector<16x256xf32> to vector<2x256xf32>
    %cst_10 = arith.constant dense<0.000000e+00> : vector<2x256xf32>
    %30 = tpu.matmul %28, %8, %cst_10 {dimension_numbers = #tpu.dot_dimension_numbers<[1], [0], [0], [1], [0, 0, 1, 1], [], []>} : vector<2x64xf32>, vector<64x256xf32>, vector<2x256xf32> -> vector<2x256xf32>
    %31 = arith.addf %29, %30 : vector<2x256xf32>
    %32 = arith.negf %31 : vector<2x256xf32>
    %33 = math.exp %32 : vector<2x256xf32>
    %cst_11 = arith.constant 1.000000e+00 : f32
    %34 = vector.broadcast %cst_11 : f32 to vector<2x256xf32>
    %35 = arith.addf %34, %33 : vector<2x256xf32>
    %36 = arith.divf %34, %35 : vector<2x256xf32>
    %37 = math.tanh %31 : vector<2x256xf32>
    %38 = vector.extract_strided_slice %36 {offsets = [0, 0], sizes = [2, 64], strides = [1, 1]} : vector<2x256xf32> to vector<2x64xf32>
    %39 = vector.extract_strided_slice %36 {offsets = [0, 64], sizes = [2, 64], strides = [1, 1]} : vector<2x256xf32> to vector<2x64xf32>
    %40 = vector.extract_strided_slice %36 {offsets = [0, 128], sizes = [2, 64], strides = [1, 1]} : vector<2x256xf32> to vector<2x64xf32>
    %41 = vector.extract_strided_slice %37 {offsets = [0, 192], sizes = [2, 64], strides = [1, 1]} : vector<2x256xf32> to vector<2x64xf32>
    %42 = arith.mulf %39, %26 : vector<2x64xf32>
    %43 = arith.mulf %38, %41 : vector<2x64xf32>
    %44 = arith.addf %42, %43 : vector<2x64xf32>
    %45 = math.tanh %44 : vector<2x64xf32>
    %46 = arith.mulf %40, %45 : vector<2x64xf32>
    %47 = vector.extract_strided_slice %7 {offsets = [4, 0], sizes = [2, 256], strides = [1, 1]} : vector<16x256xf32> to vector<2x256xf32>
    %cst_12 = arith.constant dense<0.000000e+00> : vector<2x256xf32>
    %48 = tpu.matmul %46, %8, %cst_12 {dimension_numbers = #tpu.dot_dimension_numbers<[1], [0], [0], [1], [0, 0, 1, 1], [], []>} : vector<2x64xf32>, vector<64x256xf32>, vector<2x256xf32> -> vector<2x256xf32>
    %49 = arith.addf %47, %48 : vector<2x256xf32>
    %50 = arith.negf %49 : vector<2x256xf32>
    %51 = math.exp %50 : vector<2x256xf32>
    %cst_13 = arith.constant 1.000000e+00 : f32
    %52 = vector.broadcast %cst_13 : f32 to vector<2x256xf32>
    %53 = arith.addf %52, %51 : vector<2x256xf32>
    %54 = arith.divf %52, %53 : vector<2x256xf32>
    %55 = math.tanh %49 : vector<2x256xf32>
    %56 = vector.extract_strided_slice %54 {offsets = [0, 0], sizes = [2, 64], strides = [1, 1]} : vector<2x256xf32> to vector<2x64xf32>
    %57 = vector.extract_strided_slice %54 {offsets = [0, 64], sizes = [2, 64], strides = [1, 1]} : vector<2x256xf32> to vector<2x64xf32>
    %58 = vector.extract_strided_slice %54 {offsets = [0, 128], sizes = [2, 64], strides = [1, 1]} : vector<2x256xf32> to vector<2x64xf32>
    %59 = vector.extract_strided_slice %55 {offsets = [0, 192], sizes = [2, 64], strides = [1, 1]} : vector<2x256xf32> to vector<2x64xf32>
    %60 = arith.mulf %57, %44 : vector<2x64xf32>
    %61 = arith.mulf %56, %59 : vector<2x64xf32>
    %62 = arith.addf %60, %61 : vector<2x64xf32>
    %63 = math.tanh %62 : vector<2x64xf32>
    %64 = arith.mulf %58, %63 : vector<2x64xf32>
    %65 = vector.extract_strided_slice %7 {offsets = [6, 0], sizes = [2, 256], strides = [1, 1]} : vector<16x256xf32> to vector<2x256xf32>
    %cst_14 = arith.constant dense<0.000000e+00> : vector<2x256xf32>
    %66 = tpu.matmul %64, %8, %cst_14 {dimension_numbers = #tpu.dot_dimension_numbers<[1], [0], [0], [1], [0, 0, 1, 1], [], []>} : vector<2x64xf32>, vector<64x256xf32>, vector<2x256xf32> -> vector<2x256xf32>
    %67 = arith.addf %65, %66 : vector<2x256xf32>
    %68 = arith.negf %67 : vector<2x256xf32>
    %69 = math.exp %68 : vector<2x256xf32>
    %cst_15 = arith.constant 1.000000e+00 : f32
    %70 = vector.broadcast %cst_15 : f32 to vector<2x256xf32>
    %71 = arith.addf %70, %69 : vector<2x256xf32>
    %72 = arith.divf %70, %71 : vector<2x256xf32>
    %73 = math.tanh %67 : vector<2x256xf32>
    %74 = vector.extract_strided_slice %72 {offsets = [0, 0], sizes = [2, 64], strides = [1, 1]} : vector<2x256xf32> to vector<2x64xf32>
    %75 = vector.extract_strided_slice %72 {offsets = [0, 64], sizes = [2, 64], strides = [1, 1]} : vector<2x256xf32> to vector<2x64xf32>
    %76 = vector.extract_strided_slice %72 {offsets = [0, 128], sizes = [2, 64], strides = [1, 1]} : vector<2x256xf32> to vector<2x64xf32>
    %77 = vector.extract_strided_slice %73 {offsets = [0, 192], sizes = [2, 64], strides = [1, 1]} : vector<2x256xf32> to vector<2x64xf32>
    %78 = arith.mulf %75, %62 : vector<2x64xf32>
    %79 = arith.mulf %74, %77 : vector<2x64xf32>
    %80 = arith.addf %78, %79 : vector<2x64xf32>
    %81 = math.tanh %80 : vector<2x64xf32>
    %82 = arith.mulf %76, %81 : vector<2x64xf32>
    %83 = vector.extract_strided_slice %7 {offsets = [8, 0], sizes = [2, 256], strides = [1, 1]} : vector<16x256xf32> to vector<2x256xf32>
    %cst_16 = arith.constant dense<0.000000e+00> : vector<2x256xf32>
    %84 = tpu.matmul %82, %8, %cst_16 {dimension_numbers = #tpu.dot_dimension_numbers<[1], [0], [0], [1], [0, 0, 1, 1], [], []>} : vector<2x64xf32>, vector<64x256xf32>, vector<2x256xf32> -> vector<2x256xf32>
    %85 = arith.addf %83, %84 : vector<2x256xf32>
    %86 = arith.negf %85 : vector<2x256xf32>
    %87 = math.exp %86 : vector<2x256xf32>
    %cst_17 = arith.constant 1.000000e+00 : f32
    %88 = vector.broadcast %cst_17 : f32 to vector<2x256xf32>
    %89 = arith.addf %88, %87 : vector<2x256xf32>
    %90 = arith.divf %88, %89 : vector<2x256xf32>
    %91 = math.tanh %85 : vector<2x256xf32>
    %92 = vector.extract_strided_slice %90 {offsets = [0, 0], sizes = [2, 64], strides = [1, 1]} : vector<2x256xf32> to vector<2x64xf32>
    %93 = vector.extract_strided_slice %90 {offsets = [0, 64], sizes = [2, 64], strides = [1, 1]} : vector<2x256xf32> to vector<2x64xf32>
    %94 = vector.extract_strided_slice %90 {offsets = [0, 128], sizes = [2, 64], strides = [1, 1]} : vector<2x256xf32> to vector<2x64xf32>
    %95 = vector.extract_strided_slice %91 {offsets = [0, 192], sizes = [2, 64], strides = [1, 1]} : vector<2x256xf32> to vector<2x64xf32>
    %96 = arith.mulf %93, %80 : vector<2x64xf32>
    %97 = arith.mulf %92, %95 : vector<2x64xf32>
    %98 = arith.addf %96, %97 : vector<2x64xf32>
    %99 = math.tanh %98 : vector<2x64xf32>
    %100 = arith.mulf %94, %99 : vector<2x64xf32>
    %101 = vector.extract_strided_slice %7 {offsets = [10, 0], sizes = [2, 256], strides = [1, 1]} : vector<16x256xf32> to vector<2x256xf32>
    %cst_18 = arith.constant dense<0.000000e+00> : vector<2x256xf32>
    %102 = tpu.matmul %100, %8, %cst_18 {dimension_numbers = #tpu.dot_dimension_numbers<[1], [0], [0], [1], [0, 0, 1, 1], [], []>} : vector<2x64xf32>, vector<64x256xf32>, vector<2x256xf32> -> vector<2x256xf32>
    %103 = arith.addf %101, %102 : vector<2x256xf32>
    %104 = arith.negf %103 : vector<2x256xf32>
    %105 = math.exp %104 : vector<2x256xf32>
    %cst_19 = arith.constant 1.000000e+00 : f32
    %106 = vector.broadcast %cst_19 : f32 to vector<2x256xf32>
    %107 = arith.addf %106, %105 : vector<2x256xf32>
    %108 = arith.divf %106, %107 : vector<2x256xf32>
    %109 = math.tanh %103 : vector<2x256xf32>
    %110 = vector.extract_strided_slice %108 {offsets = [0, 0], sizes = [2, 64], strides = [1, 1]} : vector<2x256xf32> to vector<2x64xf32>
    %111 = vector.extract_strided_slice %108 {offsets = [0, 64], sizes = [2, 64], strides = [1, 1]} : vector<2x256xf32> to vector<2x64xf32>
    %112 = vector.extract_strided_slice %108 {offsets = [0, 128], sizes = [2, 64], strides = [1, 1]} : vector<2x256xf32> to vector<2x64xf32>
    %113 = vector.extract_strided_slice %109 {offsets = [0, 192], sizes = [2, 64], strides = [1, 1]} : vector<2x256xf32> to vector<2x64xf32>
    %114 = arith.mulf %111, %98 : vector<2x64xf32>
    %115 = arith.mulf %110, %113 : vector<2x64xf32>
    %116 = arith.addf %114, %115 : vector<2x64xf32>
    %117 = math.tanh %116 : vector<2x64xf32>
    %118 = arith.mulf %112, %117 : vector<2x64xf32>
    %119 = vector.extract_strided_slice %7 {offsets = [12, 0], sizes = [2, 256], strides = [1, 1]} : vector<16x256xf32> to vector<2x256xf32>
    %cst_20 = arith.constant dense<0.000000e+00> : vector<2x256xf32>
    %120 = tpu.matmul %118, %8, %cst_20 {dimension_numbers = #tpu.dot_dimension_numbers<[1], [0], [0], [1], [0, 0, 1, 1], [], []>} : vector<2x64xf32>, vector<64x256xf32>, vector<2x256xf32> -> vector<2x256xf32>
    %121 = arith.addf %119, %120 : vector<2x256xf32>
    %122 = arith.negf %121 : vector<2x256xf32>
    %123 = math.exp %122 : vector<2x256xf32>
    %cst_21 = arith.constant 1.000000e+00 : f32
    %124 = vector.broadcast %cst_21 : f32 to vector<2x256xf32>
    %125 = arith.addf %124, %123 : vector<2x256xf32>
    %126 = arith.divf %124, %125 : vector<2x256xf32>
    %127 = math.tanh %121 : vector<2x256xf32>
    %128 = vector.extract_strided_slice %126 {offsets = [0, 0], sizes = [2, 64], strides = [1, 1]} : vector<2x256xf32> to vector<2x64xf32>
    %129 = vector.extract_strided_slice %126 {offsets = [0, 64], sizes = [2, 64], strides = [1, 1]} : vector<2x256xf32> to vector<2x64xf32>
    %130 = vector.extract_strided_slice %126 {offsets = [0, 128], sizes = [2, 64], strides = [1, 1]} : vector<2x256xf32> to vector<2x64xf32>
    %131 = vector.extract_strided_slice %127 {offsets = [0, 192], sizes = [2, 64], strides = [1, 1]} : vector<2x256xf32> to vector<2x64xf32>
    %132 = arith.mulf %129, %116 : vector<2x64xf32>
    %133 = arith.mulf %128, %131 : vector<2x64xf32>
    %134 = arith.addf %132, %133 : vector<2x64xf32>
    %135 = math.tanh %134 : vector<2x64xf32>
    %136 = arith.mulf %130, %135 : vector<2x64xf32>
    %137 = vector.extract_strided_slice %7 {offsets = [14, 0], sizes = [2, 256], strides = [1, 1]} : vector<16x256xf32> to vector<2x256xf32>
    %cst_22 = arith.constant dense<0.000000e+00> : vector<2x256xf32>
    %138 = tpu.matmul %136, %8, %cst_22 {dimension_numbers = #tpu.dot_dimension_numbers<[1], [0], [0], [1], [0, 0, 1, 1], [], []>} : vector<2x64xf32>, vector<64x256xf32>, vector<2x256xf32> -> vector<2x256xf32>
    %139 = arith.addf %137, %138 : vector<2x256xf32>
    %140 = arith.negf %139 : vector<2x256xf32>
    %141 = math.exp %140 : vector<2x256xf32>
    %cst_23 = arith.constant 1.000000e+00 : f32
    %142 = vector.broadcast %cst_23 : f32 to vector<2x256xf32>
    %143 = arith.addf %142, %141 : vector<2x256xf32>
    %144 = arith.divf %142, %143 : vector<2x256xf32>
    %145 = math.tanh %139 : vector<2x256xf32>
    %146 = vector.extract_strided_slice %144 {offsets = [0, 0], sizes = [2, 64], strides = [1, 1]} : vector<2x256xf32> to vector<2x64xf32>
    %147 = vector.extract_strided_slice %144 {offsets = [0, 64], sizes = [2, 64], strides = [1, 1]} : vector<2x256xf32> to vector<2x64xf32>
    %148 = vector.extract_strided_slice %144 {offsets = [0, 128], sizes = [2, 64], strides = [1, 1]} : vector<2x256xf32> to vector<2x64xf32>
    %149 = vector.extract_strided_slice %145 {offsets = [0, 192], sizes = [2, 64], strides = [1, 1]} : vector<2x256xf32> to vector<2x64xf32>
    %150 = arith.mulf %147, %134 : vector<2x64xf32>
    %151 = arith.mulf %146, %149 : vector<2x64xf32>
    %152 = arith.addf %150, %151 : vector<2x64xf32>
    %153 = math.tanh %152 : vector<2x64xf32>
    %154 = arith.mulf %148, %153 : vector<2x64xf32>
    %155 = tpu.concatenate %28, %46, %64, %82, %100, %118, %136, %154 in 0 : vector<2x64xf32>, vector<2x64xf32>, vector<2x64xf32>, vector<2x64xf32>, vector<2x64xf32>, vector<2x64xf32>, vector<2x64xf32>, vector<2x64xf32> -> vector<16x64xf32>
    %c0_24 = arith.constant 0 : index
    %c0_25 = arith.constant 0 : index
    %156 = vector.load %arg4[%c0_24, %c0_25] : memref<64x128xf32, #tpu.memory_space<vmem>>, vector<64x128xf32>
    %cst_26 = arith.constant dense<0.000000e+00> : vector<16x128xf32>
    %157 = tpu.matmul %155, %156, %cst_26 {dimension_numbers = #tpu.dot_dimension_numbers<[1], [0], [0], [1], [0, 0, 1, 1], [], []>} : vector<16x64xf32>, vector<64x128xf32>, vector<16x128xf32> -> vector<16x128xf32>
    %c0_27 = arith.constant 0 : index
    %c0_28 = arith.constant 0 : index
    %158 = vector.load %arg6[%c0_27, %c0_28] : memref<1x128xf32, #tpu.memory_space<vmem>>, vector<1x128xf32>
    %159 = vector.broadcast %158 : vector<1x128xf32> to vector<16x128xf32>
    %160 = arith.addf %157, %159 : vector<16x128xf32>
    %c0_29 = arith.constant 0 : index
    %c0_30 = arith.constant 0 : index
    %161 = vector.load %arg5[%c0_29, %c0_30] : memref<32x128xf32, #tpu.memory_space<vmem>>, vector<32x128xf32>
    %cst_31 = arith.constant 0.000000e+00 : f32
    %162 = vector.broadcast %cst_31 : f32 to vector<2x32xf32>
    %cst_32 = arith.constant 0.000000e+00 : f32
    %163 = vector.broadcast %cst_32 : f32 to vector<2x32xf32>
    %164 = vector.extract_strided_slice %160 {offsets = [0, 0], sizes = [2, 128], strides = [1, 1]} : vector<16x128xf32> to vector<2x128xf32>
    %cst_33 = arith.constant dense<0.000000e+00> : vector<2x128xf32>
    %165 = tpu.matmul %162, %161, %cst_33 {dimension_numbers = #tpu.dot_dimension_numbers<[1], [0], [0], [1], [0, 0, 1, 1], [], []>} : vector<2x32xf32>, vector<32x128xf32>, vector<2x128xf32> -> vector<2x128xf32>
    %166 = arith.addf %164, %165 : vector<2x128xf32>
    %167 = arith.negf %166 : vector<2x128xf32>
    %168 = math.exp %167 : vector<2x128xf32>
    %cst_34 = arith.constant 1.000000e+00 : f32
    %169 = vector.broadcast %cst_34 : f32 to vector<2x128xf32>
    %170 = arith.addf %169, %168 : vector<2x128xf32>
    %171 = arith.divf %169, %170 : vector<2x128xf32>
    %172 = math.tanh %166 : vector<2x128xf32>
    %173 = vector.extract_strided_slice %171 {offsets = [0, 0], sizes = [2, 32], strides = [1, 1]} : vector<2x128xf32> to vector<2x32xf32>
    %174 = vector.extract_strided_slice %171 {offsets = [0, 32], sizes = [2, 32], strides = [1, 1]} : vector<2x128xf32> to vector<2x32xf32>
    %175 = vector.extract_strided_slice %171 {offsets = [0, 64], sizes = [2, 32], strides = [1, 1]} : vector<2x128xf32> to vector<2x32xf32>
    %176 = vector.extract_strided_slice %172 {offsets = [0, 96], sizes = [2, 32], strides = [1, 1]} : vector<2x128xf32> to vector<2x32xf32>
    %177 = arith.mulf %174, %163 : vector<2x32xf32>
    %178 = arith.mulf %173, %176 : vector<2x32xf32>
    %179 = arith.addf %177, %178 : vector<2x32xf32>
    %180 = math.tanh %179 : vector<2x32xf32>
    %181 = arith.mulf %175, %180 : vector<2x32xf32>
    %182 = vector.extract_strided_slice %160 {offsets = [2, 0], sizes = [2, 128], strides = [1, 1]} : vector<16x128xf32> to vector<2x128xf32>
    %cst_35 = arith.constant dense<0.000000e+00> : vector<2x128xf32>
    %183 = tpu.matmul %181, %161, %cst_35 {dimension_numbers = #tpu.dot_dimension_numbers<[1], [0], [0], [1], [0, 0, 1, 1], [], []>} : vector<2x32xf32>, vector<32x128xf32>, vector<2x128xf32> -> vector<2x128xf32>
    %184 = arith.addf %182, %183 : vector<2x128xf32>
    %185 = arith.negf %184 : vector<2x128xf32>
    %186 = math.exp %185 : vector<2x128xf32>
    %cst_36 = arith.constant 1.000000e+00 : f32
    %187 = vector.broadcast %cst_36 : f32 to vector<2x128xf32>
    %188 = arith.addf %187, %186 : vector<2x128xf32>
    %189 = arith.divf %187, %188 : vector<2x128xf32>
    %190 = math.tanh %184 : vector<2x128xf32>
    %191 = vector.extract_strided_slice %189 {offsets = [0, 0], sizes = [2, 32], strides = [1, 1]} : vector<2x128xf32> to vector<2x32xf32>
    %192 = vector.extract_strided_slice %189 {offsets = [0, 32], sizes = [2, 32], strides = [1, 1]} : vector<2x128xf32> to vector<2x32xf32>
    %193 = vector.extract_strided_slice %189 {offsets = [0, 64], sizes = [2, 32], strides = [1, 1]} : vector<2x128xf32> to vector<2x32xf32>
    %194 = vector.extract_strided_slice %190 {offsets = [0, 96], sizes = [2, 32], strides = [1, 1]} : vector<2x128xf32> to vector<2x32xf32>
    %195 = arith.mulf %192, %179 : vector<2x32xf32>
    %196 = arith.mulf %191, %194 : vector<2x32xf32>
    %197 = arith.addf %195, %196 : vector<2x32xf32>
    %198 = math.tanh %197 : vector<2x32xf32>
    %199 = arith.mulf %193, %198 : vector<2x32xf32>
    %200 = vector.extract_strided_slice %160 {offsets = [4, 0], sizes = [2, 128], strides = [1, 1]} : vector<16x128xf32> to vector<2x128xf32>
    %cst_37 = arith.constant dense<0.000000e+00> : vector<2x128xf32>
    %201 = tpu.matmul %199, %161, %cst_37 {dimension_numbers = #tpu.dot_dimension_numbers<[1], [0], [0], [1], [0, 0, 1, 1], [], []>} : vector<2x32xf32>, vector<32x128xf32>, vector<2x128xf32> -> vector<2x128xf32>
    %202 = arith.addf %200, %201 : vector<2x128xf32>
    %203 = arith.negf %202 : vector<2x128xf32>
    %204 = math.exp %203 : vector<2x128xf32>
    %cst_38 = arith.constant 1.000000e+00 : f32
    %205 = vector.broadcast %cst_38 : f32 to vector<2x128xf32>
    %206 = arith.addf %205, %204 : vector<2x128xf32>
    %207 = arith.divf %205, %206 : vector<2x128xf32>
    %208 = math.tanh %202 : vector<2x128xf32>
    %209 = vector.extract_strided_slice %207 {offsets = [0, 0], sizes = [2, 32], strides = [1, 1]} : vector<2x128xf32> to vector<2x32xf32>
    %210 = vector.extract_strided_slice %207 {offsets = [0, 32], sizes = [2, 32], strides = [1, 1]} : vector<2x128xf32> to vector<2x32xf32>
    %211 = vector.extract_strided_slice %207 {offsets = [0, 64], sizes = [2, 32], strides = [1, 1]} : vector<2x128xf32> to vector<2x32xf32>
    %212 = vector.extract_strided_slice %208 {offsets = [0, 96], sizes = [2, 32], strides = [1, 1]} : vector<2x128xf32> to vector<2x32xf32>
    %213 = arith.mulf %210, %197 : vector<2x32xf32>
    %214 = arith.mulf %209, %212 : vector<2x32xf32>
    %215 = arith.addf %213, %214 : vector<2x32xf32>
    %216 = math.tanh %215 : vector<2x32xf32>
    %217 = arith.mulf %211, %216 : vector<2x32xf32>
    %218 = vector.extract_strided_slice %160 {offsets = [6, 0], sizes = [2, 128], strides = [1, 1]} : vector<16x128xf32> to vector<2x128xf32>
    %cst_39 = arith.constant dense<0.000000e+00> : vector<2x128xf32>
    %219 = tpu.matmul %217, %161, %cst_39 {dimension_numbers = #tpu.dot_dimension_numbers<[1], [0], [0], [1], [0, 0, 1, 1], [], []>} : vector<2x32xf32>, vector<32x128xf32>, vector<2x128xf32> -> vector<2x128xf32>
    %220 = arith.addf %218, %219 : vector<2x128xf32>
    %221 = arith.negf %220 : vector<2x128xf32>
    %222 = math.exp %221 : vector<2x128xf32>
    %cst_40 = arith.constant 1.000000e+00 : f32
    %223 = vector.broadcast %cst_40 : f32 to vector<2x128xf32>
    %224 = arith.addf %223, %222 : vector<2x128xf32>
    %225 = arith.divf %223, %224 : vector<2x128xf32>
    %226 = math.tanh %220 : vector<2x128xf32>
    %227 = vector.extract_strided_slice %225 {offsets = [0, 0], sizes = [2, 32], strides = [1, 1]} : vector<2x128xf32> to vector<2x32xf32>
    %228 = vector.extract_strided_slice %225 {offsets = [0, 32], sizes = [2, 32], strides = [1, 1]} : vector<2x128xf32> to vector<2x32xf32>
    %229 = vector.extract_strided_slice %225 {offsets = [0, 64], sizes = [2, 32], strides = [1, 1]} : vector<2x128xf32> to vector<2x32xf32>
    %230 = vector.extract_strided_slice %226 {offsets = [0, 96], sizes = [2, 32], strides = [1, 1]} : vector<2x128xf32> to vector<2x32xf32>
    %231 = arith.mulf %228, %215 : vector<2x32xf32>
    %232 = arith.mulf %227, %230 : vector<2x32xf32>
    %233 = arith.addf %231, %232 : vector<2x32xf32>
    %234 = math.tanh %233 : vector<2x32xf32>
    %235 = arith.mulf %229, %234 : vector<2x32xf32>
    %236 = vector.extract_strided_slice %160 {offsets = [8, 0], sizes = [2, 128], strides = [1, 1]} : vector<16x128xf32> to vector<2x128xf32>
    %cst_41 = arith.constant dense<0.000000e+00> : vector<2x128xf32>
    %237 = tpu.matmul %235, %161, %cst_41 {dimension_numbers = #tpu.dot_dimension_numbers<[1], [0], [0], [1], [0, 0, 1, 1], [], []>} : vector<2x32xf32>, vector<32x128xf32>, vector<2x128xf32> -> vector<2x128xf32>
    %238 = arith.addf %236, %237 : vector<2x128xf32>
    %239 = arith.negf %238 : vector<2x128xf32>
    %240 = math.exp %239 : vector<2x128xf32>
    %cst_42 = arith.constant 1.000000e+00 : f32
    %241 = vector.broadcast %cst_42 : f32 to vector<2x128xf32>
    %242 = arith.addf %241, %240 : vector<2x128xf32>
    %243 = arith.divf %241, %242 : vector<2x128xf32>
    %244 = math.tanh %238 : vector<2x128xf32>
    %245 = vector.extract_strided_slice %243 {offsets = [0, 0], sizes = [2, 32], strides = [1, 1]} : vector<2x128xf32> to vector<2x32xf32>
    %246 = vector.extract_strided_slice %243 {offsets = [0, 32], sizes = [2, 32], strides = [1, 1]} : vector<2x128xf32> to vector<2x32xf32>
    %247 = vector.extract_strided_slice %243 {offsets = [0, 64], sizes = [2, 32], strides = [1, 1]} : vector<2x128xf32> to vector<2x32xf32>
    %248 = vector.extract_strided_slice %244 {offsets = [0, 96], sizes = [2, 32], strides = [1, 1]} : vector<2x128xf32> to vector<2x32xf32>
    %249 = arith.mulf %246, %233 : vector<2x32xf32>
    %250 = arith.mulf %245, %248 : vector<2x32xf32>
    %251 = arith.addf %249, %250 : vector<2x32xf32>
    %252 = math.tanh %251 : vector<2x32xf32>
    %253 = arith.mulf %247, %252 : vector<2x32xf32>
    %254 = vector.extract_strided_slice %160 {offsets = [10, 0], sizes = [2, 128], strides = [1, 1]} : vector<16x128xf32> to vector<2x128xf32>
    %cst_43 = arith.constant dense<0.000000e+00> : vector<2x128xf32>
    %255 = tpu.matmul %253, %161, %cst_43 {dimension_numbers = #tpu.dot_dimension_numbers<[1], [0], [0], [1], [0, 0, 1, 1], [], []>} : vector<2x32xf32>, vector<32x128xf32>, vector<2x128xf32> -> vector<2x128xf32>
    %256 = arith.addf %254, %255 : vector<2x128xf32>
    %257 = arith.negf %256 : vector<2x128xf32>
    %258 = math.exp %257 : vector<2x128xf32>
    %cst_44 = arith.constant 1.000000e+00 : f32
    %259 = vector.broadcast %cst_44 : f32 to vector<2x128xf32>
    %260 = arith.addf %259, %258 : vector<2x128xf32>
    %261 = arith.divf %259, %260 : vector<2x128xf32>
    %262 = math.tanh %256 : vector<2x128xf32>
    %263 = vector.extract_strided_slice %261 {offsets = [0, 0], sizes = [2, 32], strides = [1, 1]} : vector<2x128xf32> to vector<2x32xf32>
    %264 = vector.extract_strided_slice %261 {offsets = [0, 32], sizes = [2, 32], strides = [1, 1]} : vector<2x128xf32> to vector<2x32xf32>
    %265 = vector.extract_strided_slice %261 {offsets = [0, 64], sizes = [2, 32], strides = [1, 1]} : vector<2x128xf32> to vector<2x32xf32>
    %266 = vector.extract_strided_slice %262 {offsets = [0, 96], sizes = [2, 32], strides = [1, 1]} : vector<2x128xf32> to vector<2x32xf32>
    %267 = arith.mulf %264, %251 : vector<2x32xf32>
    %268 = arith.mulf %263, %266 : vector<2x32xf32>
    %269 = arith.addf %267, %268 : vector<2x32xf32>
    %270 = math.tanh %269 : vector<2x32xf32>
    %271 = arith.mulf %265, %270 : vector<2x32xf32>
    %272 = vector.extract_strided_slice %160 {offsets = [12, 0], sizes = [2, 128], strides = [1, 1]} : vector<16x128xf32> to vector<2x128xf32>
    %cst_45 = arith.constant dense<0.000000e+00> : vector<2x128xf32>
    %273 = tpu.matmul %271, %161, %cst_45 {dimension_numbers = #tpu.dot_dimension_numbers<[1], [0], [0], [1], [0, 0, 1, 1], [], []>} : vector<2x32xf32>, vector<32x128xf32>, vector<2x128xf32> -> vector<2x128xf32>
    %274 = arith.addf %272, %273 : vector<2x128xf32>
    %275 = arith.negf %274 : vector<2x128xf32>
    %276 = math.exp %275 : vector<2x128xf32>
    %cst_46 = arith.constant 1.000000e+00 : f32
    %277 = vector.broadcast %cst_46 : f32 to vector<2x128xf32>
    %278 = arith.addf %277, %276 : vector<2x128xf32>
    %279 = arith.divf %277, %278 : vector<2x128xf32>
    %280 = math.tanh %274 : vector<2x128xf32>
    %281 = vector.extract_strided_slice %279 {offsets = [0, 0], sizes = [2, 32], strides = [1, 1]} : vector<2x128xf32> to vector<2x32xf32>
    %282 = vector.extract_strided_slice %279 {offsets = [0, 32], sizes = [2, 32], strides = [1, 1]} : vector<2x128xf32> to vector<2x32xf32>
    %283 = vector.extract_strided_slice %279 {offsets = [0, 64], sizes = [2, 32], strides = [1, 1]} : vector<2x128xf32> to vector<2x32xf32>
    %284 = vector.extract_strided_slice %280 {offsets = [0, 96], sizes = [2, 32], strides = [1, 1]} : vector<2x128xf32> to vector<2x32xf32>
    %285 = arith.mulf %282, %269 : vector<2x32xf32>
    %286 = arith.mulf %281, %284 : vector<2x32xf32>
    %287 = arith.addf %285, %286 : vector<2x32xf32>
    %288 = math.tanh %287 : vector<2x32xf32>
    %289 = arith.mulf %283, %288 : vector<2x32xf32>
    %290 = vector.extract_strided_slice %160 {offsets = [14, 0], sizes = [2, 128], strides = [1, 1]} : vector<16x128xf32> to vector<2x128xf32>
    %cst_47 = arith.constant dense<0.000000e+00> : vector<2x128xf32>
    %291 = tpu.matmul %289, %161, %cst_47 {dimension_numbers = #tpu.dot_dimension_numbers<[1], [0], [0], [1], [0, 0, 1, 1], [], []>} : vector<2x32xf32>, vector<32x128xf32>, vector<2x128xf32> -> vector<2x128xf32>
    %292 = arith.addf %290, %291 : vector<2x128xf32>
    %293 = arith.negf %292 : vector<2x128xf32>
    %294 = math.exp %293 : vector<2x128xf32>
    %cst_48 = arith.constant 1.000000e+00 : f32
    %295 = vector.broadcast %cst_48 : f32 to vector<2x128xf32>
    %296 = arith.addf %295, %294 : vector<2x128xf32>
    %297 = arith.divf %295, %296 : vector<2x128xf32>
    %298 = math.tanh %292 : vector<2x128xf32>
    %299 = vector.extract_strided_slice %297 {offsets = [0, 0], sizes = [2, 32], strides = [1, 1]} : vector<2x128xf32> to vector<2x32xf32>
    %300 = vector.extract_strided_slice %297 {offsets = [0, 32], sizes = [2, 32], strides = [1, 1]} : vector<2x128xf32> to vector<2x32xf32>
    %301 = vector.extract_strided_slice %297 {offsets = [0, 64], sizes = [2, 32], strides = [1, 1]} : vector<2x128xf32> to vector<2x32xf32>
    %302 = vector.extract_strided_slice %298 {offsets = [0, 96], sizes = [2, 32], strides = [1, 1]} : vector<2x128xf32> to vector<2x32xf32>
    %303 = arith.mulf %300, %287 : vector<2x32xf32>
    %304 = arith.mulf %299, %302 : vector<2x32xf32>
    %305 = arith.addf %303, %304 : vector<2x32xf32>
    %306 = math.tanh %305 : vector<2x32xf32>
    %307 = arith.mulf %301, %306 : vector<2x32xf32>
    %c0_49 = arith.constant 0 : index
    %c0_50 = arith.constant 0 : index
    %308 = vector.load %arg7[%c0_49, %c0_50] : memref<32x128xf32, #tpu.memory_space<vmem>>, vector<32x128xf32>
    %cst_51 = arith.constant dense<0.000000e+00> : vector<2x128xf32>
    %309 = tpu.matmul %307, %308, %cst_51 {dimension_numbers = #tpu.dot_dimension_numbers<[1], [0], [0], [1], [0, 0, 1, 1], [], []>} : vector<2x32xf32>, vector<32x128xf32>, vector<2x128xf32> -> vector<2x128xf32>
    %c0_52 = arith.constant 0 : index
    %c0_53 = arith.constant 0 : index
    %310 = vector.load %arg9[%c0_52, %c0_53] : memref<1x128xf32, #tpu.memory_space<vmem>>, vector<1x128xf32>
    %311 = vector.broadcast %310 : vector<1x128xf32> to vector<2x128xf32>
    %312 = arith.addf %309, %311 : vector<2x128xf32>
    %c0_54 = arith.constant 0 : index
    %c0_55 = arith.constant 0 : index
    %313 = vector.load %arg8[%c0_54, %c0_55] : memref<32x128xf32, #tpu.memory_space<vmem>>, vector<32x128xf32>
    %cst_56 = arith.constant 0.000000e+00 : f32
    %314 = vector.broadcast %cst_56 : f32 to vector<2x32xf32>
    %cst_57 = arith.constant 0.000000e+00 : f32
    %315 = vector.broadcast %cst_57 : f32 to vector<2x32xf32>
    %cst_58 = arith.constant dense<0.000000e+00> : vector<2x128xf32>
    %316 = tpu.matmul %314, %313, %cst_58 {dimension_numbers = #tpu.dot_dimension_numbers<[1], [0], [0], [1], [0, 0, 1, 1], [], []>} : vector<2x32xf32>, vector<32x128xf32>, vector<2x128xf32> -> vector<2x128xf32>
    %317 = arith.addf %312, %316 : vector<2x128xf32>
    %318 = arith.negf %317 : vector<2x128xf32>
    %319 = math.exp %318 : vector<2x128xf32>
    %cst_59 = arith.constant 1.000000e+00 : f32
    %320 = vector.broadcast %cst_59 : f32 to vector<2x128xf32>
    %321 = arith.addf %320, %319 : vector<2x128xf32>
    %322 = arith.divf %320, %321 : vector<2x128xf32>
    %323 = math.tanh %317 : vector<2x128xf32>
    %324 = vector.extract_strided_slice %322 {offsets = [0, 0], sizes = [2, 32], strides = [1, 1]} : vector<2x128xf32> to vector<2x32xf32>
    %325 = vector.extract_strided_slice %322 {offsets = [0, 32], sizes = [2, 32], strides = [1, 1]} : vector<2x128xf32> to vector<2x32xf32>
    %326 = vector.extract_strided_slice %322 {offsets = [0, 64], sizes = [2, 32], strides = [1, 1]} : vector<2x128xf32> to vector<2x32xf32>
    %327 = vector.extract_strided_slice %323 {offsets = [0, 96], sizes = [2, 32], strides = [1, 1]} : vector<2x128xf32> to vector<2x32xf32>
    %328 = arith.mulf %325, %315 : vector<2x32xf32>
    %329 = arith.mulf %324, %327 : vector<2x32xf32>
    %330 = arith.addf %328, %329 : vector<2x32xf32>
    %331 = math.tanh %330 : vector<2x32xf32>
    %332 = arith.mulf %326, %331 : vector<2x32xf32>
    %cst_60 = arith.constant dense<0.000000e+00> : vector<2x128xf32>
    %333 = tpu.matmul %332, %313, %cst_60 {dimension_numbers = #tpu.dot_dimension_numbers<[1], [0], [0], [1], [0, 0, 1, 1], [], []>} : vector<2x32xf32>, vector<32x128xf32>, vector<2x128xf32> -> vector<2x128xf32>
    %334 = arith.addf %312, %333 : vector<2x128xf32>
    %335 = arith.negf %334 : vector<2x128xf32>
    %336 = math.exp %335 : vector<2x128xf32>
    %cst_61 = arith.constant 1.000000e+00 : f32
    %337 = vector.broadcast %cst_61 : f32 to vector<2x128xf32>
    %338 = arith.addf %337, %336 : vector<2x128xf32>
    %339 = arith.divf %337, %338 : vector<2x128xf32>
    %340 = math.tanh %334 : vector<2x128xf32>
    %341 = vector.extract_strided_slice %339 {offsets = [0, 0], sizes = [2, 32], strides = [1, 1]} : vector<2x128xf32> to vector<2x32xf32>
    %342 = vector.extract_strided_slice %339 {offsets = [0, 32], sizes = [2, 32], strides = [1, 1]} : vector<2x128xf32> to vector<2x32xf32>
    %343 = vector.extract_strided_slice %339 {offsets = [0, 64], sizes = [2, 32], strides = [1, 1]} : vector<2x128xf32> to vector<2x32xf32>
    %344 = vector.extract_strided_slice %340 {offsets = [0, 96], sizes = [2, 32], strides = [1, 1]} : vector<2x128xf32> to vector<2x32xf32>
    %345 = arith.mulf %342, %330 : vector<2x32xf32>
    %346 = arith.mulf %341, %344 : vector<2x32xf32>
    %347 = arith.addf %345, %346 : vector<2x32xf32>
    %348 = math.tanh %347 : vector<2x32xf32>
    %349 = arith.mulf %343, %348 : vector<2x32xf32>
    %cst_62 = arith.constant dense<0.000000e+00> : vector<2x128xf32>
    %350 = tpu.matmul %349, %313, %cst_62 {dimension_numbers = #tpu.dot_dimension_numbers<[1], [0], [0], [1], [0, 0, 1, 1], [], []>} : vector<2x32xf32>, vector<32x128xf32>, vector<2x128xf32> -> vector<2x128xf32>
    %351 = arith.addf %312, %350 : vector<2x128xf32>
    %352 = arith.negf %351 : vector<2x128xf32>
    %353 = math.exp %352 : vector<2x128xf32>
    %cst_63 = arith.constant 1.000000e+00 : f32
    %354 = vector.broadcast %cst_63 : f32 to vector<2x128xf32>
    %355 = arith.addf %354, %353 : vector<2x128xf32>
    %356 = arith.divf %354, %355 : vector<2x128xf32>
    %357 = math.tanh %351 : vector<2x128xf32>
    %358 = vector.extract_strided_slice %356 {offsets = [0, 0], sizes = [2, 32], strides = [1, 1]} : vector<2x128xf32> to vector<2x32xf32>
    %359 = vector.extract_strided_slice %356 {offsets = [0, 32], sizes = [2, 32], strides = [1, 1]} : vector<2x128xf32> to vector<2x32xf32>
    %360 = vector.extract_strided_slice %356 {offsets = [0, 64], sizes = [2, 32], strides = [1, 1]} : vector<2x128xf32> to vector<2x32xf32>
    %361 = vector.extract_strided_slice %357 {offsets = [0, 96], sizes = [2, 32], strides = [1, 1]} : vector<2x128xf32> to vector<2x32xf32>
    %362 = arith.mulf %359, %347 : vector<2x32xf32>
    %363 = arith.mulf %358, %361 : vector<2x32xf32>
    %364 = arith.addf %362, %363 : vector<2x32xf32>
    %365 = math.tanh %364 : vector<2x32xf32>
    %366 = arith.mulf %360, %365 : vector<2x32xf32>
    %cst_64 = arith.constant dense<0.000000e+00> : vector<2x128xf32>
    %367 = tpu.matmul %366, %313, %cst_64 {dimension_numbers = #tpu.dot_dimension_numbers<[1], [0], [0], [1], [0, 0, 1, 1], [], []>} : vector<2x32xf32>, vector<32x128xf32>, vector<2x128xf32> -> vector<2x128xf32>
    %368 = arith.addf %312, %367 : vector<2x128xf32>
    %369 = arith.negf %368 : vector<2x128xf32>
    %370 = math.exp %369 : vector<2x128xf32>
    %cst_65 = arith.constant 1.000000e+00 : f32
    %371 = vector.broadcast %cst_65 : f32 to vector<2x128xf32>
    %372 = arith.addf %371, %370 : vector<2x128xf32>
    %373 = arith.divf %371, %372 : vector<2x128xf32>
    %374 = math.tanh %368 : vector<2x128xf32>
    %375 = vector.extract_strided_slice %373 {offsets = [0, 0], sizes = [2, 32], strides = [1, 1]} : vector<2x128xf32> to vector<2x32xf32>
    %376 = vector.extract_strided_slice %373 {offsets = [0, 32], sizes = [2, 32], strides = [1, 1]} : vector<2x128xf32> to vector<2x32xf32>
    %377 = vector.extract_strided_slice %373 {offsets = [0, 64], sizes = [2, 32], strides = [1, 1]} : vector<2x128xf32> to vector<2x32xf32>
    %378 = vector.extract_strided_slice %374 {offsets = [0, 96], sizes = [2, 32], strides = [1, 1]} : vector<2x128xf32> to vector<2x32xf32>
    %379 = arith.mulf %376, %364 : vector<2x32xf32>
    %380 = arith.mulf %375, %378 : vector<2x32xf32>
    %381 = arith.addf %379, %380 : vector<2x32xf32>
    %382 = math.tanh %381 : vector<2x32xf32>
    %383 = arith.mulf %377, %382 : vector<2x32xf32>
    %cst_66 = arith.constant dense<0.000000e+00> : vector<2x128xf32>
    %384 = tpu.matmul %383, %313, %cst_66 {dimension_numbers = #tpu.dot_dimension_numbers<[1], [0], [0], [1], [0, 0, 1, 1], [], []>} : vector<2x32xf32>, vector<32x128xf32>, vector<2x128xf32> -> vector<2x128xf32>
    %385 = arith.addf %312, %384 : vector<2x128xf32>
    %386 = arith.negf %385 : vector<2x128xf32>
    %387 = math.exp %386 : vector<2x128xf32>
    %cst_67 = arith.constant 1.000000e+00 : f32
    %388 = vector.broadcast %cst_67 : f32 to vector<2x128xf32>
    %389 = arith.addf %388, %387 : vector<2x128xf32>
    %390 = arith.divf %388, %389 : vector<2x128xf32>
    %391 = math.tanh %385 : vector<2x128xf32>
    %392 = vector.extract_strided_slice %390 {offsets = [0, 0], sizes = [2, 32], strides = [1, 1]} : vector<2x128xf32> to vector<2x32xf32>
    %393 = vector.extract_strided_slice %390 {offsets = [0, 32], sizes = [2, 32], strides = [1, 1]} : vector<2x128xf32> to vector<2x32xf32>
    %394 = vector.extract_strided_slice %390 {offsets = [0, 64], sizes = [2, 32], strides = [1, 1]} : vector<2x128xf32> to vector<2x32xf32>
    %395 = vector.extract_strided_slice %391 {offsets = [0, 96], sizes = [2, 32], strides = [1, 1]} : vector<2x128xf32> to vector<2x32xf32>
    %396 = arith.mulf %393, %381 : vector<2x32xf32>
    %397 = arith.mulf %392, %395 : vector<2x32xf32>
    %398 = arith.addf %396, %397 : vector<2x32xf32>
    %399 = math.tanh %398 : vector<2x32xf32>
    %400 = arith.mulf %394, %399 : vector<2x32xf32>
    %cst_68 = arith.constant dense<0.000000e+00> : vector<2x128xf32>
    %401 = tpu.matmul %400, %313, %cst_68 {dimension_numbers = #tpu.dot_dimension_numbers<[1], [0], [0], [1], [0, 0, 1, 1], [], []>} : vector<2x32xf32>, vector<32x128xf32>, vector<2x128xf32> -> vector<2x128xf32>
    %402 = arith.addf %312, %401 : vector<2x128xf32>
    %403 = arith.negf %402 : vector<2x128xf32>
    %404 = math.exp %403 : vector<2x128xf32>
    %cst_69 = arith.constant 1.000000e+00 : f32
    %405 = vector.broadcast %cst_69 : f32 to vector<2x128xf32>
    %406 = arith.addf %405, %404 : vector<2x128xf32>
    %407 = arith.divf %405, %406 : vector<2x128xf32>
    %408 = math.tanh %402 : vector<2x128xf32>
    %409 = vector.extract_strided_slice %407 {offsets = [0, 0], sizes = [2, 32], strides = [1, 1]} : vector<2x128xf32> to vector<2x32xf32>
    %410 = vector.extract_strided_slice %407 {offsets = [0, 32], sizes = [2, 32], strides = [1, 1]} : vector<2x128xf32> to vector<2x32xf32>
    %411 = vector.extract_strided_slice %407 {offsets = [0, 64], sizes = [2, 32], strides = [1, 1]} : vector<2x128xf32> to vector<2x32xf32>
    %412 = vector.extract_strided_slice %408 {offsets = [0, 96], sizes = [2, 32], strides = [1, 1]} : vector<2x128xf32> to vector<2x32xf32>
    %413 = arith.mulf %410, %398 : vector<2x32xf32>
    %414 = arith.mulf %409, %412 : vector<2x32xf32>
    %415 = arith.addf %413, %414 : vector<2x32xf32>
    %416 = math.tanh %415 : vector<2x32xf32>
    %417 = arith.mulf %411, %416 : vector<2x32xf32>
    %cst_70 = arith.constant dense<0.000000e+00> : vector<2x128xf32>
    %418 = tpu.matmul %417, %313, %cst_70 {dimension_numbers = #tpu.dot_dimension_numbers<[1], [0], [0], [1], [0, 0, 1, 1], [], []>} : vector<2x32xf32>, vector<32x128xf32>, vector<2x128xf32> -> vector<2x128xf32>
    %419 = arith.addf %312, %418 : vector<2x128xf32>
    %420 = arith.negf %419 : vector<2x128xf32>
    %421 = math.exp %420 : vector<2x128xf32>
    %cst_71 = arith.constant 1.000000e+00 : f32
    %422 = vector.broadcast %cst_71 : f32 to vector<2x128xf32>
    %423 = arith.addf %422, %421 : vector<2x128xf32>
    %424 = arith.divf %422, %423 : vector<2x128xf32>
    %425 = math.tanh %419 : vector<2x128xf32>
    %426 = vector.extract_strided_slice %424 {offsets = [0, 0], sizes = [2, 32], strides = [1, 1]} : vector<2x128xf32> to vector<2x32xf32>
    %427 = vector.extract_strided_slice %424 {offsets = [0, 32], sizes = [2, 32], strides = [1, 1]} : vector<2x128xf32> to vector<2x32xf32>
    %428 = vector.extract_strided_slice %424 {offsets = [0, 64], sizes = [2, 32], strides = [1, 1]} : vector<2x128xf32> to vector<2x32xf32>
    %429 = vector.extract_strided_slice %425 {offsets = [0, 96], sizes = [2, 32], strides = [1, 1]} : vector<2x128xf32> to vector<2x32xf32>
    %430 = arith.mulf %427, %415 : vector<2x32xf32>
    %431 = arith.mulf %426, %429 : vector<2x32xf32>
    %432 = arith.addf %430, %431 : vector<2x32xf32>
    %433 = math.tanh %432 : vector<2x32xf32>
    %434 = arith.mulf %428, %433 : vector<2x32xf32>
    %cst_72 = arith.constant dense<0.000000e+00> : vector<2x128xf32>
    %435 = tpu.matmul %434, %313, %cst_72 {dimension_numbers = #tpu.dot_dimension_numbers<[1], [0], [0], [1], [0, 0, 1, 1], [], []>} : vector<2x32xf32>, vector<32x128xf32>, vector<2x128xf32> -> vector<2x128xf32>
    %436 = arith.addf %312, %435 : vector<2x128xf32>
    %437 = arith.negf %436 : vector<2x128xf32>
    %438 = math.exp %437 : vector<2x128xf32>
    %cst_73 = arith.constant 1.000000e+00 : f32
    %439 = vector.broadcast %cst_73 : f32 to vector<2x128xf32>
    %440 = arith.addf %439, %438 : vector<2x128xf32>
    %441 = arith.divf %439, %440 : vector<2x128xf32>
    %442 = math.tanh %436 : vector<2x128xf32>
    %443 = vector.extract_strided_slice %441 {offsets = [0, 0], sizes = [2, 32], strides = [1, 1]} : vector<2x128xf32> to vector<2x32xf32>
    %444 = vector.extract_strided_slice %441 {offsets = [0, 32], sizes = [2, 32], strides = [1, 1]} : vector<2x128xf32> to vector<2x32xf32>
    %445 = vector.extract_strided_slice %441 {offsets = [0, 64], sizes = [2, 32], strides = [1, 1]} : vector<2x128xf32> to vector<2x32xf32>
    %446 = vector.extract_strided_slice %442 {offsets = [0, 96], sizes = [2, 32], strides = [1, 1]} : vector<2x128xf32> to vector<2x32xf32>
    %447 = arith.mulf %444, %432 : vector<2x32xf32>
    %448 = arith.mulf %443, %446 : vector<2x32xf32>
    %449 = arith.addf %447, %448 : vector<2x32xf32>
    %450 = math.tanh %449 : vector<2x32xf32>
    %451 = arith.mulf %445, %450 : vector<2x32xf32>
    %452 = tpu.concatenate %332, %349, %366, %383, %400, %417, %434, %451 in 0 : vector<2x32xf32>, vector<2x32xf32>, vector<2x32xf32>, vector<2x32xf32>, vector<2x32xf32>, vector<2x32xf32>, vector<2x32xf32>, vector<2x32xf32> -> vector<16x32xf32>
    %c0_74 = arith.constant 0 : index
    %c0_75 = arith.constant 0 : index
    %453 = vector.load %arg10[%c0_74, %c0_75] : memref<32x256xf32, #tpu.memory_space<vmem>>, vector<32x256xf32>
    %cst_76 = arith.constant dense<0.000000e+00> : vector<16x256xf32>
    %454 = tpu.matmul %452, %453, %cst_76 {dimension_numbers = #tpu.dot_dimension_numbers<[1], [0], [0], [1], [0, 0, 1, 1], [], []>} : vector<16x32xf32>, vector<32x256xf32>, vector<16x256xf32> -> vector<16x256xf32>
    %c0_77 = arith.constant 0 : index
    %c0_78 = arith.constant 0 : index
    %455 = vector.load %arg12[%c0_77, %c0_78] : memref<1x256xf32, #tpu.memory_space<vmem>>, vector<1x256xf32>
    %456 = vector.broadcast %455 : vector<1x256xf32> to vector<16x256xf32>
    %457 = arith.addf %454, %456 : vector<16x256xf32>
    %c0_79 = arith.constant 0 : index
    %c0_80 = arith.constant 0 : index
    %458 = vector.load %arg11[%c0_79, %c0_80] : memref<64x256xf32, #tpu.memory_space<vmem>>, vector<64x256xf32>
    %cst_81 = arith.constant 0.000000e+00 : f32
    %459 = vector.broadcast %cst_81 : f32 to vector<2x64xf32>
    %cst_82 = arith.constant 0.000000e+00 : f32
    %460 = vector.broadcast %cst_82 : f32 to vector<2x64xf32>
    %461 = vector.extract_strided_slice %457 {offsets = [0, 0], sizes = [2, 256], strides = [1, 1]} : vector<16x256xf32> to vector<2x256xf32>
    %cst_83 = arith.constant dense<0.000000e+00> : vector<2x256xf32>
    %462 = tpu.matmul %459, %458, %cst_83 {dimension_numbers = #tpu.dot_dimension_numbers<[1], [0], [0], [1], [0, 0, 1, 1], [], []>} : vector<2x64xf32>, vector<64x256xf32>, vector<2x256xf32> -> vector<2x256xf32>
    %463 = arith.addf %461, %462 : vector<2x256xf32>
    %464 = arith.negf %463 : vector<2x256xf32>
    %465 = math.exp %464 : vector<2x256xf32>
    %cst_84 = arith.constant 1.000000e+00 : f32
    %466 = vector.broadcast %cst_84 : f32 to vector<2x256xf32>
    %467 = arith.addf %466, %465 : vector<2x256xf32>
    %468 = arith.divf %466, %467 : vector<2x256xf32>
    %469 = math.tanh %463 : vector<2x256xf32>
    %470 = vector.extract_strided_slice %468 {offsets = [0, 0], sizes = [2, 64], strides = [1, 1]} : vector<2x256xf32> to vector<2x64xf32>
    %471 = vector.extract_strided_slice %468 {offsets = [0, 64], sizes = [2, 64], strides = [1, 1]} : vector<2x256xf32> to vector<2x64xf32>
    %472 = vector.extract_strided_slice %468 {offsets = [0, 128], sizes = [2, 64], strides = [1, 1]} : vector<2x256xf32> to vector<2x64xf32>
    %473 = vector.extract_strided_slice %469 {offsets = [0, 192], sizes = [2, 64], strides = [1, 1]} : vector<2x256xf32> to vector<2x64xf32>
    %474 = arith.mulf %471, %460 : vector<2x64xf32>
    %475 = arith.mulf %470, %473 : vector<2x64xf32>
    %476 = arith.addf %474, %475 : vector<2x64xf32>
    %477 = math.tanh %476 : vector<2x64xf32>
    %478 = arith.mulf %472, %477 : vector<2x64xf32>
    %479 = vector.extract_strided_slice %457 {offsets = [2, 0], sizes = [2, 256], strides = [1, 1]} : vector<16x256xf32> to vector<2x256xf32>
    %cst_85 = arith.constant dense<0.000000e+00> : vector<2x256xf32>
    %480 = tpu.matmul %478, %458, %cst_85 {dimension_numbers = #tpu.dot_dimension_numbers<[1], [0], [0], [1], [0, 0, 1, 1], [], []>} : vector<2x64xf32>, vector<64x256xf32>, vector<2x256xf32> -> vector<2x256xf32>
    %481 = arith.addf %479, %480 : vector<2x256xf32>
    %482 = arith.negf %481 : vector<2x256xf32>
    %483 = math.exp %482 : vector<2x256xf32>
    %cst_86 = arith.constant 1.000000e+00 : f32
    %484 = vector.broadcast %cst_86 : f32 to vector<2x256xf32>
    %485 = arith.addf %484, %483 : vector<2x256xf32>
    %486 = arith.divf %484, %485 : vector<2x256xf32>
    %487 = math.tanh %481 : vector<2x256xf32>
    %488 = vector.extract_strided_slice %486 {offsets = [0, 0], sizes = [2, 64], strides = [1, 1]} : vector<2x256xf32> to vector<2x64xf32>
    %489 = vector.extract_strided_slice %486 {offsets = [0, 64], sizes = [2, 64], strides = [1, 1]} : vector<2x256xf32> to vector<2x64xf32>
    %490 = vector.extract_strided_slice %486 {offsets = [0, 128], sizes = [2, 64], strides = [1, 1]} : vector<2x256xf32> to vector<2x64xf32>
    %491 = vector.extract_strided_slice %487 {offsets = [0, 192], sizes = [2, 64], strides = [1, 1]} : vector<2x256xf32> to vector<2x64xf32>
    %492 = arith.mulf %489, %476 : vector<2x64xf32>
    %493 = arith.mulf %488, %491 : vector<2x64xf32>
    %494 = arith.addf %492, %493 : vector<2x64xf32>
    %495 = math.tanh %494 : vector<2x64xf32>
    %496 = arith.mulf %490, %495 : vector<2x64xf32>
    %497 = vector.extract_strided_slice %457 {offsets = [4, 0], sizes = [2, 256], strides = [1, 1]} : vector<16x256xf32> to vector<2x256xf32>
    %cst_87 = arith.constant dense<0.000000e+00> : vector<2x256xf32>
    %498 = tpu.matmul %496, %458, %cst_87 {dimension_numbers = #tpu.dot_dimension_numbers<[1], [0], [0], [1], [0, 0, 1, 1], [], []>} : vector<2x64xf32>, vector<64x256xf32>, vector<2x256xf32> -> vector<2x256xf32>
    %499 = arith.addf %497, %498 : vector<2x256xf32>
    %500 = arith.negf %499 : vector<2x256xf32>
    %501 = math.exp %500 : vector<2x256xf32>
    %cst_88 = arith.constant 1.000000e+00 : f32
    %502 = vector.broadcast %cst_88 : f32 to vector<2x256xf32>
    %503 = arith.addf %502, %501 : vector<2x256xf32>
    %504 = arith.divf %502, %503 : vector<2x256xf32>
    %505 = math.tanh %499 : vector<2x256xf32>
    %506 = vector.extract_strided_slice %504 {offsets = [0, 0], sizes = [2, 64], strides = [1, 1]} : vector<2x256xf32> to vector<2x64xf32>
    %507 = vector.extract_strided_slice %504 {offsets = [0, 64], sizes = [2, 64], strides = [1, 1]} : vector<2x256xf32> to vector<2x64xf32>
    %508 = vector.extract_strided_slice %504 {offsets = [0, 128], sizes = [2, 64], strides = [1, 1]} : vector<2x256xf32> to vector<2x64xf32>
    %509 = vector.extract_strided_slice %505 {offsets = [0, 192], sizes = [2, 64], strides = [1, 1]} : vector<2x256xf32> to vector<2x64xf32>
    %510 = arith.mulf %507, %494 : vector<2x64xf32>
    %511 = arith.mulf %506, %509 : vector<2x64xf32>
    %512 = arith.addf %510, %511 : vector<2x64xf32>
    %513 = math.tanh %512 : vector<2x64xf32>
    %514 = arith.mulf %508, %513 : vector<2x64xf32>
    %515 = vector.extract_strided_slice %457 {offsets = [6, 0], sizes = [2, 256], strides = [1, 1]} : vector<16x256xf32> to vector<2x256xf32>
    %cst_89 = arith.constant dense<0.000000e+00> : vector<2x256xf32>
    %516 = tpu.matmul %514, %458, %cst_89 {dimension_numbers = #tpu.dot_dimension_numbers<[1], [0], [0], [1], [0, 0, 1, 1], [], []>} : vector<2x64xf32>, vector<64x256xf32>, vector<2x256xf32> -> vector<2x256xf32>
    %517 = arith.addf %515, %516 : vector<2x256xf32>
    %518 = arith.negf %517 : vector<2x256xf32>
    %519 = math.exp %518 : vector<2x256xf32>
    %cst_90 = arith.constant 1.000000e+00 : f32
    %520 = vector.broadcast %cst_90 : f32 to vector<2x256xf32>
    %521 = arith.addf %520, %519 : vector<2x256xf32>
    %522 = arith.divf %520, %521 : vector<2x256xf32>
    %523 = math.tanh %517 : vector<2x256xf32>
    %524 = vector.extract_strided_slice %522 {offsets = [0, 0], sizes = [2, 64], strides = [1, 1]} : vector<2x256xf32> to vector<2x64xf32>
    %525 = vector.extract_strided_slice %522 {offsets = [0, 64], sizes = [2, 64], strides = [1, 1]} : vector<2x256xf32> to vector<2x64xf32>
    %526 = vector.extract_strided_slice %522 {offsets = [0, 128], sizes = [2, 64], strides = [1, 1]} : vector<2x256xf32> to vector<2x64xf32>
    %527 = vector.extract_strided_slice %523 {offsets = [0, 192], sizes = [2, 64], strides = [1, 1]} : vector<2x256xf32> to vector<2x64xf32>
    %528 = arith.mulf %525, %512 : vector<2x64xf32>
    %529 = arith.mulf %524, %527 : vector<2x64xf32>
    %530 = arith.addf %528, %529 : vector<2x64xf32>
    %531 = math.tanh %530 : vector<2x64xf32>
    %532 = arith.mulf %526, %531 : vector<2x64xf32>
    %533 = vector.extract_strided_slice %457 {offsets = [8, 0], sizes = [2, 256], strides = [1, 1]} : vector<16x256xf32> to vector<2x256xf32>
    %cst_91 = arith.constant dense<0.000000e+00> : vector<2x256xf32>
    %534 = tpu.matmul %532, %458, %cst_91 {dimension_numbers = #tpu.dot_dimension_numbers<[1], [0], [0], [1], [0, 0, 1, 1], [], []>} : vector<2x64xf32>, vector<64x256xf32>, vector<2x256xf32> -> vector<2x256xf32>
    %535 = arith.addf %533, %534 : vector<2x256xf32>
    %536 = arith.negf %535 : vector<2x256xf32>
    %537 = math.exp %536 : vector<2x256xf32>
    %cst_92 = arith.constant 1.000000e+00 : f32
    %538 = vector.broadcast %cst_92 : f32 to vector<2x256xf32>
    %539 = arith.addf %538, %537 : vector<2x256xf32>
    %540 = arith.divf %538, %539 : vector<2x256xf32>
    %541 = math.tanh %535 : vector<2x256xf32>
    %542 = vector.extract_strided_slice %540 {offsets = [0, 0], sizes = [2, 64], strides = [1, 1]} : vector<2x256xf32> to vector<2x64xf32>
    %543 = vector.extract_strided_slice %540 {offsets = [0, 64], sizes = [2, 64], strides = [1, 1]} : vector<2x256xf32> to vector<2x64xf32>
    %544 = vector.extract_strided_slice %540 {offsets = [0, 128], sizes = [2, 64], strides = [1, 1]} : vector<2x256xf32> to vector<2x64xf32>
    %545 = vector.extract_strided_slice %541 {offsets = [0, 192], sizes = [2, 64], strides = [1, 1]} : vector<2x256xf32> to vector<2x64xf32>
    %546 = arith.mulf %543, %530 : vector<2x64xf32>
    %547 = arith.mulf %542, %545 : vector<2x64xf32>
    %548 = arith.addf %546, %547 : vector<2x64xf32>
    %549 = math.tanh %548 : vector<2x64xf32>
    %550 = arith.mulf %544, %549 : vector<2x64xf32>
    %551 = vector.extract_strided_slice %457 {offsets = [10, 0], sizes = [2, 256], strides = [1, 1]} : vector<16x256xf32> to vector<2x256xf32>
    %cst_93 = arith.constant dense<0.000000e+00> : vector<2x256xf32>
    %552 = tpu.matmul %550, %458, %cst_93 {dimension_numbers = #tpu.dot_dimension_numbers<[1], [0], [0], [1], [0, 0, 1, 1], [], []>} : vector<2x64xf32>, vector<64x256xf32>, vector<2x256xf32> -> vector<2x256xf32>
    %553 = arith.addf %551, %552 : vector<2x256xf32>
    %554 = arith.negf %553 : vector<2x256xf32>
    %555 = math.exp %554 : vector<2x256xf32>
    %cst_94 = arith.constant 1.000000e+00 : f32
    %556 = vector.broadcast %cst_94 : f32 to vector<2x256xf32>
    %557 = arith.addf %556, %555 : vector<2x256xf32>
    %558 = arith.divf %556, %557 : vector<2x256xf32>
    %559 = math.tanh %553 : vector<2x256xf32>
    %560 = vector.extract_strided_slice %558 {offsets = [0, 0], sizes = [2, 64], strides = [1, 1]} : vector<2x256xf32> to vector<2x64xf32>
    %561 = vector.extract_strided_slice %558 {offsets = [0, 64], sizes = [2, 64], strides = [1, 1]} : vector<2x256xf32> to vector<2x64xf32>
    %562 = vector.extract_strided_slice %558 {offsets = [0, 128], sizes = [2, 64], strides = [1, 1]} : vector<2x256xf32> to vector<2x64xf32>
    %563 = vector.extract_strided_slice %559 {offsets = [0, 192], sizes = [2, 64], strides = [1, 1]} : vector<2x256xf32> to vector<2x64xf32>
    %564 = arith.mulf %561, %548 : vector<2x64xf32>
    %565 = arith.mulf %560, %563 : vector<2x64xf32>
    %566 = arith.addf %564, %565 : vector<2x64xf32>
    %567 = math.tanh %566 : vector<2x64xf32>
    %568 = arith.mulf %562, %567 : vector<2x64xf32>
    %569 = vector.extract_strided_slice %457 {offsets = [12, 0], sizes = [2, 256], strides = [1, 1]} : vector<16x256xf32> to vector<2x256xf32>
    %cst_95 = arith.constant dense<0.000000e+00> : vector<2x256xf32>
    %570 = tpu.matmul %568, %458, %cst_95 {dimension_numbers = #tpu.dot_dimension_numbers<[1], [0], [0], [1], [0, 0, 1, 1], [], []>} : vector<2x64xf32>, vector<64x256xf32>, vector<2x256xf32> -> vector<2x256xf32>
    %571 = arith.addf %569, %570 : vector<2x256xf32>
    %572 = arith.negf %571 : vector<2x256xf32>
    %573 = math.exp %572 : vector<2x256xf32>
    %cst_96 = arith.constant 1.000000e+00 : f32
    %574 = vector.broadcast %cst_96 : f32 to vector<2x256xf32>
    %575 = arith.addf %574, %573 : vector<2x256xf32>
    %576 = arith.divf %574, %575 : vector<2x256xf32>
    %577 = math.tanh %571 : vector<2x256xf32>
    %578 = vector.extract_strided_slice %576 {offsets = [0, 0], sizes = [2, 64], strides = [1, 1]} : vector<2x256xf32> to vector<2x64xf32>
    %579 = vector.extract_strided_slice %576 {offsets = [0, 64], sizes = [2, 64], strides = [1, 1]} : vector<2x256xf32> to vector<2x64xf32>
    %580 = vector.extract_strided_slice %576 {offsets = [0, 128], sizes = [2, 64], strides = [1, 1]} : vector<2x256xf32> to vector<2x64xf32>
    %581 = vector.extract_strided_slice %577 {offsets = [0, 192], sizes = [2, 64], strides = [1, 1]} : vector<2x256xf32> to vector<2x64xf32>
    %582 = arith.mulf %579, %566 : vector<2x64xf32>
    %583 = arith.mulf %578, %581 : vector<2x64xf32>
    %584 = arith.addf %582, %583 : vector<2x64xf32>
    %585 = math.tanh %584 : vector<2x64xf32>
    %586 = arith.mulf %580, %585 : vector<2x64xf32>
    %587 = vector.extract_strided_slice %457 {offsets = [14, 0], sizes = [2, 256], strides = [1, 1]} : vector<16x256xf32> to vector<2x256xf32>
    %cst_97 = arith.constant dense<0.000000e+00> : vector<2x256xf32>
    %588 = tpu.matmul %586, %458, %cst_97 {dimension_numbers = #tpu.dot_dimension_numbers<[1], [0], [0], [1], [0, 0, 1, 1], [], []>} : vector<2x64xf32>, vector<64x256xf32>, vector<2x256xf32> -> vector<2x256xf32>
    %589 = arith.addf %587, %588 : vector<2x256xf32>
    %590 = arith.negf %589 : vector<2x256xf32>
    %591 = math.exp %590 : vector<2x256xf32>
    %cst_98 = arith.constant 1.000000e+00 : f32
    %592 = vector.broadcast %cst_98 : f32 to vector<2x256xf32>
    %593 = arith.addf %592, %591 : vector<2x256xf32>
    %594 = arith.divf %592, %593 : vector<2x256xf32>
    %595 = math.tanh %589 : vector<2x256xf32>
    %596 = vector.extract_strided_slice %594 {offsets = [0, 0], sizes = [2, 64], strides = [1, 1]} : vector<2x256xf32> to vector<2x64xf32>
    %597 = vector.extract_strided_slice %594 {offsets = [0, 64], sizes = [2, 64], strides = [1, 1]} : vector<2x256xf32> to vector<2x64xf32>
    %598 = vector.extract_strided_slice %594 {offsets = [0, 128], sizes = [2, 64], strides = [1, 1]} : vector<2x256xf32> to vector<2x64xf32>
    %599 = vector.extract_strided_slice %595 {offsets = [0, 192], sizes = [2, 64], strides = [1, 1]} : vector<2x256xf32> to vector<2x64xf32>
    %600 = arith.mulf %597, %584 : vector<2x64xf32>
    %601 = arith.mulf %596, %599 : vector<2x64xf32>
    %602 = arith.addf %600, %601 : vector<2x64xf32>
    %603 = math.tanh %602 : vector<2x64xf32>
    %604 = arith.mulf %598, %603 : vector<2x64xf32>
    %605 = tpu.concatenate %478, %496, %514, %532, %550, %568, %586, %604 in 0 : vector<2x64xf32>, vector<2x64xf32>, vector<2x64xf32>, vector<2x64xf32>, vector<2x64xf32>, vector<2x64xf32>, vector<2x64xf32>, vector<2x64xf32> -> vector<16x64xf32>
    %c0_99 = arith.constant 0 : index
    %c0_100 = arith.constant 0 : index
    %606 = vector.load %arg13[%c0_99, %c0_100] : memref<64x1xf32, #tpu.memory_space<vmem>>, vector<64x1xf32>
    %cst_101 = arith.constant dense<0.000000e+00> : vector<16x1xf32>
    %607 = tpu.matmul %605, %606, %cst_101 {dimension_numbers = #tpu.dot_dimension_numbers<[1], [0], [0], [1], [0, 0, 1, 1], [], []>} : vector<16x64xf32>, vector<64x1xf32>, vector<16x1xf32> -> vector<16x1xf32>
    %c0_102 = arith.constant 0 : index
    %c0_103 = arith.constant 0 : index
    %608 = vector.load %arg14[%c0_102, %c0_103] : memref<1x1xf32, #tpu.memory_space<vmem>>, vector<1x1xf32>
    %609 = vector.broadcast %608 : vector<1x1xf32> to vector<16x1xf32>
    %610 = arith.addf %607, %609 : vector<16x1xf32>
    %c0_104 = arith.constant 0 : index
    %c0_105 = arith.constant 0 : index
    %611 = vector.load %arg15[%c0_104, %c0_105] : memref<16x1xf32, #tpu.memory_space<vmem>>, vector<16x1xf32>
    tpu.vector_store %arg15[%c0_104, %c0_105], %610 {strides = array<i32>} : memref<16x1xf32, #tpu.memory_space<vmem>>, vector<16x1xf32>,
    return
  }
}

</mosaic_0001>

<llo_original>
// kernel: recurrent_autoencoder_forward.1
$region0: #{recurrent_autoencoder_forward.1}
  #allocation0 [shape = 'u32[]', space=smem, size = 0x4, offset = 0x4, fixed_abs, tag = 'smem constant byte address 0x4 - core index']
  #allocation1 [shape = 'u32[72,128]{1,0:T(1,128)}', space=vmem, size = 0x9000, scoped, tag = 'internal scratch']
  #allocation2 [shape = 'f32[1,1]{1,0:T(1,128)S(1)}', space=vmem, size = 0x200, scoped, tag = 'scoped memory for recurrent_autoencoder_forward.1']
  %s0 = inlined_call_operand.vmem [shape: f32[16,1], index: 0, kind: input, shape index: {}]
  %s1 = inlined_call_operand.vmem [shape: f32[1,256], index: 1, kind: input, shape index: {}]
  %s2 = inlined_call_operand.hbm [shape: f32[64,256], index: 2, kind: input, shape index: {}]
  %s3 = inlined_call_operand.vmem [shape: f32[1,256], index: 3, kind: input, shape index: {}]
  %s4 = inlined_call_operand.vmem [shape: f32[64,128], index: 4, kind: input, shape index: {}]
  %s5 = inlined_call_operand.vmem [shape: f32[32,128], index: 5, kind: input, shape index: {}]
  %s6 = inlined_call_operand.vmem [shape: f32[1,128], index: 6, kind: input, shape index: {}]
  %s7 = inlined_call_operand.hbm [shape: f32[32,128], index: 7, kind: input, shape index: {}]
  %s8 = inlined_call_operand.hbm [shape: f32[32,128], index: 8, kind: input, shape index: {}]
  %s9 = inlined_call_operand.hbm [shape: f32[1,128], index: 9, kind: input, shape index: {}]
  %s10 = inlined_call_operand.hbm [shape: f32[32,256], index: 10, kind: input, shape index: {}]
  %s11 = inlined_call_operand.hbm [shape: f32[64,256], index: 11, kind: input, shape index: {}]
  %s12 = inlined_call_operand.vmem [shape: f32[1,256], index: 12, kind: input, shape index: {}]
  %s13 = inlined_call_operand.vmem [shape: f32[64,1], index: 13, kind: input, shape index: {}]
  %s14 = inlined_call_operand.<no memory space> [shape: f32[1,1], index: 14, kind: input, shape index: {}]
  %s15 = inlined_call_operand.vmem [shape: f32[16,1], index: 15, kind: output, shape index: {}]
  %s16 = sld [smem:[#allocation0]]
  $region94: #{recurrent_autoencoder_forward.1} parent=0
    _
  %s18 = ssub.s32 1, %s16
  %s19 = scalar_select 0, %s18, %s16
  %v20 = vstv %s14
  %21 = vst [vmem:[#allocation2] sm:$0x1] %v20
  $region1: #{recurrent_autoencoder_forward.1} parent=0
    #allocation3 [shape = 'u8[65536]{0}', space=vmem, size = 0x10000, scoped, tag = 'input window, operand 2, single buffered']
    #allocation4 [shape = 's32[1]{0}', space=sflag, size = 0x4, scoped, tag = 'scoped memory for recurrent_autoencoder_forward.1']
    #allocation5 [shape = 'u8[16384]{0}', space=vmem, size = 0x4000, scoped, tag = 'input window, operand 7, single buffered']
    #allocation6 [shape = 's32[1]{0}', space=sflag, size = 0x4, scoped, tag = 'scoped memory for recurrent_autoencoder_forward.1']
    #allocation7 [shape = 'u8[16384]{0}', space=vmem, size = 0x4000, scoped, tag = 'input window, operand 8, single buffered']
    #allocation8 [shape = 'u8[512]{0}', space=vmem, size = 0x400, scoped, tag = 'input window, operand 9, single buffered']
    #allocation9 [shape = 's32[1]{0}', space=sflag, size = 0x4, scoped, tag = 'scoped memory for recurrent_autoencoder_forward.1']
    #allocation10 [shape = 'u8[32768]{0}', space=vmem, size = 0x8000, scoped, tag = 'input window, operand 10, single buffered']
    #allocation11 [shape = 'u8[65536]{0}', space=vmem, size = 0x10000, scoped, tag = 'input window, operand 11, single buffered']
    #allocation12 [shape = 's32[1]{0}', space=sflag, size = 0x4, scoped, tag = 'scoped memory for recurrent_autoencoder_forward.1']
    %22 = vsyncpa [#allocation4], 0
    %23 = vsyncpa [#allocation6], 0
    %24 = vsyncpa [#allocation9], 0
    %25 = vsyncpa [#allocation12], 0
    // Predicated region
    $region2: #{recurrent_autoencoder_forward.1} parent=1 // pred_check
      _
    $region3: #{recurrent_autoencoder_forward.1} parent=1 // pred_check_branch
      %27 = sbr.rel (0) target = $region5
    $region4: #{recurrent_autoencoder_forward.1} parent=1 // pred_region
      _
    $region5: #{recurrent_autoencoder_forward.1} parent=1 // pred_fallthru
      _
    // Predicated region
    $region6: #{recurrent_autoencoder_forward.1} parent=1 // pred_check
      _
    $region7: #{recurrent_autoencoder_forward.1} parent=1 // pred_check_branch
      %29 = sbr.rel (0) target = $region9
    $region8: #{recurrent_autoencoder_forward.1} parent=1 // pred_region
      _
    $region9: #{recurrent_autoencoder_forward.1} parent=1 // pred_fallthru
      _
    // Predicated region
    $region10: #{recurrent_autoencoder_forward.1} parent=1 // pred_check
      _
    $region11: #{recurrent_autoencoder_forward.1} parent=1 // pred_check_branch
      %31 = sbr.rel (0) target = $region13
    $region12: #{recurrent_autoencoder_forward.1} parent=1 // pred_region
      %33 = vsyncadd [#allocation4], 0
      %s34 = sshll.u32 %s2, 4
      %s35 = int_to_ptr.hbm [resolvable:$true] %s34
      %s36 = sshll.u32 [#allocation3], 4
      %s37 = int_to_ptr.vmem [resolvable:$true] %s36
      %42 = dma.hbm_to_vmem [thread:$0]  %s35, 2048, %s37, [#allocation4], 256, 256, 16
    $region13: #{recurrent_autoencoder_forward.1} parent=1 // pred_fallthru
      _
    // Predicated region
    $region14: #{recurrent_autoencoder_forward.1} parent=1 // pred_check
      _
    $region15: #{recurrent_autoencoder_forward.1} parent=1 // pred_check_branch
      %44 = sbr.rel (0) target = $region17
    $region16: #{recurrent_autoencoder_forward.1} parent=1 // pred_region
      _
    $region17: #{recurrent_autoencoder_forward.1} parent=1 // pred_fallthru
      _
    // Predicated region
    $region18: #{recurrent_autoencoder_forward.1} parent=1 // pred_check
      _
    $region19: #{recurrent_autoencoder_forward.1} parent=1 // pred_check_branch
      %46 = sbr.rel (0) target = $region21
    $region20: #{recurrent_autoencoder_forward.1} parent=1 // pred_region
      _
    $region21: #{recurrent_autoencoder_forward.1} parent=1 // pred_fallthru
      _
    // Predicated region
    $region22: #{recurrent_autoencoder_forward.1} parent=1 // pred_check
      _
    $region23: #{recurrent_autoencoder_forward.1} parent=1 // pred_check_branch
      %48 = sbr.rel (0) target = $region25
    $region24: #{recurrent_autoencoder_forward.1} parent=1 // pred_region
      _
    $region25: #{recurrent_autoencoder_forward.1} parent=1 // pred_fallthru
      _
    // Predicated region
    $region26: #{recurrent_autoencoder_forward.1} parent=1 // pred_check
      _
    $region27: #{recurrent_autoencoder_forward.1} parent=1 // pred_check_branch
      %50 = sbr.rel (0) target = $region29
    $region28: #{recurrent_autoencoder_forward.1} parent=1 // pred_region
      _
    $region29: #{recurrent_autoencoder_forward.1} parent=1 // pred_fallthru
      _
    // Predicated region
    $region30: #{recurrent_autoencoder_forward.1} parent=1 // pred_check
      _
    $region31: #{recurrent_autoencoder_forward.1} parent=1 // pred_check_branch
      %52 = sbr.rel (0) target = $region33
    $region32: #{recurrent_autoencoder_forward.1} parent=1 // pred_region
      %54 = vsyncadd [#allocation6], 0
      %s55 = sshll.u32 %s7, 4
      %s56 = int_to_ptr.hbm [resolvable:$true] %s55
      %s57 = sshll.u32 [#allocation5], 4
      %s58 = int_to_ptr.vmem [resolvable:$true] %s57
      %63 = dma.hbm_to_vmem [thread:$0]  %s56, 512, %s58, [#allocation6], 128, 128, 8
    $region33: #{recurrent_autoencoder_forward.1} parent=1 // pred_fallthru
      _
    // Predicated region
    $region34: #{recurrent_autoencoder_forward.1} parent=1 // pred_check
      _
    $region35: #{recurrent_autoencoder_forward.1} parent=1 // pred_check_branch
      %65 = sbr.rel (0) target = $region37
    $region36: #{recurrent_autoencoder_forward.1} parent=1 // pred_region
      %67 = vsyncadd [#allocation6], 0
      %s68 = sshll.u32 %s8, 4
      %s69 = int_to_ptr.hbm [resolvable:$true] %s68
      %s70 = sshll.u32 [#allocation7], 4
      %s71 = int_to_ptr.vmem [resolvable:$true] %s70
      %76 = dma.hbm_to_vmem [thread:$0]  %s69, 512, %s71, [#allocation6], 128, 128, 8
    $region37: #{recurrent_autoencoder_forward.1} parent=1 // pred_fallthru
      _
    // Predicated region
    $region38: #{recurrent_autoencoder_forward.1} parent=1 // pred_check
      _
    $region39: #{recurrent_autoencoder_forward.1} parent=1 // pred_check_branch
      %78 = sbr.rel (0) target = $region41
    $region40: #{recurrent_autoencoder_forward.1} parent=1 // pred_region
      %80 = vsyncadd [#allocation9], 0
      %s82 = sshll.u32 %s9, 4
      %s83 = int_to_ptr.hbm [resolvable:$true] %s82
      %s84 = sshll.u32 [#allocation8], 4
      %s85 = int_to_ptr.vmem [resolvable:$true] %s84
      %87 = dma.hbm_to_vmem [thread:$0]  %s83, 16, %s85, [#allocation9]
    $region41: #{recurrent_autoencoder_forward.1} parent=1 // pred_fallthru
      _
    // Predicated region
    $region42: #{recurrent_autoencoder_forward.1} parent=1 // pred_check
      _
    $region43: #{recurrent_autoencoder_forward.1} parent=1 // pred_check_branch
      %89 = sbr.rel (0) target = $region45
    $region44: #{recurrent_autoencoder_forward.1} parent=1 // pred_region
      %91 = vsyncadd [#allocation9], 0
      %s92 = sshll.u32 %s10, 4
      %s93 = int_to_ptr.hbm [resolvable:$true] %s92
      %s94 = sshll.u32 [#allocation10], 4
      %s95 = int_to_ptr.vmem [resolvable:$true] %s94
      %100 = dma.hbm_to_vmem [thread:$0]  %s93, 1024, %s95, [#allocation9], 256, 256, 16
    $region45: #{recurrent_autoencoder_forward.1} parent=1 // pred_fallthru
      _
    // Predicated region
    $region46: #{recurrent_autoencoder_forward.1} parent=1 // pred_check
      _
    $region47: #{recurrent_autoencoder_forward.1} parent=1 // pred_check_branch
      %102 = sbr.rel (0) target = $region49
    $region48: #{recurrent_autoencoder_forward.1} parent=1 // pred_region
      %104 = vsyncadd [#allocation12], 0
      %s105 = sshll.u32 %s11, 4
      %s106 = int_to_ptr.hbm [resolvable:$true] %s105
      %s107 = sshll.u32 [#allocation11], 4
      %s108 = int_to_ptr.vmem [resolvable:$true] %s107
      %113 = dma.hbm_to_vmem [thread:$0]  %s106, 2048, %s108, [#allocation12], 256, 256, 16
    $region49: #{recurrent_autoencoder_forward.1} parent=1 // pred_fallthru
      _
    // Predicated region
    $region50: #{recurrent_autoencoder_forward.1} parent=1 // pred_check
      _
    $region51: #{recurrent_autoencoder_forward.1} parent=1 // pred_check_branch
      %115 = sbr.rel (0) target = $region53
    $region52: #{recurrent_autoencoder_forward.1} parent=1 // pred_region
      _
    $region53: #{recurrent_autoencoder_forward.1} parent=1 // pred_fallthru
      _
    // Predicated region
    $region54: #{recurrent_autoencoder_forward.1} parent=1 // pred_check
      _
    $region55: #{recurrent_autoencoder_forward.1} parent=1 // pred_check_branch
      %117 = sbr.rel (0) target = $region57
    $region56: #{recurrent_autoencoder_forward.1} parent=1 // pred_region
      _
    $region57: #{recurrent_autoencoder_forward.1} parent=1 // pred_fallthru
      _
    // Predicated region
    $region58: #{recurrent_autoencoder_forward.1} parent=1 // pred_check
      _
    $region59: #{recurrent_autoencoder_forward.1} parent=1 // pred_check_branch
      %119 = sbr.rel (0) target = $region61
    $region60: #{recurrent_autoencoder_forward.1} parent=1 // pred_region
      _
    $region61: #{recurrent_autoencoder_forward.1} parent=1 // pred_fallthru
      _
    // Predicated region
    $region62: #{recurrent_autoencoder_forward.1} parent=1 // pred_check
      _
    $region63: #{recurrent_autoencoder_forward.1} parent=1 // pred_check_branch
      %121 = sbr.rel (0) target = $region65
    $region64: #{recurrent_autoencoder_forward.1} parent=1 // pred_region
      %123 = dma.done [#allocation4], 2048
    $region65: #{recurrent_autoencoder_forward.1} parent=1 // pred_fallthru
      _
    // Predicated region
    $region66: #{recurrent_autoencoder_forward.1} parent=1 // pred_check
      _
    $region67: #{recurrent_autoencoder_forward.1} parent=1 // pred_check_branch
      %125 = sbr.rel (0) target = $region69
    $region68: #{recurrent_autoencoder_forward.1} parent=1 // pred_region
      %127 = dma.done [#allocation6], 512
    $region69: #{recurrent_autoencoder_forward.1} parent=1 // pred_fallthru
      _
    // Predicated region
    $region70: #{recurrent_autoencoder_forward.1} parent=1 // pred_check
      _
    $region71: #{recurrent_autoencoder_forward.1} parent=1 // pred_check_branch
      %129 = sbr.rel (0) target = $region73
    $region72: #{recurrent_autoencoder_forward.1} parent=1 // pred_region
      %131 = dma.done [#allocation6], 512
    $region73: #{recurrent_autoencoder_forward.1} parent=1 // pred_fallthru
      _
    // Predicated region
    $region74: #{recurrent_autoencoder_forward.1} parent=1 // pred_check
      _
    $region75: #{recurrent_autoencoder_forward.1} parent=1 // pred_check_branch
      %133 = sbr.rel (0) target = $region77
    $region76: #{recurrent_autoencoder_forward.1} parent=1 // pred_region
      %135 = dma.done [#allocation9], 16
    $region77: #{recurrent_autoencoder_forward.1} parent=1 // pred_fallthru
      _
    // Predicated region
    $region78: #{recurrent_autoencoder_forward.1} parent=1 // pred_check
      _
    $region79: #{recurrent_autoencoder_forward.1} parent=1 // pred_check_branch
      %137 = sbr.rel (0) target = $region81
    $region80: #{recurrent_autoencoder_forward.1} parent=1 // pred_region
      %139 = dma.done [#allocation9], 1024
    $region81: #{recurrent_autoencoder_forward.1} parent=1 // pred_fallthru
      _
    // Predicated region
    $region82: #{recurrent_autoencoder_forward.1} parent=1 // pred_check
      _
    $region83: #{recurrent_autoencoder_forward.1} parent=1 // pred_check_branch
      %141 = sbr.rel (0) target = $region85
    $region84: #{recurrent_autoencoder_forward.1} parent=1 // pred_region
      %143 = dma.done [#allocation12], 2048
    $region85: #{recurrent_autoencoder_forward.1} parent=1 // pred_fallthru
      _
    %v144 = vld [vmem:[%s0] sm:$0xff]
    %v145 = vld [vmem:[%s0 + $0x8] sm:$0xff]
    %v146 = vld [vmem:[%s1] sm:$0x3]
    %148 = vset.pattern.permute.xlu0 0
    %149 = vperm.xlu0 %148, %v144
    %v150 = vpop.permute.xlu0 %149
    %153 = vset.pattern.permute.xlu0 0
    %154 = vperm.xlu0 %153, %v145
    %v155 = vpop.permute.xlu0 %154
    %v158 = vperm.slane %v146, 0
    %v159 = vperm.slane %v146, 1
    %v162 = vmul.f32 %v150, %v158
    %v163 = vmul.f32 %v150, %v159
    %v164 = vmul.f32 %v155, %v158
    %v165 = vmul.f32 %v155, %v159
    %v166 = vld [vmem:[%s3] sm:$0x3]
    %v168 = vperm.slane %v166, 0
    %v169 = vperm.slane %v166, 1
    %v172 = vadd.f32 %v162, %v168
    %v173 = vadd.f32 %v163, %v169
    %v174 = vadd.f32 %v164, %v168
    %v175 = vadd.f32 %v165, %v169
    %v176 = vld [vmem:[#allocation3] sm:$0xff]
    %v177 = vld [vmem:[#allocation3 + $0x8] sm:$0xff]
    %v178 = vld [vmem:[#allocation3 + $0x10] sm:$0xff]
    %v179 = vld [vmem:[#allocation3 + $0x18] sm:$0xff]
    %v180 = vld [vmem:[#allocation3 + $0x20] sm:$0xff]
    %v181 = vld [vmem:[#allocation3 + $0x28] sm:$0xff]
    %v182 = vld [vmem:[#allocation3 + $0x30] sm:$0xff]
    %v183 = vld [vmem:[#allocation3 + $0x38] sm:$0xff]
    %v184 = vld [vmem:[#allocation3 + $0x40] sm:$0xff]
    %v185 = vld [vmem:[#allocation3 + $0x48] sm:$0xff]
    %v186 = vld [vmem:[#allocation3 + $0x50] sm:$0xff]
    %v187 = vld [vmem:[#allocation3 + $0x58] sm:$0xff]
    %v188 = vld [vmem:[#allocation3 + $0x60] sm:$0xff]
    %v189 = vld [vmem:[#allocation3 + $0x68] sm:$0xff]
    %v190 = vld [vmem:[#allocation3 + $0x70] sm:$0xff]
    %v191 = vld [vmem:[#allocation3 + $0x78] sm:$0xff]
    %vm192 = vcmask 523264
    %v194 = vsel %vm192, 0.0, 0
    %196 = vmatpush.msra.mxu0 0.0
    %197 = vmatpush.msra.mxu0 0.0
    %198 = vmatpush.msra.mxu0 0.0
    %199 = vmatpush.msra.mxu0 0.0
    %200 = vmatpush.msra.mxu0 0.0
    %201 = vmatpush.msra.mxu0 0.0
    %202 = vmatpush.msra.mxu0 0.0
    %203 = vmatpush.msra.mxu0 0.0
    %204 = vmatpush.msra.mxu0 %v190
    %205 = vmatpush.msra.mxu0 %v188
    %206 = vmatpush.msra.mxu0 %v186
    %207 = vmatpush.msra.mxu0 %v184
    %208 = vmatpush.msra.mxu0 %v182
    %209 = vmatpush.msra.mxu0 %v180
    %210 = vmatpush.msra.mxu0 %v178
    %211 = vmatpush.msra.mxu0 %v176
    %212 = vmatmul.f32.gmra.mxu0 %v194
    %v213 = vpop.f32.mrf.mxu0
    %v214 = vadd.f32 0.0, %v213
    %215 = vdwg.mxu0
    %216 = vmatpush.msra.mxu0 0.0
    %217 = vmatpush.msra.mxu0 0.0
    %218 = vmatpush.msra.mxu0 0.0
    %219 = vmatpush.msra.mxu0 0.0
    %220 = vmatpush.msra.mxu0 0.0
    %221 = vmatpush.msra.mxu0 0.0
    %222 = vmatpush.msra.mxu0 0.0
    %223 = vmatpush.msra.mxu0 0.0
    %224 = vmatpush.msra.mxu0 %v191
    %225 = vmatpush.msra.mxu0 %v189
    %226 = vmatpush.msra.mxu0 %v187
    %227 = vmatpush.msra.mxu0 %v185
    %228 = vmatpush.msra.mxu0 %v183
    %229 = vmatpush.msra.mxu0 %v181
    %230 = vmatpush.msra.mxu0 %v179
    %231 = vmatpush.msra.mxu0 %v177
    %232 = vmatmul.f32.gmra.mxu0 %v194
    %v233 = vpop.f32.mrf.mxu0
    %v234 = vadd.f32 0.0, %v233
    %235 = vdwg.mxu0
    %v236 = vadd.f32 %v172, %v214
    %v237 = vadd.f32 %v173, %v234
    %v238 = vxor.u32 %v236, 2147483648
    %v239 = vxor.u32 %v237, 2147483648
    %v240 = vmul.f32 %v238, 1.442695
    %v241 = vpow.pop %v240
    %v242 = vmul.f32 %v239, 1.442695
    %v243 = vpow.pop %v242
    %v244 = vadd.f32 %v241, 1.0
    %v245 = vadd.f32 %v243, 1.0
    %v246 = vrcp.pop %v244
    %v247 = vmul.f32 %v244, %v246
    %v248 = vsub.f32 1.0, %v247
    %v249 = vmul.f32 %v246, %v248
    %v250 = vadd.f32 %v246, %v249
    %vm251 = vweird.f32 %v244
    %vm252 = vweird.f32 %v246
    %vm253 = vmor %vm251, %vm252
    %v254 = vsel %vm253, %v246, %v250
    %v255 = vand.u32 2147483647, %v244
    %vm256 = vcmp.eq.f32.partialorder %v255, 8.507059e+37
    %v257 = vand.u32 %v244, 2147483648
    %v258 = vor.u32 1.1754944e-38, %v257
    %v259 = vsel %vm256, %v258, %v254
    %v260 = vmul.f32 1.0, %v259
    %v261 = vrcp.pop %v245
    %v262 = vmul.f32 %v245, %v261
    %v263 = vsub.f32 1.0, %v262
    %v264 = vmul.f32 %v261, %v263
    %v265 = vadd.f32 %v261, %v264
    %vm266 = vweird.f32 %v245
    %vm267 = vweird.f32 %v261
    %vm268 = vmor %vm266, %vm267
    %v269 = vsel %vm268, %v261, %v265
    %v270 = vand.u32 2147483647, %v245
    %vm271 = vcmp.eq.f32.partialorder %v270, 8.507059e+37
    %v272 = vand.u32 %v245, 2147483648
    %v273 = vor.u32 1.1754944e-38, %v272
    %v274 = vsel %vm271, %v273, %v269
    %v275 = vmul.f32 1.0, %v274
    %v276 = vtanh.pop %v237
    %v277 = vmul.f32 %v260, 0.0
    %279 = vrot.lane.b32.xlu0 %v276, 64
    %v280 = vpop.permute.xlu0 %279
    %v282 = vmul.f32 %v260, %v280
    %284 = vrot.lane.b32.xlu0 %v282, 64
    %v285 = vpop.permute.xlu0 %284
    %v287 = vadd.f32 %v277, %v285
    %v288 = vtanh.pop %v287
    %290 = vrot.lane.b32.xlu0 %v288, 64
    %v291 = vpop.permute.xlu0 %290
    %v293 = vmul.f32 %v275, %v291
    %v295 = vsel %vm192, %v293, 0
    %297 = vmatpush.msra.mxu0 0.0
    %298 = vmatpush.msra.mxu0 0.0
    %299 = vmatpush.msra.mxu0 0.0
    %300 = vmatpush.msra.mxu0 0.0
    %301 = vmatpush.msra.mxu0 0.0
    %302 = vmatpush.msra.mxu0 0.0
    %303 = vmatpush.msra.mxu0 0.0
    %304 = vmatpush.msra.mxu0 0.0
    %305 = vmatpush.msra.mxu0 %v190
    %306 = vmatpush.msra.mxu0 %v188
    %307 = vmatpush.msra.mxu0 %v186
    %308 = vmatpush.msra.mxu0 %v184
    %309 = vmatpush.msra.mxu0 %v182
    %310 = vmatpush.msra.mxu0 %v180
    %311 = vmatpush.msra.mxu0 %v178
    %312 = vmatpush.msra.mxu0 %v176
    %313 = vmatmul.f32.gmra.mxu0 %v295
    %v314 = vpop.f32.mrf.mxu0
    %v315 = vadd.f32 0.0, %v314
    %316 = vdwg.mxu0
    %317 = vmatpush.msra.mxu0 0.0
    %318 = vmatpush.msra.mxu0 0.0
    %319 = vmatpush.msra.mxu0 0.0
    %320 = vmatpush.msra.mxu0 0.0
    %321 = vmatpush.msra.mxu0 0.0
    %322 = vmatpush.msra.mxu0 0.0
    %323 = vmatpush.msra.mxu0 0.0
    %324 = vmatpush.msra.mxu0 0.0
    %325 = vmatpush.msra.mxu0 %v191
    %326 = vmatpush.msra.mxu0 %v189
    %327 = vmatpush.msra.mxu0 %v187
    %328 = vmatpush.msra.mxu0 %v185
    %329 = vmatpush.msra.mxu0 %v183
    %330 = vmatpush.msra.mxu0 %v181
    %331 = vmatpush.msra.mxu0 %v179
    %332 = vmatpush.msra.mxu0 %v177
    %333 = vmatmul.f32.gmra.mxu0 %v295
    %v334 = vpop.f32.mrf.mxu0
    %v335 = vadd.f32 0.0, %v334
    %336 = vdwg.mxu0
    %v339 = vrot.slane %v315, 6
    %v340 = vrot.slane %v335, 6
    %v343 = vadd.f32 %v172, %v339
    %v344 = vadd.f32 %v173, %v340
    %v345 = vxor.u32 %v343, 2147483648
    %v346 = vxor.u32 %v344, 2147483648
    %v347 = vmul.f32 %v345, 1.442695
    %v348 = vpow.pop %v347
    %v349 = vmul.f32 %v346, 1.442695
    %v350 = vpow.pop %v349
    %v351 = vadd.f32 %v348, 1.0
    %v352 = vadd.f32 %v350, 1.0
    %v353 = vrcp.pop %v351
    %v354 = vmul.f32 %v351, %v353
    %v355 = vsub.f32 1.0, %v354
    %v356 = vmul.f32 %v353, %v355
    %v357 = vadd.f32 %v353, %v356
    %vm358 = vweird.f32 %v351
    %vm359 = vweird.f32 %v353
    %vm360 = vmor %vm358, %vm359
    %v361 = vsel %vm360, %v353, %v357
    %v362 = vand.u32 2147483647, %v351
    %vm363 = vcmp.eq.f32.partialorder %v362, 8.507059e+37
    %v364 = vand.u32 %v351, 2147483648
    %v365 = vor.u32 1.1754944e-38, %v364
    %v366 = vsel %vm363, %v365, %v361
    %v367 = vmul.f32 1.0, %v366
    %v368 = vrcp.pop %v352
    %v369 = vmul.f32 %v352, %v368
    %v370 = vsub.f32 1.0, %v369
    %v371 = vmul.f32 %v368, %v370
    %v372 = vadd.f32 %v368, %v371
    %vm373 = vweird.f32 %v352
    %vm374 = vweird.f32 %v368
    %vm375 = vmor %vm373, %vm374
    %v376 = vsel %vm375, %v368, %v372
    %v377 = vand.u32 2147483647, %v352
    %vm378 = vcmp.eq.f32.partialorder %v377, 8.507059e+37
    %v379 = vand.u32 %v352, 2147483648
    %v380 = vor.u32 1.1754944e-38, %v379
    %v381 = vsel %vm378, %v380, %v376
    %v382 = vmul.f32 1.0, %v381
    %v383 = vtanh.pop %v344
    %v385 = vrot.slane %v287, 6
    %v387 = vmul.f32 %v367, %v385
    %389 = vrot.lane.b32.xlu0 %v383, 64
    %v390 = vpop.permute.xlu0 %389
    %v392 = vmul.f32 %v367, %v390
    %394 = vrot.lane.b32.xlu0 %v392, 64
    %v395 = vpop.permute.xlu0 %394
    %v397 = vadd.f32 %v387, %v395
    %v398 = vtanh.pop %v397
    %400 = vrot.lane.b32.xlu0 %v398, 64
    %v401 = vpop.permute.xlu0 %400
    %v403 = vmul.f32 %v382, %v401
    %v405 = vrot.slane %v403, 2
    %v406 = vsel %vm192, %v405, 0
    %408 = vmatpush.msra.mxu0 0.0
    %409 = vmatpush.msra.mxu0 0.0
    %410 = vmatpush.msra.mxu0 0.0
    %411 = vmatpush.msra.mxu0 0.0
    %412 = vmatpush.msra.mxu0 0.0
    %413 = vmatpush.msra.mxu0 0.0
    %414 = vmatpush.msra.mxu0 0.0
    %415 = vmatpush.msra.mxu0 0.0
    %416 = vmatpush.msra.mxu0 %v190
    %417 = vmatpush.msra.mxu0 %v188
    %418 = vmatpush.msra.mxu0 %v186
    %419 = vmatpush.msra.mxu0 %v184
    %420 = vmatpush.msra.mxu0 %v182
    %421 = vmatpush.msra.mxu0 %v180
    %422 = vmatpush.msra.mxu0 %v178
    %423 = vmatpush.msra.mxu0 %v176
    %424 = vmatmul.f32.gmra.mxu0 %v406
    %v425 = vpop.f32.mrf.mxu0
    %v426 = vadd.f32 0.0, %v425
    %427 = vdwg.mxu0
    %428 = vmatpush.msra.mxu0 0.0
    %429 = vmatpush.msra.mxu0 0.0
    %430 = vmatpush.msra.mxu0 0.0
    %431 = vmatpush.msra.mxu0 0.0
    %432 = vmatpush.msra.mxu0 0.0
    %433 = vmatpush.msra.mxu0 0.0
    %434 = vmatpush.msra.mxu0 0.0
    %435 = vmatpush.msra.mxu0 0.0
    %436 = vmatpush.msra.mxu0 %v191
    %437 = vmatpush.msra.mxu0 %v189
    %438 = vmatpush.msra.mxu0 %v187
    %439 = vmatpush.msra.mxu0 %v185
    %440 = vmatpush.msra.mxu0 %v183
    %441 = vmatpush.msra.mxu0 %v181
    %442 = vmatpush.msra.mxu0 %v179
    %443 = vmatpush.msra.mxu0 %v177
    %444 = vmatmul.f32.gmra.mxu0 %v406
    %v445 = vpop.f32.mrf.mxu0
    %v446 = vadd.f32 0.0, %v445
    %447 = vdwg.mxu0
    %v450 = vrot.slane %v426, 4
    %v451 = vrot.slane %v446, 4
    %v454 = vadd.f32 %v172, %v450
    %v455 = vadd.f32 %v173, %v451
    %v456 = vxor.u32 %v454, 2147483648
    %v457 = vxor.u32 %v455, 2147483648
    %v458 = vmul.f32 %v456, 1.442695
    %v459 = vpow.pop %v458
    %v460 = vmul.f32 %v457, 1.442695
    %v461 = vpow.pop %v460
    %v462 = vadd.f32 %v459, 1.0
    %v463 = vadd.f32 %v461, 1.0
    %v464 = vrcp.pop %v462
    %v465 = vmul.f32 %v462, %v464
    %v466 = vsub.f32 1.0, %v465
    %v467 = vmul.f32 %v464, %v466
    %v468 = vadd.f32 %v464, %v467
    %vm469 = vweird.f32 %v462
    %vm470 = vweird.f32 %v464
    %vm471 = vmor %vm469, %vm470
    %v472 = vsel %vm471, %v464, %v468
    %v473 = vand.u32 2147483647, %v462
    %vm474 = vcmp.eq.f32.partialorder %v473, 8.507059e+37
    %v475 = vand.u32 %v462, 2147483648
    %v476 = vor.u32 1.1754944e-38, %v475
    %v477 = vsel %vm474, %v476, %v472
    %v478 = vmul.f32 1.0, %v477
    %v479 = vrcp.pop %v463
    %v480 = vmul.f32 %v463, %v479
    %v481 = vsub.f32 1.0, %v480
    %v482 = vmul.f32 %v479, %v481
    %v483 = vadd.f32 %v479, %v482
    %vm484 = vweird.f32 %v463
    %vm485 = vweird.f32 %v479
    %vm486 = vmor %vm484, %vm485
    %v487 = vsel %vm486, %v479, %v483
    %v488 = vand.u32 2147483647, %v463
    %vm489 = vcmp.eq.f32.partialorder %v488, 8.507059e+37
    %v490 = vand.u32 %v463, 2147483648
    %v491 = vor.u32 1.1754944e-38, %v490
    %v492 = vsel %vm489, %v491, %v487
    %v493 = vmul.f32 1.0, %v492
    %v494 = vtanh.pop %v455
    %v496 = vrot.slane %v397, 6
    %v498 = vmul.f32 %v478, %v496
    %500 = vrot.lane.b32.xlu0 %v494, 64
    %v501 = vpop.permute.xlu0 %500
    %v503 = vmul.f32 %v478, %v501
    %505 = vrot.lane.b32.xlu0 %v503, 64
    %v506 = vpop.permute.xlu0 %505
    %v508 = vadd.f32 %v498, %v506
    %v509 = vtanh.pop %v508
    %511 = vrot.lane.b32.xlu0 %v509, 64
    %v512 = vpop.permute.xlu0 %511
    %v514 = vmul.f32 %v493, %v512
    %v516 = vrot.slane %v514, 4
    %v517 = vsel %vm192, %v516, 0
    %519 = vmatpush.msra.mxu0 0.0
    %520 = vmatpush.msra.mxu0 0.0
    %521 = vmatpush.msra.mxu0 0.0
    %522 = vmatpush.msra.mxu0 0.0
    %523 = vmatpush.msra.mxu0 0.0
    %524 = vmatpush.msra.mxu0 0.0
    %525 = vmatpush.msra.mxu0 0.0
    %526 = vmatpush.msra.mxu0 0.0
    %527 = vmatpush.msra.mxu0 %v190
    %528 = vmatpush.msra.mxu0 %v188
    %529 = vmatpush.msra.mxu0 %v186
    %530 = vmatpush.msra.mxu0 %v184
    %531 = vmatpush.msra.mxu0 %v182
    %532 = vmatpush.msra.mxu0 %v180
    %533 = vmatpush.msra.mxu0 %v178
    %534 = vmatpush.msra.mxu0 %v176
    %535 = vmatmul.f32.gmra.mxu0 %v517
    %v536 = vpop.f32.mrf.mxu0
    %v537 = vadd.f32 0.0, %v536
    %538 = vdwg.mxu0
    %539 = vmatpush.msra.mxu0 0.0
    %540 = vmatpush.msra.mxu0 0.0
    %541 = vmatpush.msra.mxu0 0.0
    %542 = vmatpush.msra.mxu0 0.0
    %543 = vmatpush.msra.mxu0 0.0
    %544 = vmatpush.msra.mxu0 0.0
    %545 = vmatpush.msra.mxu0 0.0
    %546 = vmatpush.msra.mxu0 0.0
    %547 = vmatpush.msra.mxu0 %v191
    %548 = vmatpush.msra.mxu0 %v189
    %549 = vmatpush.msra.mxu0 %v187
    %550 = vmatpush.msra.mxu0 %v185
    %551 = vmatpush.msra.mxu0 %v183
    %552 = vmatpush.msra.mxu0 %v181
    %553 = vmatpush.msra.mxu0 %v179
    %554 = vmatpush.msra.mxu0 %v177
    %555 = vmatmul.f32.gmra.mxu0 %v517
    %v556 = vpop.f32.mrf.mxu0
    %v557 = vadd.f32 0.0, %v556
    %558 = vdwg.mxu0
    %v561 = vrot.slane %v537, 2
    %v562 = vrot.slane %v557, 2
    %v565 = vadd.f32 %v172, %v561
    %v566 = vadd.f32 %v173, %v562
    %v567 = vxor.u32 %v565, 2147483648
    %v568 = vxor.u32 %v566, 2147483648
    %v569 = vmul.f32 %v567, 1.442695
    %v570 = vpow.pop %v569
    %v571 = vmul.f32 %v568, 1.442695
    %v572 = vpow.pop %v571
    %v573 = vadd.f32 %v570, 1.0
    %v574 = vadd.f32 %v572, 1.0
    %v575 = vrcp.pop %v573
    %v576 = vmul.f32 %v573, %v575
    %v577 = vsub.f32 1.0, %v576
    %v578 = vmul.f32 %v575, %v577
    %v579 = vadd.f32 %v575, %v578
    %vm580 = vweird.f32 %v573
    %vm581 = vweird.f32 %v575
    %vm582 = vmor %vm580, %vm581
    %v583 = vsel %vm582, %v575, %v579
    %v584 = vand.u32 2147483647, %v573
    %vm585 = vcmp.eq.f32.partialorder %v584, 8.507059e+37
    %v586 = vand.u32 %v573, 2147483648
    %v587 = vor.u32 1.1754944e-38, %v586
    %v588 = vsel %vm585, %v587, %v583
    %v589 = vmul.f32 1.0, %v588
    %v590 = vrcp.pop %v574
    %v591 = vmul.f32 %v574, %v590
    %v592 = vsub.f32 1.0, %v591
    %v593 = vmul.f32 %v590, %v592
    %v594 = vadd.f32 %v590, %v593
    %vm595 = vweird.f32 %v574
    %vm596 = vweird.f32 %v590
    %vm597 = vmor %vm595, %vm596
    %v598 = vsel %vm597, %v590, %v594
    %v599 = vand.u32 2147483647, %v574
    %vm600 = vcmp.eq.f32.partialorder %v599, 8.507059e+37
    %v601 = vand.u32 %v574, 2147483648
    %v602 = vor.u32 1.1754944e-38, %v601
    %v603 = vsel %vm600, %v602, %v598
    %v604 = vmul.f32 1.0, %v603
    %v605 = vtanh.pop %v566
    %v607 = vrot.slane %v508, 6
    %v609 = vmul.f32 %v589, %v607
    %611 = vrot.lane.b32.xlu0 %v605, 64
    %v612 = vpop.permute.xlu0 %611
    %v614 = vmul.f32 %v589, %v612
    %616 = vrot.lane.b32.xlu0 %v614, 64
    %v617 = vpop.permute.xlu0 %616
    %v619 = vadd.f32 %v609, %v617
    %v620 = vtanh.pop %v619
    %622 = vrot.lane.b32.xlu0 %v620, 64
    %v623 = vpop.permute.xlu0 %622
    %v625 = vmul.f32 %v604, %v623
    %v627 = vrot.slane %v625, 6
    %v628 = vsel %vm192, %v627, 0
    %630 = vmatpush.msra.mxu0 0.0
    %631 = vmatpush.msra.mxu0 0.0
    %632 = vmatpush.msra.mxu0 0.0
    %633 = vmatpush.msra.mxu0 0.0
    %634 = vmatpush.msra.mxu0 0.0
    %635 = vmatpush.msra.mxu0 0.0
    %636 = vmatpush.msra.mxu0 0.0
    %637 = vmatpush.msra.mxu0 0.0
    %638 = vmatpush.msra.mxu0 %v190
    %639 = vmatpush.msra.mxu0 %v188
    %640 = vmatpush.msra.mxu0 %v186
    %641 = vmatpush.msra.mxu0 %v184
    %642 = vmatpush.msra.mxu0 %v182
    %643 = vmatpush.msra.mxu0 %v180
    %644 = vmatpush.msra.mxu0 %v178
    %645 = vmatpush.msra.mxu0 %v176
    %646 = vmatmul.f32.gmra.mxu0 %v628
    %v647 = vpop.f32.mrf.mxu0
    %v648 = vadd.f32 0.0, %v647
    %649 = vdwg.mxu0
    %650 = vmatpush.msra.mxu0 0.0
    %651 = vmatpush.msra.mxu0 0.0
    %652 = vmatpush.msra.mxu0 0.0
    %653 = vmatpush.msra.mxu0 0.0
    %654 = vmatpush.msra.mxu0 0.0
    %655 = vmatpush.msra.mxu0 0.0
    %656 = vmatpush.msra.mxu0 0.0
    %657 = vmatpush.msra.mxu0 0.0
    %658 = vmatpush.msra.mxu0 %v191
    %659 = vmatpush.msra.mxu0 %v189
    %660 = vmatpush.msra.mxu0 %v187
    %661 = vmatpush.msra.mxu0 %v185
    %662 = vmatpush.msra.mxu0 %v183
    %663 = vmatpush.msra.mxu0 %v181
    %664 = vmatpush.msra.mxu0 %v179
    %665 = vmatpush.msra.mxu0 %v177
    %666 = vmatmul.f32.gmra.mxu0 %v628
    %v667 = vpop.f32.mrf.mxu0
    %v668 = vadd.f32 0.0, %v667
    %669 = vdwg.mxu0
    %v670 = vadd.f32 %v174, %v648
    %v671 = vadd.f32 %v175, %v668
    %v672 = vxor.u32 %v670, 2147483648
    %v673 = vxor.u32 %v671, 2147483648
    %v674 = vmul.f32 %v672, 1.442695
    %v675 = vpow.pop %v674
    %v676 = vmul.f32 %v673, 1.442695
    %v677 = vpow.pop %v676
    %v678 = vadd.f32 %v675, 1.0
    %v679 = vadd.f32 %v677, 1.0
    %v680 = vrcp.pop %v678
    %v681 = vmul.f32 %v678, %v680
    %v682 = vsub.f32 1.0, %v681
    %v683 = vmul.f32 %v680, %v682
    %v684 = vadd.f32 %v680, %v683
    %vm685 = vweird.f32 %v678
    %vm686 = vweird.f32 %v680
    %vm687 = vmor %vm685, %vm686
    %v688 = vsel %vm687, %v680, %v684
    %v689 = vand.u32 2147483647, %v678
    %vm690 = vcmp.eq.f32.partialorder %v689, 8.507059e+37
    %v691 = vand.u32 %v678, 2147483648
    %v692 = vor.u32 1.1754944e-38, %v691
    %v693 = vsel %vm690, %v692, %v688
    %v694 = vmul.f32 1.0, %v693
    %v695 = vrcp.pop %v679
    %v696 = vmul.f32 %v679, %v695
    %v697 = vsub.f32 1.0, %v696
    %v698 = vmul.f32 %v695, %v697
    %v699 = vadd.f32 %v695, %v698
    %vm700 = vweird.f32 %v679
    %vm701 = vweird.f32 %v695
    %vm702 = vmor %vm700, %vm701
    %v703 = vsel %vm702, %v695, %v699
    %v704 = vand.u32 2147483647, %v679
    %vm705 = vcmp.eq.f32.partialorder %v704, 8.507059e+37
    %v706 = vand.u32 %v679, 2147483648
    %v707 = vor.u32 1.1754944e-38, %v706
    %v708 = vsel %vm705, %v707, %v703
    %v709 = vmul.f32 1.0, %v708
    %v710 = vtanh.pop %v671
    %v712 = vrot.slane %v619, 6
    %v714 = vmul.f32 %v694, %v712
    %716 = vrot.lane.b32.xlu0 %v710, 64
    %v717 = vpop.permute.xlu0 %716
    %v719 = vmul.f32 %v694, %v717
    %721 = vrot.lane.b32.xlu0 %v719, 64
    %v722 = vpop.permute.xlu0 %721
    %v724 = vadd.f32 %v714, %v722
    %v725 = vtanh.pop %v724
    %727 = vrot.lane.b32.xlu0 %v725, 64
    %v728 = vpop.permute.xlu0 %727
    %v730 = vmul.f32 %v709, %v728
    %v732 = vsel %vm192, %v730, 0
    %734 = vmatpush.msra.mxu0 0.0
    %735 = vmatpush.msra.mxu0 0.0
    %736 = vmatpush.msra.mxu0 0.0
    %737 = vmatpush.msra.mxu0 0.0
    %738 = vmatpush.msra.mxu0 0.0
    %739 = vmatpush.msra.mxu0 0.0
    %740 = vmatpush.msra.mxu0 0.0
    %741 = vmatpush.msra.mxu0 0.0
    %742 = vmatpush.msra.mxu0 %v190
    %743 = vmatpush.msra.mxu0 %v188
    %744 = vmatpush.msra.mxu0 %v186
    %745 = vmatpush.msra.mxu0 %v184
    %746 = vmatpush.msra.mxu0 %v182
    %747 = vmatpush.msra.mxu0 %v180
    %748 = vmatpush.msra.mxu0 %v178
    %749 = vmatpush.msra.mxu0 %v176
    %750 = vmatmul.f32.gmra.mxu0 %v732
    %v751 = vpop.f32.mrf.mxu0
    %v752 = vadd.f32 0.0, %v751
    %753 = vdwg.mxu0
    %754 = vmatpush.msra.mxu0 0.0
    %755 = vmatpush.msra.mxu0 0.0
    %756 = vmatpush.msra.mxu0 0.0
    %757 = vmatpush.msra.mxu0 0.0
    %758 = vmatpush.msra.mxu0 0.0
    %759 = vmatpush.msra.mxu0 0.0
    %760 = vmatpush.msra.mxu0 0.0
    %761 = vmatpush.msra.mxu0 0.0
    %762 = vmatpush.msra.mxu0 %v191
    %763 = vmatpush.msra.mxu0 %v189
    %764 = vmatpush.msra.mxu0 %v187
    %765 = vmatpush.msra.mxu0 %v185
    %766 = vmatpush.msra.mxu0 %v183
    %767 = vmatpush.msra.mxu0 %v181
    %768 = vmatpush.msra.mxu0 %v179
    %769 = vmatpush.msra.mxu0 %v177
    %770 = vmatmul.f32.gmra.mxu0 %v732
    %v771 = vpop.f32.mrf.mxu0
    %v772 = vadd.f32 0.0, %v771
    %773 = vdwg.mxu0
    %v776 = vrot.slane %v752, 6
    %v777 = vrot.slane %v772, 6
    %v780 = vadd.f32 %v174, %v776
    %v781 = vadd.f32 %v175, %v777
    %v782 = vxor.u32 %v780, 2147483648
    %v783 = vxor.u32 %v781, 2147483648
    %v784 = vmul.f32 %v782, 1.442695
    %v785 = vpow.pop %v784
    %v786 = vmul.f32 %v783, 1.442695
    %v787 = vpow.pop %v786
    %v788 = vadd.f32 %v785, 1.0
    %v789 = vadd.f32 %v787, 1.0
    %v790 = vrcp.pop %v788
    %v791 = vmul.f32 %v788, %v790
    %v792 = vsub.f32 1.0, %v791
    %v793 = vmul.f32 %v790, %v792
    %v794 = vadd.f32 %v790, %v793
    %vm795 = vweird.f32 %v788
    %vm796 = vweird.f32 %v790
    %vm797 = vmor %vm795, %vm796
    %v798 = vsel %vm797, %v790, %v794
    %v799 = vand.u32 2147483647, %v788
    %vm800 = vcmp.eq.f32.partialorder %v799, 8.507059e+37
    %v801 = vand.u32 %v788, 2147483648
    %v802 = vor.u32 1.1754944e-38, %v801
    %v803 = vsel %vm800, %v802, %v798
    %v804 = vmul.f32 1.0, %v803
    %v805 = vrcp.pop %v789
    %v806 = vmul.f32 %v789, %v805
    %v807 = vsub.f32 1.0, %v806
    %v808 = vmul.f32 %v805, %v807
    %v809 = vadd.f32 %v805, %v808
    %vm810 = vweird.f32 %v789
    %vm811 = vweird.f32 %v805
    %vm812 = vmor %vm810, %vm811
    %v813 = vsel %vm812, %v805, %v809
    %v814 = vand.u32 2147483647, %v789
    %vm815 = vcmp.eq.f32.partialorder %v814, 8.507059e+37
    %v816 = vand.u32 %v789, 2147483648
    %v817 = vor.u32 1.1754944e-38, %v816
    %v818 = vsel %vm815, %v817, %v813
    %v819 = vmul.f32 1.0, %v818
    %v820 = vtanh.pop %v781
    %v822 = vrot.slane %v724, 6
    %v824 = vmul.f32 %v804, %v822
    %826 = vrot.lane.b32.xlu0 %v820, 64
    %v827 = vpop.permute.xlu0 %826
    %v829 = vmul.f32 %v804, %v827
    %831 = vrot.lane.b32.xlu0 %v829, 64
    %v832 = vpop.permute.xlu0 %831
    %v834 = vadd.f32 %v824, %v832
    %v835 = vtanh.pop %v834
    %837 = vrot.lane.b32.xlu0 %v835, 64
    %v838 = vpop.permute.xlu0 %837
    %v840 = vmul.f32 %v819, %v838
    %v842 = vrot.slane %v840, 2
    %v843 = vsel %vm192, %v842, 0
    %845 = vmatpush.msra.mxu0 0.0
    %846 = vmatpush.msra.mxu0 0.0
    %847 = vmatpush.msra.mxu0 0.0
    %848 = vmatpush.msra.mxu0 0.0
    %849 = vmatpush.msra.mxu0 0.0
    %850 = vmatpush.msra.mxu0 0.0
    %851 = vmatpush.msra.mxu0 0.0
    %852 = vmatpush.msra.mxu0 0.0
    %853 = vmatpush.msra.mxu0 %v190
    %854 = vmatpush.msra.mxu0 %v188
    %855 = vmatpush.msra.mxu0 %v186
    %856 = vmatpush.msra.mxu0 %v184
    %857 = vmatpush.msra.mxu0 %v182
    %858 = vmatpush.msra.mxu0 %v180
    %859 = vmatpush.msra.mxu0 %v178
    %860 = vmatpush.msra.mxu0 %v176
    %861 = vmatmul.f32.gmra.mxu0 %v843
    %v862 = vpop.f32.mrf.mxu0
    %v863 = vadd.f32 0.0, %v862
    %864 = vdwg.mxu0
    %865 = vmatpush.msra.mxu0 0.0
    %866 = vmatpush.msra.mxu0 0.0
    %867 = vmatpush.msra.mxu0 0.0
    %868 = vmatpush.msra.mxu0 0.0
    %869 = vmatpush.msra.mxu0 0.0
    %870 = vmatpush.msra.mxu0 0.0
    %871 = vmatpush.msra.mxu0 0.0
    %872 = vmatpush.msra.mxu0 0.0
    %873 = vmatpush.msra.mxu0 %v191
    %874 = vmatpush.msra.mxu0 %v189
    %875 = vmatpush.msra.mxu0 %v187
    %876 = vmatpush.msra.mxu0 %v185
    %877 = vmatpush.msra.mxu0 %v183
    %878 = vmatpush.msra.mxu0 %v181
    %879 = vmatpush.msra.mxu0 %v179
    %880 = vmatpush.msra.mxu0 %v177
    %881 = vmatmul.f32.gmra.mxu0 %v843
    %v882 = vpop.f32.mrf.mxu0
    %v883 = vadd.f32 0.0, %v882
    %884 = vdwg.mxu0
    %v887 = vrot.slane %v863, 4
    %v888 = vrot.slane %v883, 4
    %v891 = vadd.f32 %v174, %v887
    %v892 = vadd.f32 %v175, %v888
    %v893 = vxor.u32 %v891, 2147483648
    %v894 = vxor.u32 %v892, 2147483648
    %v895 = vmul.f32 %v893, 1.442695
    %v896 = vpow.pop %v895
    %v897 = vmul.f32 %v894, 1.442695
    %v898 = vpow.pop %v897
    %v899 = vadd.f32 %v896, 1.0
    %v900 = vadd.f32 %v898, 1.0
    %v901 = vrcp.pop %v899
    %v902 = vmul.f32 %v899, %v901
    %v903 = vsub.f32 1.0, %v902
    %v904 = vmul.f32 %v901, %v903
    %v905 = vadd.f32 %v901, %v904
    %vm906 = vweird.f32 %v899
    %vm907 = vweird.f32 %v901
    %vm908 = vmor %vm906, %vm907
    %v909 = vsel %vm908, %v901, %v905
    %v910 = vand.u32 2147483647, %v899
    %vm911 = vcmp.eq.f32.partialorder %v910, 8.507059e+37
    %v912 = vand.u32 %v899, 2147483648
    %v913 = vor.u32 1.1754944e-38, %v912
    %v914 = vsel %vm911, %v913, %v909
    %v915 = vmul.f32 1.0, %v914
    %v916 = vrcp.pop %v900
    %v917 = vmul.f32 %v900, %v916
    %v918 = vsub.f32 1.0, %v917
    %v919 = vmul.f32 %v916, %v918
    %v920 = vadd.f32 %v916, %v919
    %vm921 = vweird.f32 %v900
    %vm922 = vweird.f32 %v916
    %vm923 = vmor %vm921, %vm922
    %v924 = vsel %vm923, %v916, %v920
    %v925 = vand.u32 2147483647, %v900
    %vm926 = vcmp.eq.f32.partialorder %v925, 8.507059e+37
    %v927 = vand.u32 %v900, 2147483648
    %v928 = vor.u32 1.1754944e-38, %v927
    %v929 = vsel %vm926, %v928, %v924
    %v930 = vmul.f32 1.0, %v929
    %v931 = vtanh.pop %v892
    %v933 = vrot.slane %v834, 6
    %v935 = vmul.f32 %v915, %v933
    %937 = vrot.lane.b32.xlu0 %v931, 64
    %v938 = vpop.permute.xlu0 %937
    %v940 = vmul.f32 %v915, %v938
    %942 = vrot.lane.b32.xlu0 %v940, 64
    %v943 = vpop.permute.xlu0 %942
    %v945 = vadd.f32 %v935, %v943
    %v946 = vtanh.pop %v945
    %948 = vrot.lane.b32.xlu0 %v946, 64
    %v949 = vpop.permute.xlu0 %948
    %v951 = vmul.f32 %v930, %v949
    %v953 = vrot.slane %v951, 4
    %v954 = vsel %vm192, %v953, 0
    %956 = vmatpush.msra.mxu0 0.0
    %957 = vmatpush.msra.mxu0 0.0
    %958 = vmatpush.msra.mxu0 0.0
    %959 = vmatpush.msra.mxu0 0.0
    %960 = vmatpush.msra.mxu0 0.0
    %961 = vmatpush.msra.mxu0 0.0
    %962 = vmatpush.msra.mxu0 0.0
    %963 = vmatpush.msra.mxu0 0.0
    %964 = vmatpush.msra.mxu0 %v190
    %965 = vmatpush.msra.mxu0 %v188
    %966 = vmatpush.msra.mxu0 %v186
    %967 = vmatpush.msra.mxu0 %v184
    %968 = vmatpush.msra.mxu0 %v182
    %969 = vmatpush.msra.mxu0 %v180
    %970 = vmatpush.msra.mxu0 %v178
    %971 = vmatpush.msra.mxu0 %v176
    %972 = vmatmul.f32.gmra.mxu0 %v954
    %v973 = vpop.f32.mrf.mxu0
    %v974 = vadd.f32 0.0, %v973
    %975 = vdwg.mxu0
    %976 = vmatpush.msra.mxu0 0.0
    %977 = vmatpush.msra.mxu0 0.0
    %978 = vmatpush.msra.mxu0 0.0
    %979 = vmatpush.msra.mxu0 0.0
    %980 = vmatpush.msra.mxu0 0.0
    %981 = vmatpush.msra.mxu0 0.0
    %982 = vmatpush.msra.mxu0 0.0
    %983 = vmatpush.msra.mxu0 0.0
    %984 = vmatpush.msra.mxu0 %v191
    %985 = vmatpush.msra.mxu0 %v189
    %986 = vmatpush.msra.mxu0 %v187
    %987 = vmatpush.msra.mxu0 %v185
    %988 = vmatpush.msra.mxu0 %v183
    %989 = vmatpush.msra.mxu0 %v181
    %990 = vmatpush.msra.mxu0 %v179
    %991 = vmatpush.msra.mxu0 %v177
    %992 = vmatmul.f32.gmra.mxu0 %v954
    %v993 = vpop.f32.mrf.mxu0
    %v994 = vadd.f32 0.0, %v993
    %995 = vdwg.mxu0
    %v998 = vrot.slane %v974, 2
    %v999 = vrot.slane %v994, 2
    %v1002 = vadd.f32 %v174, %v998
    %v1003 = vadd.f32 %v175, %v999
    %v1004 = vxor.u32 %v1002, 2147483648
    %v1005 = vxor.u32 %v1003, 2147483648
    %v1006 = vmul.f32 %v1004, 1.442695
    %v1007 = vpow.pop %v1006
    %v1008 = vmul.f32 %v1005, 1.442695
    %v1009 = vpow.pop %v1008
    %v1010 = vadd.f32 %v1007, 1.0
    %v1011 = vadd.f32 %v1009, 1.0
    %v1012 = vrcp.pop %v1010
    %v1013 = vmul.f32 %v1010, %v1012
    %v1014 = vsub.f32 1.0, %v1013
    %v1015 = vmul.f32 %v1012, %v1014
    %v1016 = vadd.f32 %v1012, %v1015
    %vm1017 = vweird.f32 %v1010
    %vm1018 = vweird.f32 %v1012
    %vm1019 = vmor %vm1017, %vm1018
    %v1020 = vsel %vm1019, %v1012, %v1016
    %v1021 = vand.u32 2147483647, %v1010
    %vm1022 = vcmp.eq.f32.partialorder %v1021, 8.507059e+37
    %v1023 = vand.u32 %v1010, 2147483648
    %v1024 = vor.u32 1.1754944e-38, %v1023
    %v1025 = vsel %vm1022, %v1024, %v1020
    %v1026 = vmul.f32 1.0, %v1025
    %v1027 = vrcp.pop %v1011
    %v1028 = vmul.f32 %v1011, %v1027
    %v1029 = vsub.f32 1.0, %v1028
    %v1030 = vmul.f32 %v1027, %v1029
    %v1031 = vadd.f32 %v1027, %v1030
    %vm1032 = vweird.f32 %v1011
    %vm1033 = vweird.f32 %v1027
    %vm1034 = vmor %vm1032, %vm1033
    %v1035 = vsel %vm1034, %v1027, %v1031
    %v1036 = vand.u32 2147483647, %v1011
    %vm1037 = vcmp.eq.f32.partialorder %v1036, 8.507059e+37
    %v1038 = vand.u32 %v1011, 2147483648
    %v1039 = vor.u32 1.1754944e-38, %v1038
    %v1040 = vsel %vm1037, %v1039, %v1035
    %v1041 = vmul.f32 1.0, %v1040
    %v1042 = vtanh.pop %v1003
    %v1044 = vrot.slane %v945, 6
    %v1046 = vmul.f32 %v1026, %v1044
    %1048 = vrot.lane.b32.xlu0 %v1042, 64
    %v1049 = vpop.permute.xlu0 %1048
    %v1051 = vmul.f32 %v1026, %v1049
    %1053 = vrot.lane.b32.xlu0 %v1051, 64
    %v1054 = vpop.permute.xlu0 %1053
    %v1056 = vadd.f32 %v1046, %v1054
    %v1057 = vtanh.pop %v1056
    %1059 = vrot.lane.b32.xlu0 %v1057, 64
    %v1060 = vpop.permute.xlu0 %1059
    %v1062 = vmul.f32 %v1041, %v1060
    %vm1063 = vcmask 1041408
    %v1064 = vsel %vm1063, %v293, %v403
    %vm1065 = vcmask 1043456
    %v1066 = vsel %vm1065, %v1064, %v514
    %vm1067 = vcmask 1045504
    %v1068 = vsel %vm1067, %v1066, %v625
    %v1069 = vsel %vm1063, %v730, %v840
    %v1070 = vsel %vm1065, %v1069, %v951
    %v1071 = vsel %vm1067, %v1070, %v1062
    %v1072 = vld [vmem:[%s4] sm:$0xff]
    %v1073 = vld [vmem:[%s4 + $0x8] sm:$0xff]
    %v1074 = vld [vmem:[%s4 + $0x10] sm:$0xff]
    %v1075 = vld [vmem:[%s4 + $0x18] sm:$0xff]
    %v1076 = vld [vmem:[%s4 + $0x20] sm:$0xff]
    %v1077 = vld [vmem:[%s4 + $0x28] sm:$0xff]
    %v1078 = vld [vmem:[%s4 + $0x30] sm:$0xff]
    %v1079 = vld [vmem:[%s4 + $0x38] sm:$0xff]
    %v1080 = vld [vmem:[%s6] sm:$0x1]
    %v1082 = vperm.slane %v1080, 0
    %v1085 = vsel %vm192, %v1068, 0
    %v1088 = vsel %vm192, %v1071, 0
    %1090 = vmatpush.msra.mxu0 0.0
    %1091 = vmatpush.msra.mxu0 0.0
    %1092 = vmatpush.msra.mxu0 0.0
    %1093 = vmatpush.msra.mxu0 0.0
    %1094 = vmatpush.msra.mxu0 0.0
    %1095 = vmatpush.msra.mxu0 0.0
    %1096 = vmatpush.msra.mxu0 0.0
    %1097 = vmatpush.msra.mxu0 0.0
    %1098 = vmatpush.msra.mxu0 %v1079
    %1099 = vmatpush.msra.mxu0 %v1078
    %1100 = vmatpush.msra.mxu0 %v1077
    %1101 = vmatpush.msra.mxu0 %v1076
    %1102 = vmatpush.msra.mxu0 %v1075
    %1103 = vmatpush.msra.mxu0 %v1074
    %1104 = vmatpush.msra.mxu0 %v1073
    %1105 = vmatpush.msra.mxu0 %v1072
    %1106 = vmatmul.f32.gmra.mxu0 %v1085
    %v1107 = vpop.f32.mrf.mxu0
    %v1108 = vadd.f32 %v1082, %v1107
    %1109 = vmatmul.f32.gmra.mxu0 %v1088
    %v1110 = vpop.f32.mrf.mxu0
    %v1111 = vadd.f32 %v1082, %v1110
    %1112 = vdwg.mxu0
    %v1113 = vld [vmem:[%s5] sm:$0xff]
    %v1114 = vld [vmem:[%s5 + $0x8] sm:$0xff]
    %v1115 = vld [vmem:[%s5 + $0x10] sm:$0xff]
    %v1116 = vld [vmem:[%s5 + $0x18] sm:$0xff]
    %vm1117 = vcmask 261120
    %v1118 = vsel %vm1117, 0.0, 0
    %1120 = vmatpush.msra.mxu0 0.0
    %1121 = vmatpush.msra.mxu0 0.0
    %1122 = vmatpush.msra.mxu0 0.0
    %1123 = vmatpush.msra.mxu0 0.0
    %1124 = vmatpush.msra.mxu0 0.0
    %1125 = vmatpush.msra.mxu0 0.0
    %1126 = vmatpush.msra.mxu0 0.0
    %1127 = vmatpush.msra.mxu0 0.0
    %1128 = vmatpush.msra.mxu0 0.0
    %1129 = vmatpush.msra.mxu0 0.0
    %1130 = vmatpush.msra.mxu0 0.0
    %1131 = vmatpush.msra.mxu0 0.0
    %1132 = vmatpush.msra.mxu0 %v1116
    %1133 = vmatpush.msra.mxu0 %v1115
    %1134 = vmatpush.msra.mxu0 %v1114
    %1135 = vmatpush.msra.mxu0 %v1113
    %1136 = vmatmul.f32.gmra.mxu0 %v1118
    %v1137 = vpop.f32.mrf.mxu0
    %v1138 = vadd.f32 0.0, %v1137
    %1139 = vdwg.mxu0
    %v1140 = vadd.f32 %v1108, %v1138
    %v1141 = vxor.u32 %v1140, 2147483648
    %v1142 = vmul.f32 %v1141, 1.442695
    %v1143 = vpow.pop %v1142
    %v1144 = vadd.f32 %v1143, 1.0
    %v1145 = vrcp.pop %v1144
    %v1146 = vmul.f32 %v1144, %v1145
    %v1147 = vsub.f32 1.0, %v1146
    %v1148 = vmul.f32 %v1145, %v1147
    %v1149 = vadd.f32 %v1145, %v1148
    %vm1150 = vweird.f32 %v1144
    %vm1151 = vweird.f32 %v1145
    %vm1152 = vmor %vm1150, %vm1151
    %v1153 = vsel %vm1152, %v1145, %v1149
    %v1154 = vand.u32 2147483647, %v1144
    %vm1155 = vcmp.eq.f32.partialorder %v1154, 8.507059e+37
    %v1156 = vand.u32 %v1144, 2147483648
    %v1157 = vor.u32 1.1754944e-38, %v1156
    %v1158 = vsel %vm1155, %v1157, %v1153
    %v1159 = vmul.f32 1.0, %v1158
    %v1160 = vtanh.pop %v1140
    %v1161 = vmul.f32 %v1159, 0.0
    %1163 = vrot.lane.b32.xlu0 %v1160, 32
    %v1164 = vpop.permute.xlu0 %1163
    %v1166 = vmul.f32 %v1159, %v1164
    %1168 = vrot.lane.b32.xlu0 %v1166, 32
    %v1169 = vpop.permute.xlu0 %1168
    %v1171 = vadd.f32 %v1161, %v1169
    %v1172 = vtanh.pop %v1171
    %1174 = vrot.lane.b32.xlu0 %v1172, 32
    %v1175 = vpop.permute.xlu0 %1174
    %v1177 = vmul.f32 %v1159, %v1175
    %1179 = vrot.lane.b32.xlu0 %v1177, 64
    %v1180 = vpop.permute.xlu0 %1179
    %v1181 = vsel %vm1117, %v1180, 0
    %1183 = vmatpush.msra.mxu0 0.0
    %1184 = vmatpush.msra.mxu0 0.0
    %1185 = vmatpush.msra.mxu0 0.0
    %1186 = vmatpush.msra.mxu0 0.0
    %1187 = vmatpush.msra.mxu0 0.0
    %1188 = vmatpush.msra.mxu0 0.0
    %1189 = vmatpush.msra.mxu0 0.0
    %1190 = vmatpush.msra.mxu0 0.0
    %1191 = vmatpush.msra.mxu0 0.0
    %1192 = vmatpush.msra.mxu0 0.0
    %1193 = vmatpush.msra.mxu0 0.0
    %1194 = vmatpush.msra.mxu0 0.0
    %1195 = vmatpush.msra.mxu0 %v1116
    %1196 = vmatpush.msra.mxu0 %v1115
    %1197 = vmatpush.msra.mxu0 %v1114
    %1198 = vmatpush.msra.mxu0 %v1113
    %1199 = vmatmul.f32.gmra.mxu0 %v1181
    %v1200 = vpop.f32.mrf.mxu0
    %v1201 = vadd.f32 0.0, %v1200
    %1202 = vdwg.mxu0
    %v1204 = vrot.slane %v1201, 6
    %v1206 = vadd.f32 %v1108, %v1204
    %v1207 = vxor.u32 %v1206, 2147483648
    %v1208 = vmul.f32 %v1207, 1.442695
    %v1209 = vpow.pop %v1208
    %v1210 = vadd.f32 %v1209, 1.0
    %v1211 = vrcp.pop %v1210
    %v1212 = vmul.f32 %v1210, %v1211
    %v1213 = vsub.f32 1.0, %v1212
    %v1214 = vmul.f32 %v1211, %v1213
    %v1215 = vadd.f32 %v1211, %v1214
    %vm1216 = vweird.f32 %v1210
    %vm1217 = vweird.f32 %v1211
    %vm1218 = vmor %vm1216, %vm1217
    %v1219 = vsel %vm1218, %v1211, %v1215
    %v1220 = vand.u32 2147483647, %v1210
    %vm1221 = vcmp.eq.f32.partialorder %v1220, 8.507059e+37
    %v1222 = vand.u32 %v1210, 2147483648
    %v1223 = vor.u32 1.1754944e-38, %v1222
    %v1224 = vsel %vm1221, %v1223, %v1219
    %v1225 = vmul.f32 1.0, %v1224
    %v1226 = vtanh.pop %v1206
    %v1228 = vrot.slane %v1171, 6
    %v1230 = vmul.f32 %v1225, %v1228
    %1232 = vrot.lane.b32.xlu0 %v1226, 32
    %v1233 = vpop.permute.xlu0 %1232
    %v1235 = vmul.f32 %v1225, %v1233
    %1237 = vrot.lane.b32.xlu0 %v1235, 32
    %v1238 = vpop.permute.xlu0 %1237
    %v1240 = vadd.f32 %v1230, %v1238
    %v1241 = vtanh.pop %v1240
    %1243 = vrot.lane.b32.xlu0 %v1241, 32
    %v1244 = vpop.permute.xlu0 %1243
    %v1246 = vmul.f32 %v1225, %v1244
    %v1248 = vrot.slane %v1246, 2
    %1249 = vrot.lane.b32.xlu0 %v1248, 64
    %v1250 = vpop.permute.xlu0 %1249
    %v1251 = vsel %vm1117, %v1250, 0
    %1253 = vmatpush.msra.mxu0 0.0
    %1254 = vmatpush.msra.mxu0 0.0
    %1255 = vmatpush.msra.mxu0 0.0
    %1256 = vmatpush.msra.mxu0 0.0
    %1257 = vmatpush.msra.mxu0 0.0
    %1258 = vmatpush.msra.mxu0 0.0
    %1259 = vmatpush.msra.mxu0 0.0
    %1260 = vmatpush.msra.mxu0 0.0
    %1261 = vmatpush.msra.mxu0 0.0
    %1262 = vmatpush.msra.mxu0 0.0
    %1263 = vmatpush.msra.mxu0 0.0
    %1264 = vmatpush.msra.mxu0 0.0
    %1265 = vmatpush.msra.mxu0 %v1116
    %1266 = vmatpush.msra.mxu0 %v1115
    %1267 = vmatpush.msra.mxu0 %v1114
    %1268 = vmatpush.msra.mxu0 %v1113
    %1269 = vmatmul.f32.gmra.mxu0 %v1251
    %v1270 = vpop.f32.mrf.mxu0
    %v1271 = vadd.f32 0.0, %v1270
    %1272 = vdwg.mxu0
    %v1274 = vrot.slane %v1271, 4
    %v1276 = vadd.f32 %v1108, %v1274
    %v1277 = vxor.u32 %v1276, 2147483648
    %v1278 = vmul.f32 %v1277, 1.442695
    %v1279 = vpow.pop %v1278
    %v1280 = vadd.f32 %v1279, 1.0
    %v1281 = vrcp.pop %v1280
    %v1282 = vmul.f32 %v1280, %v1281
    %v1283 = vsub.f32 1.0, %v1282
    %v1284 = vmul.f32 %v1281, %v1283
    %v1285 = vadd.f32 %v1281, %v1284
    %vm1286 = vweird.f32 %v1280
    %vm1287 = vweird.f32 %v1281
    %vm1288 = vmor %vm1286, %vm1287
    %v1289 = vsel %vm1288, %v1281, %v1285
    %v1290 = vand.u32 2147483647, %v1280
    %vm1291 = vcmp.eq.f32.partialorder %v1290, 8.507059e+37
    %v1292 = vand.u32 %v1280, 2147483648
    %v1293 = vor.u32 1.1754944e-38, %v1292
    %v1294 = vsel %vm1291, %v1293, %v1289
    %v1295 = vmul.f32 1.0, %v1294
    %v1296 = vtanh.pop %v1276
    %v1298 = vrot.slane %v1240, 6
    %v1300 = vmul.f32 %v1295, %v1298
    %1302 = vrot.lane.b32.xlu0 %v1296, 32
    %v1303 = vpop.permute.xlu0 %1302
    %v1305 = vmul.f32 %v1295, %v1303
    %1307 = vrot.lane.b32.xlu0 %v1305, 32
    %v1308 = vpop.permute.xlu0 %1307
    %v1310 = vadd.f32 %v1300, %v1308
    %v1311 = vtanh.pop %v1310
    %1313 = vrot.lane.b32.xlu0 %v1311, 32
    %v1314 = vpop.permute.xlu0 %1313
    %v1316 = vmul.f32 %v1295, %v1314
    %v1318 = vrot.slane %v1316, 4
    %1319 = vrot.lane.b32.xlu0 %v1318, 64
    %v1320 = vpop.permute.xlu0 %1319
    %v1321 = vsel %vm1117, %v1320, 0
    %1323 = vmatpush.msra.mxu0 0.0
    %1324 = vmatpush.msra.mxu0 0.0
    %1325 = vmatpush.msra.mxu0 0.0
    %1326 = vmatpush.msra.mxu0 0.0
    %1327 = vmatpush.msra.mxu0 0.0
    %1328 = vmatpush.msra.mxu0 0.0
    %1329 = vmatpush.msra.mxu0 0.0
    %1330 = vmatpush.msra.mxu0 0.0
    %1331 = vmatpush.msra.mxu0 0.0
    %1332 = vmatpush.msra.mxu0 0.0
    %1333 = vmatpush.msra.mxu0 0.0
    %1334 = vmatpush.msra.mxu0 0.0
    %1335 = vmatpush.msra.mxu0 %v1116
    %1336 = vmatpush.msra.mxu0 %v1115
    %1337 = vmatpush.msra.mxu0 %v1114
    %1338 = vmatpush.msra.mxu0 %v1113
    %1339 = vmatmul.f32.gmra.mxu0 %v1321
    %v1340 = vpop.f32.mrf.mxu0
    %v1341 = vadd.f32 0.0, %v1340
    %1342 = vdwg.mxu0
    %v1344 = vrot.slane %v1341, 2
    %v1346 = vadd.f32 %v1108, %v1344
    %v1347 = vxor.u32 %v1346, 2147483648
    %v1348 = vmul.f32 %v1347, 1.442695
    %v1349 = vpow.pop %v1348
    %v1350 = vadd.f32 %v1349, 1.0
    %v1351 = vrcp.pop %v1350
    %v1352 = vmul.f32 %v1350, %v1351
    %v1353 = vsub.f32 1.0, %v1352
    %v1354 = vmul.f32 %v1351, %v1353
    %v1355 = vadd.f32 %v1351, %v1354
    %vm1356 = vweird.f32 %v1350
    %vm1357 = vweird.f32 %v1351
    %vm1358 = vmor %vm1356, %vm1357
    %v1359 = vsel %vm1358, %v1351, %v1355
    %v1360 = vand.u32 2147483647, %v1350
    %vm1361 = vcmp.eq.f32.partialorder %v1360, 8.507059e+37
    %v1362 = vand.u32 %v1350, 2147483648
    %v1363 = vor.u32 1.1754944e-38, %v1362
    %v1364 = vsel %vm1361, %v1363, %v1359
    %v1365 = vmul.f32 1.0, %v1364
    %v1366 = vtanh.pop %v1346
    %v1368 = vrot.slane %v1310, 6
    %v1370 = vmul.f32 %v1365, %v1368
    %1372 = vrot.lane.b32.xlu0 %v1366, 32
    %v1373 = vpop.permute.xlu0 %1372
    %v1375 = vmul.f32 %v1365, %v1373
    %1377 = vrot.lane.b32.xlu0 %v1375, 32
    %v1378 = vpop.permute.xlu0 %1377
    %v1380 = vadd.f32 %v1370, %v1378
    %v1381 = vtanh.pop %v1380
    %1383 = vrot.lane.b32.xlu0 %v1381, 32
    %v1384 = vpop.permute.xlu0 %1383
    %v1386 = vmul.f32 %v1365, %v1384
    %v1388 = vrot.slane %v1386, 6
    %1389 = vrot.lane.b32.xlu0 %v1388, 64
    %v1390 = vpop.permute.xlu0 %1389
    %v1391 = vsel %vm1117, %v1390, 0
    %1393 = vmatpush.msra.mxu0 0.0
    %1394 = vmatpush.msra.mxu0 0.0
    %1395 = vmatpush.msra.mxu0 0.0
    %1396 = vmatpush.msra.mxu0 0.0
    %1397 = vmatpush.msra.mxu0 0.0
    %1398 = vmatpush.msra.mxu0 0.0
    %1399 = vmatpush.msra.mxu0 0.0
    %1400 = vmatpush.msra.mxu0 0.0
    %1401 = vmatpush.msra.mxu0 0.0
    %1402 = vmatpush.msra.mxu0 0.0
    %1403 = vmatpush.msra.mxu0 0.0
    %1404 = vmatpush.msra.mxu0 0.0
    %1405 = vmatpush.msra.mxu0 %v1116
    %1406 = vmatpush.msra.mxu0 %v1115
    %1407 = vmatpush.msra.mxu0 %v1114
    %1408 = vmatpush.msra.mxu0 %v1113
    %1409 = vmatmul.f32.gmra.mxu0 %v1391
    %v1410 = vpop.f32.mrf.mxu0
    %v1411 = vadd.f32 0.0, %v1410
    %1412 = vdwg.mxu0
    %v1413 = vadd.f32 %v1111, %v1411
    %v1414 = vxor.u32 %v1413, 2147483648
    %v1415 = vmul.f32 %v1414, 1.442695
    %v1416 = vpow.pop %v1415
    %v1417 = vadd.f32 %v1416, 1.0
    %v1418 = vrcp.pop %v1417
    %v1419 = vmul.f32 %v1417, %v1418
    %v1420 = vsub.f32 1.0, %v1419
    %v1421 = vmul.f32 %v1418, %v1420
    %v1422 = vadd.f32 %v1418, %v1421
    %vm1423 = vweird.f32 %v1417
    %vm1424 = vweird.f32 %v1418
    %vm1425 = vmor %vm1423, %vm1424
    %v1426 = vsel %vm1425, %v1418, %v1422
    %v1427 = vand.u32 2147483647, %v1417
    %vm1428 = vcmp.eq.f32.partialorder %v1427, 8.507059e+37
    %v1429 = vand.u32 %v1417, 2147483648
    %v1430 = vor.u32 1.1754944e-38, %v1429
    %v1431 = vsel %vm1428, %v1430, %v1426
    %v1432 = vmul.f32 1.0, %v1431
    %v1433 = vtanh.pop %v1413
    %v1435 = vrot.slane %v1380, 6
    %v1437 = vmul.f32 %v1432, %v1435
    %1439 = vrot.lane.b32.xlu0 %v1433, 32
    %v1440 = vpop.permute.xlu0 %1439
    %v1442 = vmul.f32 %v1432, %v1440
    %1444 = vrot.lane.b32.xlu0 %v1442, 32
    %v1445 = vpop.permute.xlu0 %1444
    %v1447 = vadd.f32 %v1437, %v1445
    %v1448 = vtanh.pop %v1447
    %1450 = vrot.lane.b32.xlu0 %v1448, 32
    %v1451 = vpop.permute.xlu0 %1450
    %v1453 = vmul.f32 %v1432, %v1451
    %1455 = vrot.lane.b32.xlu0 %v1453, 64
    %v1456 = vpop.permute.xlu0 %1455
    %v1457 = vsel %vm1117, %v1456, 0
    %1459 = vmatpush.msra.mxu0 0.0
    %1460 = vmatpush.msra.mxu0 0.0
    %1461 = vmatpush.msra.mxu0 0.0
    %1462 = vmatpush.msra.mxu0 0.0
    %1463 = vmatpush.msra.mxu0 0.0
    %1464 = vmatpush.msra.mxu0 0.0
    %1465 = vmatpush.msra.mxu0 0.0
    %1466 = vmatpush.msra.mxu0 0.0
    %1467 = vmatpush.msra.mxu0 0.0
    %1468 = vmatpush.msra.mxu0 0.0
    %1469 = vmatpush.msra.mxu0 0.0
    %1470 = vmatpush.msra.mxu0 0.0
    %1471 = vmatpush.msra.mxu0 %v1116
    %1472 = vmatpush.msra.mxu0 %v1115
    %1473 = vmatpush.msra.mxu0 %v1114
    %1474 = vmatpush.msra.mxu0 %v1113
    %1475 = vmatmul.f32.gmra.mxu0 %v1457
    %v1476 = vpop.f32.mrf.mxu0
    %v1477 = vadd.f32 0.0, %v1476
    %1478 = vdwg.mxu0
    %v1480 = vrot.slane %v1477, 6
    %v1482 = vadd.f32 %v1111, %v1480
    %v1483 = vxor.u32 %v1482, 2147483648
    %v1484 = vmul.f32 %v1483, 1.442695
    %v1485 = vpow.pop %v1484
    %v1486 = vadd.f32 %v1485, 1.0
    %v1487 = vrcp.pop %v1486
    %v1488 = vmul.f32 %v1486, %v1487
    %v1489 = vsub.f32 1.0, %v1488
    %v1490 = vmul.f32 %v1487, %v1489
    %v1491 = vadd.f32 %v1487, %v1490
    %vm1492 = vweird.f32 %v1486
    %vm1493 = vweird.f32 %v1487
    %vm1494 = vmor %vm1492, %vm1493
    %v1495 = vsel %vm1494, %v1487, %v1491
    %v1496 = vand.u32 2147483647, %v1486
    %vm1497 = vcmp.eq.f32.partialorder %v1496, 8.507059e+37
    %v1498 = vand.u32 %v1486, 2147483648
    %v1499 = vor.u32 1.1754944e-38, %v1498
    %v1500 = vsel %vm1497, %v1499, %v1495
    %v1501 = vmul.f32 1.0, %v1500
    %v1502 = vtanh.pop %v1482
    %v1504 = vrot.slane %v1447, 6
    %v1506 = vmul.f32 %v1501, %v1504
    %1508 = vrot.lane.b32.xlu0 %v1502, 32
    %v1509 = vpop.permute.xlu0 %1508
    %v1511 = vmul.f32 %v1501, %v1509
    %1513 = vrot.lane.b32.xlu0 %v1511, 32
    %v1514 = vpop.permute.xlu0 %1513
    %v1516 = vadd.f32 %v1506, %v1514
    %v1517 = vtanh.pop %v1516
    %1519 = vrot.lane.b32.xlu0 %v1517, 32
    %v1520 = vpop.permute.xlu0 %1519
    %v1522 = vmul.f32 %v1501, %v1520
    %v1524 = vrot.slane %v1522, 2
    %1525 = vrot.lane.b32.xlu0 %v1524, 64
    %v1526 = vpop.permute.xlu0 %1525
    %v1527 = vsel %vm1117, %v1526, 0
    %1529 = vmatpush.msra.mxu0 0.0
    %1530 = vmatpush.msra.mxu0 0.0
    %1531 = vmatpush.msra.mxu0 0.0
    %1532 = vmatpush.msra.mxu0 0.0
    %1533 = vmatpush.msra.mxu0 0.0
    %1534 = vmatpush.msra.mxu0 0.0
    %1535 = vmatpush.msra.mxu0 0.0
    %1536 = vmatpush.msra.mxu0 0.0
    %1537 = vmatpush.msra.mxu0 0.0
    %1538 = vmatpush.msra.mxu0 0.0
    %1539 = vmatpush.msra.mxu0 0.0
    %1540 = vmatpush.msra.mxu0 0.0
    %1541 = vmatpush.msra.mxu0 %v1116
    %1542 = vmatpush.msra.mxu0 %v1115
    %1543 = vmatpush.msra.mxu0 %v1114
    %1544 = vmatpush.msra.mxu0 %v1113
    %1545 = vmatmul.f32.gmra.mxu0 %v1527
    %v1546 = vpop.f32.mrf.mxu0
    %v1547 = vadd.f32 0.0, %v1546
    %1548 = vdwg.mxu0
    %v1550 = vrot.slane %v1547, 4
    %v1552 = vadd.f32 %v1111, %v1550
    %v1553 = vxor.u32 %v1552, 2147483648
    %v1554 = vmul.f32 %v1553, 1.442695
    %v1555 = vpow.pop %v1554
    %v1556 = vadd.f32 %v1555, 1.0
    %v1557 = vrcp.pop %v1556
    %v1558 = vmul.f32 %v1556, %v1557
    %v1559 = vsub.f32 1.0, %v1558
    %v1560 = vmul.f32 %v1557, %v1559
    %v1561 = vadd.f32 %v1557, %v1560
    %vm1562 = vweird.f32 %v1556
    %vm1563 = vweird.f32 %v1557
    %vm1564 = vmor %vm1562, %vm1563
    %v1565 = vsel %vm1564, %v1557, %v1561
    %v1566 = vand.u32 2147483647, %v1556
    %vm1567 = vcmp.eq.f32.partialorder %v1566, 8.507059e+37
    %v1568 = vand.u32 %v1556, 2147483648
    %v1569 = vor.u32 1.1754944e-38, %v1568
    %v1570 = vsel %vm1567, %v1569, %v1565
    %v1571 = vmul.f32 1.0, %v1570
    %v1572 = vtanh.pop %v1552
    %v1574 = vrot.slane %v1516, 6
    %v1576 = vmul.f32 %v1571, %v1574
    %1578 = vrot.lane.b32.xlu0 %v1572, 32
    %v1579 = vpop.permute.xlu0 %1578
    %v1581 = vmul.f32 %v1571, %v1579
    %1583 = vrot.lane.b32.xlu0 %v1581, 32
    %v1584 = vpop.permute.xlu0 %1583
    %v1586 = vadd.f32 %v1576, %v1584
    %v1587 = vtanh.pop %v1586
    %1589 = vrot.lane.b32.xlu0 %v1587, 32
    %v1590 = vpop.permute.xlu0 %1589
    %v1592 = vmul.f32 %v1571, %v1590
    %v1594 = vrot.slane %v1592, 4
    %1595 = vrot.lane.b32.xlu0 %v1594, 64
    %v1596 = vpop.permute.xlu0 %1595
    %v1597 = vsel %vm1117, %v1596, 0
    %1599 = vmatpush.msra.mxu0 0.0
    %1600 = vmatpush.msra.mxu0 0.0
    %1601 = vmatpush.msra.mxu0 0.0
    %1602 = vmatpush.msra.mxu0 0.0
    %1603 = vmatpush.msra.mxu0 0.0
    %1604 = vmatpush.msra.mxu0 0.0
    %1605 = vmatpush.msra.mxu0 0.0
    %1606 = vmatpush.msra.mxu0 0.0
    %1607 = vmatpush.msra.mxu0 0.0
    %1608 = vmatpush.msra.mxu0 0.0
    %1609 = vmatpush.msra.mxu0 0.0
    %1610 = vmatpush.msra.mxu0 0.0
    %1611 = vmatpush.msra.mxu0 %v1116
    %1612 = vmatpush.msra.mxu0 %v1115
    %1613 = vmatpush.msra.mxu0 %v1114
    %1614 = vmatpush.msra.mxu0 %v1113
    %1615 = vmatmul.f32.gmra.mxu0 %v1597
    %v1616 = vpop.f32.mrf.mxu0
    %v1617 = vadd.f32 0.0, %v1616
    %1618 = vdwg.mxu0
    %v1620 = vrot.slane %v1617, 2
    %v1622 = vadd.f32 %v1111, %v1620
    %v1623 = vxor.u32 %v1622, 2147483648
    %v1624 = vmul.f32 %v1623, 1.442695
    %v1625 = vpow.pop %v1624
    %v1626 = vadd.f32 %v1625, 1.0
    %v1627 = vrcp.pop %v1626
    %v1628 = vmul.f32 %v1626, %v1627
    %v1629 = vsub.f32 1.0, %v1628
    %v1630 = vmul.f32 %v1627, %v1629
    %v1631 = vadd.f32 %v1627, %v1630
    %vm1632 = vweird.f32 %v1626
    %vm1633 = vweird.f32 %v1627
    %vm1634 = vmor %vm1632, %vm1633
    %v1635 = vsel %vm1634, %v1627, %v1631
    %v1636 = vand.u32 2147483647, %v1626
    %vm1637 = vcmp.eq.f32.partialorder %v1636, 8.507059e+37
    %v1638 = vand.u32 %v1626, 2147483648
    %v1639 = vor.u32 1.1754944e-38, %v1638
    %v1640 = vsel %vm1637, %v1639, %v1635
    %v1641 = vmul.f32 1.0, %v1640
    %v1642 = vtanh.pop %v1622
    %v1644 = vrot.slane %v1586, 6
    %v1646 = vmul.f32 %v1641, %v1644
    %1648 = vrot.lane.b32.xlu0 %v1642, 32
    %v1649 = vpop.permute.xlu0 %1648
    %v1651 = vmul.f32 %v1641, %v1649
    %1653 = vrot.lane.b32.xlu0 %v1651, 32
    %v1654 = vpop.permute.xlu0 %1653
    %v1656 = vadd.f32 %v1646, %v1654
    %v1657 = vtanh.pop %v1656
    %1659 = vrot.lane.b32.xlu0 %v1657, 32
    %v1660 = vpop.permute.xlu0 %1659
    %v1662 = vmul.f32 %v1641, %v1660
    %v1663 = vld [vmem:[#allocation5] sm:$0xff]
    %v1664 = vld [vmem:[#allocation5 + $0x8] sm:$0xff]
    %v1665 = vld [vmem:[#allocation5 + $0x10] sm:$0xff]
    %v1666 = vld [vmem:[#allocation5 + $0x18] sm:$0xff]
    %v1667 = vld [vmem:[#allocation8] sm:$0x1]
    %v1669 = vperm.slane %v1667, 0
    %v1672 = vrot.slane %v1662, 6
    %1673 = vrot.lane.b32.xlu0 %v1672, 64
    %v1674 = vpop.permute.xlu0 %1673
    %v1675 = vsel %vm1117, %v1674, 0
    %1677 = vmatpush.msra.mxu0 0.0
    %1678 = vmatpush.msra.mxu0 0.0
    %1679 = vmatpush.msra.mxu0 0.0
    %1680 = vmatpush.msra.mxu0 0.0
    %1681 = vmatpush.msra.mxu0 0.0
    %1682 = vmatpush.msra.mxu0 0.0
    %1683 = vmatpush.msra.mxu0 0.0
    %1684 = vmatpush.msra.mxu0 0.0
    %1685 = vmatpush.msra.mxu0 0.0
    %1686 = vmatpush.msra.mxu0 0.0
    %1687 = vmatpush.msra.mxu0 0.0
    %1688 = vmatpush.msra.mxu0 0.0
    %1689 = vmatpush.msra.mxu0 %v1666
    %1690 = vmatpush.msra.mxu0 %v1665
    %1691 = vmatpush.msra.mxu0 %v1664
    %1692 = vmatpush.msra.mxu0 %v1663
    %1693 = vmatmul.f32.gmra.mxu0 %v1675
    %v1694 = vpop.f32.mrf.mxu0
    %v1695 = vadd.f32 %v1669, %v1694
    %1696 = vdwg.mxu0
    %v1697 = vld [vmem:[#allocation7] sm:$0xff]
    %v1698 = vld [vmem:[#allocation7 + $0x8] sm:$0xff]
    %v1699 = vld [vmem:[#allocation7 + $0x10] sm:$0xff]
    %v1700 = vld [vmem:[#allocation7 + $0x18] sm:$0xff]
    %1701 = vmatpush.msra.mxu0 0.0
    %1702 = vmatpush.msra.mxu0 0.0
    %1703 = vmatpush.msra.mxu0 0.0
    %1704 = vmatpush.msra.mxu0 0.0
    %1705 = vmatpush.msra.mxu0 0.0
    %1706 = vmatpush.msra.mxu0 0.0
    %1707 = vmatpush.msra.mxu0 0.0
    %1708 = vmatpush.msra.mxu0 0.0
    %1709 = vmatpush.msra.mxu0 0.0
    %1710 = vmatpush.msra.mxu0 0.0
    %1711 = vmatpush.msra.mxu0 0.0
    %1712 = vmatpush.msra.mxu0 0.0
    %1713 = vmatpush.msra.mxu0 %v1700
    %1714 = vmatpush.msra.mxu0 %v1699
    %1715 = vmatpush.msra.mxu0 %v1698
    %1716 = vmatpush.msra.mxu0 %v1697
    %1717 = vmatmul.f32.gmra.mxu0 %v1118
    %v1718 = vpop.f32.mrf.mxu0
    %v1719 = vadd.f32 0.0, %v1718
    %1720 = vdwg.mxu0
    %v1721 = vadd.f32 %v1695, %v1719
    %v1722 = vxor.u32 %v1721, 2147483648
    %v1723 = vmul.f32 %v1722, 1.442695
    %v1724 = vpow.pop %v1723
    %v1725 = vadd.f32 %v1724, 1.0
    %v1726 = vrcp.pop %v1725
    %v1727 = vmul.f32 %v1725, %v1726
    %v1728 = vsub.f32 1.0, %v1727
    %v1729 = vmul.f32 %v1726, %v1728
    %v1730 = vadd.f32 %v1726, %v1729
    %vm1731 = vweird.f32 %v1725
    %vm1732 = vweird.f32 %v1726
    %vm1733 = vmor %vm1731, %vm1732
    %v1734 = vsel %vm1733, %v1726, %v1730
    %v1735 = vand.u32 2147483647, %v1725
    %vm1736 = vcmp.eq.f32.partialorder %v1735, 8.507059e+37
    %v1737 = vand.u32 %v1725, 2147483648
    %v1738 = vor.u32 1.1754944e-38, %v1737
    %v1739 = vsel %vm1736, %v1738, %v1734
    %v1740 = vmul.f32 1.0, %v1739
    %v1741 = vtanh.pop %v1721
    %v1742 = vmul.f32 %v1740, 0.0
    %1744 = vrot.lane.b32.xlu0 %v1741, 32
    %v1745 = vpop.permute.xlu0 %1744
    %v1747 = vmul.f32 %v1740, %v1745
    %1749 = vrot.lane.b32.xlu0 %v1747, 32
    %v1750 = vpop.permute.xlu0 %1749
    %v1752 = vadd.f32 %v1742, %v1750
    %v1753 = vtanh.pop %v1752
    %1755 = vrot.lane.b32.xlu0 %v1753, 32
    %v1756 = vpop.permute.xlu0 %1755
    %v1758 = vmul.f32 %v1740, %v1756
    %1760 = vrot.lane.b32.xlu0 %v1758, 64
    %v1761 = vpop.permute.xlu0 %1760
    %v1762 = vsel %vm1117, %v1761, 0
    %1764 = vmatpush.msra.mxu0 0.0
    %1765 = vmatpush.msra.mxu0 0.0
    %1766 = vmatpush.msra.mxu0 0.0
    %1767 = vmatpush.msra.mxu0 0.0
    %1768 = vmatpush.msra.mxu0 0.0
    %1769 = vmatpush.msra.mxu0 0.0
    %1770 = vmatpush.msra.mxu0 0.0
    %1771 = vmatpush.msra.mxu0 0.0
    %1772 = vmatpush.msra.mxu0 0.0
    %1773 = vmatpush.msra.mxu0 0.0
    %1774 = vmatpush.msra.mxu0 0.0
    %1775 = vmatpush.msra.mxu0 0.0
    %1776 = vmatpush.msra.mxu0 %v1700
    %1777 = vmatpush.msra.mxu0 %v1699
    %1778 = vmatpush.msra.mxu0 %v1698
    %1779 = vmatpush.msra.mxu0 %v1697
    %1780 = vmatmul.f32.gmra.mxu0 %v1762
    %v1781 = vpop.f32.mrf.mxu0
    %v1782 = vadd.f32 0.0, %v1781
    %1783 = vdwg.mxu0
    %v1784 = vadd.f32 %v1695, %v1782
    %v1785 = vxor.u32 %v1784, 2147483648
    %v1786 = vmul.f32 %v1785, 1.442695
    %v1787 = vpow.pop %v1786
    %v1788 = vadd.f32 %v1787, 1.0
    %v1789 = vrcp.pop %v1788
    %v1790 = vmul.f32 %v1788, %v1789
    %v1791 = vsub.f32 1.0, %v1790
    %v1792 = vmul.f32 %v1789, %v1791
    %v1793 = vadd.f32 %v1789, %v1792
    %vm1794 = vweird.f32 %v1788
    %vm1795 = vweird.f32 %v1789
    %vm1796 = vmor %vm1794, %vm1795
    %v1797 = vsel %vm1796, %v1789, %v1793
    %v1798 = vand.u32 2147483647, %v1788
    %vm1799 = vcmp.eq.f32.partialorder %v1798, 8.507059e+37
    %v1800 = vand.u32 %v1788, 2147483648
    %v1801 = vor.u32 1.1754944e-38, %v1800
    %v1802 = vsel %vm1799, %v1801, %v1797
    %v1803 = vmul.f32 1.0, %v1802
    %v1804 = vtanh.pop %v1784
    %v1805 = vmul.f32 %v1803, %v1752
    %1807 = vrot.lane.b32.xlu0 %v1804, 32
    %v1808 = vpop.permute.xlu0 %1807
    %v1810 = vmul.f32 %v1803, %v1808
    %1812 = vrot.lane.b32.xlu0 %v1810, 32
    %v1813 = vpop.permute.xlu0 %1812
    %v1815 = vadd.f32 %v1805, %v1813
    %v1816 = vtanh.pop %v1815
    %1818 = vrot.lane.b32.xlu0 %v1816, 32
    %v1819 = vpop.permute.xlu0 %1818
    %v1821 = vmul.f32 %v1803, %v1819
    %1823 = vrot.lane.b32.xlu0 %v1821, 64
    %v1824 = vpop.permute.xlu0 %1823
    %v1825 = vsel %vm1117, %v1824, 0
    %1827 = vmatpush.msra.mxu0 0.0
    %1828 = vmatpush.msra.mxu0 0.0
    %1829 = vmatpush.msra.mxu0 0.0
    %1830 = vmatpush.msra.mxu0 0.0
    %1831 = vmatpush.msra.mxu0 0.0
    %1832 = vmatpush.msra.mxu0 0.0
    %1833 = vmatpush.msra.mxu0 0.0
    %1834 = vmatpush.msra.mxu0 0.0
    %1835 = vmatpush.msra.mxu0 0.0
    %1836 = vmatpush.msra.mxu0 0.0
    %1837 = vmatpush.msra.mxu0 0.0
    %1838 = vmatpush.msra.mxu0 0.0
    %1839 = vmatpush.msra.mxu0 %v1700
    %1840 = vmatpush.msra.mxu0 %v1699
    %1841 = vmatpush.msra.mxu0 %v1698
    %1842 = vmatpush.msra.mxu0 %v1697
    %1843 = vmatmul.f32.gmra.mxu0 %v1825
    %v1844 = vpop.f32.mrf.mxu0
    %v1845 = vadd.f32 0.0, %v1844
    %1846 = vdwg.mxu0
    %v1847 = vadd.f32 %v1695, %v1845
    %v1848 = vxor.u32 %v1847, 2147483648
    %v1849 = vmul.f32 %v1848, 1.442695
    %v1850 = vpow.pop %v1849
    %v1851 = vadd.f32 %v1850, 1.0
    %v1852 = vrcp.pop %v1851
    %v1853 = vmul.f32 %v1851, %v1852
    %v1854 = vsub.f32 1.0, %v1853
    %v1855 = vmul.f32 %v1852, %v1854
    %v1856 = vadd.f32 %v1852, %v1855
    %vm1857 = vweird.f32 %v1851
    %vm1858 = vweird.f32 %v1852
    %vm1859 = vmor %vm1857, %vm1858
    %v1860 = vsel %vm1859, %v1852, %v1856
    %v1861 = vand.u32 2147483647, %v1851
    %vm1862 = vcmp.eq.f32.partialorder %v1861, 8.507059e+37
    %v1863 = vand.u32 %v1851, 2147483648
    %v1864 = vor.u32 1.1754944e-38, %v1863
    %v1865 = vsel %vm1862, %v1864, %v1860
    %v1866 = vmul.f32 1.0, %v1865
    %v1867 = vtanh.pop %v1847
    %v1868 = vmul.f32 %v1866, %v1815
    %1870 = vrot.lane.b32.xlu0 %v1867, 32
    %v1871 = vpop.permute.xlu0 %1870
    %v1873 = vmul.f32 %v1866, %v1871
    %1875 = vrot.lane.b32.xlu0 %v1873, 32
    %v1876 = vpop.permute.xlu0 %1875
    %v1878 = vadd.f32 %v1868, %v1876
    %v1879 = vtanh.pop %v1878
    %1881 = vrot.lane.b32.xlu0 %v1879, 32
    %v1882 = vpop.permute.xlu0 %1881
    %v1884 = vmul.f32 %v1866, %v1882
    %1886 = vrot.lane.b32.xlu0 %v1884, 64
    %v1887 = vpop.permute.xlu0 %1886
    %v1888 = vsel %vm1117, %v1887, 0
    %1890 = vmatpush.msra.mxu0 0.0
    %1891 = vmatpush.msra.mxu0 0.0
    %1892 = vmatpush.msra.mxu0 0.0
    %1893 = vmatpush.msra.mxu0 0.0
    %1894 = vmatpush.msra.mxu0 0.0
    %1895 = vmatpush.msra.mxu0 0.0
    %1896 = vmatpush.msra.mxu0 0.0
    %1897 = vmatpush.msra.mxu0 0.0
    %1898 = vmatpush.msra.mxu0 0.0
    %1899 = vmatpush.msra.mxu0 0.0
    %1900 = vmatpush.msra.mxu0 0.0
    %1901 = vmatpush.msra.mxu0 0.0
    %1902 = vmatpush.msra.mxu0 %v1700
    %1903 = vmatpush.msra.mxu0 %v1699
    %1904 = vmatpush.msra.mxu0 %v1698
    %1905 = vmatpush.msra.mxu0 %v1697
    %1906 = vmatmul.f32.gmra.mxu0 %v1888
    %v1907 = vpop.f32.mrf.mxu0
    %v1908 = vadd.f32 0.0, %v1907
    %1909 = vdwg.mxu0
    %v1910 = vadd.f32 %v1695, %v1908
    %v1911 = vxor.u32 %v1910, 2147483648
    %v1912 = vmul.f32 %v1911, 1.442695
    %v1913 = vpow.pop %v1912
    %v1914 = vadd.f32 %v1913, 1.0
    %v1915 = vrcp.pop %v1914
    %v1916 = vmul.f32 %v1914, %v1915
    %v1917 = vsub.f32 1.0, %v1916
    %v1918 = vmul.f32 %v1915, %v1917
    %v1919 = vadd.f32 %v1915, %v1918
    %vm1920 = vweird.f32 %v1914
    %vm1921 = vweird.f32 %v1915
    %vm1922 = vmor %vm1920, %vm1921
    %v1923 = vsel %vm1922, %v1915, %v1919
    %v1924 = vand.u32 2147483647, %v1914
    %vm1925 = vcmp.eq.f32.partialorder %v1924, 8.507059e+37
    %v1926 = vand.u32 %v1914, 2147483648
    %v1927 = vor.u32 1.1754944e-38, %v1926
    %v1928 = vsel %vm1925, %v1927, %v1923
    %v1929 = vmul.f32 1.0, %v1928
    %v1930 = vtanh.pop %v1910
    %v1931 = vmul.f32 %v1929, %v1878
    %1933 = vrot.lane.b32.xlu0 %v1930, 32
    %v1934 = vpop.permute.xlu0 %1933
    %v1936 = vmul.f32 %v1929, %v1934
    %1938 = vrot.lane.b32.xlu0 %v1936, 32
    %v1939 = vpop.permute.xlu0 %1938
    %v1941 = vadd.f32 %v1931, %v1939
    %v1942 = vtanh.pop %v1941
    %1944 = vrot.lane.b32.xlu0 %v1942, 32
    %v1945 = vpop.permute.xlu0 %1944
    %v1947 = vmul.f32 %v1929, %v1945
    %1949 = vrot.lane.b32.xlu0 %v1947, 64
    %v1950 = vpop.permute.xlu0 %1949
    %v1951 = vsel %vm1117, %v1950, 0
    %1953 = vmatpush.msra.mxu0 0.0
    %1954 = vmatpush.msra.mxu0 0.0
    %1955 = vmatpush.msra.mxu0 0.0
    %1956 = vmatpush.msra.mxu0 0.0
    %1957 = vmatpush.msra.mxu0 0.0
    %1958 = vmatpush.msra.mxu0 0.0
    %1959 = vmatpush.msra.mxu0 0.0
    %1960 = vmatpush.msra.mxu0 0.0
    %1961 = vmatpush.msra.mxu0 0.0
    %1962 = vmatpush.msra.mxu0 0.0
    %1963 = vmatpush.msra.mxu0 0.0
    %1964 = vmatpush.msra.mxu0 0.0
    %1965 = vmatpush.msra.mxu0 %v1700
    %1966 = vmatpush.msra.mxu0 %v1699
    %1967 = vmatpush.msra.mxu0 %v1698
    %1968 = vmatpush.msra.mxu0 %v1697
    %1969 = vmatmul.f32.gmra.mxu0 %v1951
    %v1970 = vpop.f32.mrf.mxu0
    %v1971 = vadd.f32 0.0, %v1970
    %1972 = vdwg.mxu0
    %v1973 = vadd.f32 %v1695, %v1971
    %v1974 = vxor.u32 %v1973, 2147483648
    %v1975 = vmul.f32 %v1974, 1.442695
    %v1976 = vpow.pop %v1975
    %v1977 = vadd.f32 %v1976, 1.0
    %v1978 = vrcp.pop %v1977
    %v1979 = vmul.f32 %v1977, %v1978
    %v1980 = vsub.f32 1.0, %v1979
    %v1981 = vmul.f32 %v1978, %v1980
    %v1982 = vadd.f32 %v1978, %v1981
    %vm1983 = vweird.f32 %v1977
    %vm1984 = vweird.f32 %v1978
    %vm1985 = vmor %vm1983, %vm1984
    %v1986 = vsel %vm1985, %v1978, %v1982
    %v1987 = vand.u32 2147483647, %v1977
    %vm1988 = vcmp.eq.f32.partialorder %v1987, 8.507059e+37
    %v1989 = vand.u32 %v1977, 2147483648
    %v1990 = vor.u32 1.1754944e-38, %v1989
    %v1991 = vsel %vm1988, %v1990, %v1986
    %v1992 = vmul.f32 1.0, %v1991
    %v1993 = vtanh.pop %v1973
    %v1994 = vmul.f32 %v1992, %v1941
    %1996 = vrot.lane.b32.xlu0 %v1993, 32
    %v1997 = vpop.permute.xlu0 %1996
    %v1999 = vmul.f32 %v1992, %v1997
    %2001 = vrot.lane.b32.xlu0 %v1999, 32
    %v2002 = vpop.permute.xlu0 %2001
    %v2004 = vadd.f32 %v1994, %v2002
    %v2005 = vtanh.pop %v2004
    %2007 = vrot.lane.b32.xlu0 %v2005, 32
    %v2008 = vpop.permute.xlu0 %2007
    %v2010 = vmul.f32 %v1992, %v2008
    %2012 = vrot.lane.b32.xlu0 %v2010, 64
    %v2013 = vpop.permute.xlu0 %2012
    %v2014 = vsel %vm1117, %v2013, 0
    %2016 = vmatpush.msra.mxu0 0.0
    %2017 = vmatpush.msra.mxu0 0.0
    %2018 = vmatpush.msra.mxu0 0.0
    %2019 = vmatpush.msra.mxu0 0.0
    %2020 = vmatpush.msra.mxu0 0.0
    %2021 = vmatpush.msra.mxu0 0.0
    %2022 = vmatpush.msra.mxu0 0.0
    %2023 = vmatpush.msra.mxu0 0.0
    %2024 = vmatpush.msra.mxu0 0.0
    %2025 = vmatpush.msra.mxu0 0.0
    %2026 = vmatpush.msra.mxu0 0.0
    %2027 = vmatpush.msra.mxu0 0.0
    %2028 = vmatpush.msra.mxu0 %v1700
    %2029 = vmatpush.msra.mxu0 %v1699
    %2030 = vmatpush.msra.mxu0 %v1698
    %2031 = vmatpush.msra.mxu0 %v1697
    %2032 = vmatmul.f32.gmra.mxu0 %v2014
    %v2033 = vpop.f32.mrf.mxu0
    %v2034 = vadd.f32 0.0, %v2033
    %2035 = vdwg.mxu0
    %v2036 = vadd.f32 %v1695, %v2034
    %v2037 = vxor.u32 %v2036, 2147483648
    %v2038 = vmul.f32 %v2037, 1.442695
    %v2039 = vpow.pop %v2038
    %v2040 = vadd.f32 %v2039, 1.0
    %v2041 = vrcp.pop %v2040
    %v2042 = vmul.f32 %v2040, %v2041
    %v2043 = vsub.f32 1.0, %v2042
    %v2044 = vmul.f32 %v2041, %v2043
    %v2045 = vadd.f32 %v2041, %v2044
    %vm2046 = vweird.f32 %v2040
    %vm2047 = vweird.f32 %v2041
    %vm2048 = vmor %vm2046, %vm2047
    %v2049 = vsel %vm2048, %v2041, %v2045
    %v2050 = vand.u32 2147483647, %v2040
    %vm2051 = vcmp.eq.f32.partialorder %v2050, 8.507059e+37
    %v2052 = vand.u32 %v2040, 2147483648
    %v2053 = vor.u32 1.1754944e-38, %v2052
    %v2054 = vsel %vm2051, %v2053, %v2049
    %v2055 = vmul.f32 1.0, %v2054
    %v2056 = vtanh.pop %v2036
    %v2057 = vmul.f32 %v2055, %v2004
    %2059 = vrot.lane.b32.xlu0 %v2056, 32
    %v2060 = vpop.permute.xlu0 %2059
    %v2062 = vmul.f32 %v2055, %v2060
    %2064 = vrot.lane.b32.xlu0 %v2062, 32
    %v2065 = vpop.permute.xlu0 %2064
    %v2067 = vadd.f32 %v2057, %v2065
    %v2068 = vtanh.pop %v2067
    %2070 = vrot.lane.b32.xlu0 %v2068, 32
    %v2071 = vpop.permute.xlu0 %2070
    %v2073 = vmul.f32 %v2055, %v2071
    %2075 = vrot.lane.b32.xlu0 %v2073, 64
    %v2076 = vpop.permute.xlu0 %2075
    %v2077 = vsel %vm1117, %v2076, 0
    %2079 = vmatpush.msra.mxu0 0.0
    %2080 = vmatpush.msra.mxu0 0.0
    %2081 = vmatpush.msra.mxu0 0.0
    %2082 = vmatpush.msra.mxu0 0.0
    %2083 = vmatpush.msra.mxu0 0.0
    %2084 = vmatpush.msra.mxu0 0.0
    %2085 = vmatpush.msra.mxu0 0.0
    %2086 = vmatpush.msra.mxu0 0.0
    %2087 = vmatpush.msra.mxu0 0.0
    %2088 = vmatpush.msra.mxu0 0.0
    %2089 = vmatpush.msra.mxu0 0.0
    %2090 = vmatpush.msra.mxu0 0.0
    %2091 = vmatpush.msra.mxu0 %v1700
    %2092 = vmatpush.msra.mxu0 %v1699
    %2093 = vmatpush.msra.mxu0 %v1698
    %2094 = vmatpush.msra.mxu0 %v1697
    %2095 = vmatmul.f32.gmra.mxu0 %v2077
    %v2096 = vpop.f32.mrf.mxu0
    %v2097 = vadd.f32 0.0, %v2096
    %2098 = vdwg.mxu0
    %v2099 = vadd.f32 %v1695, %v2097
    %v2100 = vxor.u32 %v2099, 2147483648
    %v2101 = vmul.f32 %v2100, 1.442695
    %v2102 = vpow.pop %v2101
    %v2103 = vadd.f32 %v2102, 1.0
    %v2104 = vrcp.pop %v2103
    %v2105 = vmul.f32 %v2103, %v2104
    %v2106 = vsub.f32 1.0, %v2105
    %v2107 = vmul.f32 %v2104, %v2106
    %v2108 = vadd.f32 %v2104, %v2107
    %vm2109 = vweird.f32 %v2103
    %vm2110 = vweird.f32 %v2104
    %vm2111 = vmor %vm2109, %vm2110
    %v2112 = vsel %vm2111, %v2104, %v2108
    %v2113 = vand.u32 2147483647, %v2103
    %vm2114 = vcmp.eq.f32.partialorder %v2113, 8.507059e+37
    %v2115 = vand.u32 %v2103, 2147483648
    %v2116 = vor.u32 1.1754944e-38, %v2115
    %v2117 = vsel %vm2114, %v2116, %v2112
    %v2118 = vmul.f32 1.0, %v2117
    %v2119 = vtanh.pop %v2099
    %v2120 = vmul.f32 %v2118, %v2067
    %2122 = vrot.lane.b32.xlu0 %v2119, 32
    %v2123 = vpop.permute.xlu0 %2122
    %v2125 = vmul.f32 %v2118, %v2123
    %2127 = vrot.lane.b32.xlu0 %v2125, 32
    %v2128 = vpop.permute.xlu0 %2127
    %v2130 = vadd.f32 %v2120, %v2128
    %v2131 = vtanh.pop %v2130
    %2133 = vrot.lane.b32.xlu0 %v2131, 32
    %v2134 = vpop.permute.xlu0 %2133
    %v2136 = vmul.f32 %v2118, %v2134
    %2138 = vrot.lane.b32.xlu0 %v2136, 64
    %v2139 = vpop.permute.xlu0 %2138
    %v2140 = vsel %vm1117, %v2139, 0
    %2142 = vmatpush.msra.mxu0 0.0
    %2143 = vmatpush.msra.mxu0 0.0
    %2144 = vmatpush.msra.mxu0 0.0
    %2145 = vmatpush.msra.mxu0 0.0
    %2146 = vmatpush.msra.mxu0 0.0
    %2147 = vmatpush.msra.mxu0 0.0
    %2148 = vmatpush.msra.mxu0 0.0
    %2149 = vmatpush.msra.mxu0 0.0
    %2150 = vmatpush.msra.mxu0 0.0
    %2151 = vmatpush.msra.mxu0 0.0
    %2152 = vmatpush.msra.mxu0 0.0
    %2153 = vmatpush.msra.mxu0 0.0
    %2154 = vmatpush.msra.mxu0 %v1700
    %2155 = vmatpush.msra.mxu0 %v1699
    %2156 = vmatpush.msra.mxu0 %v1698
    %2157 = vmatpush.msra.mxu0 %v1697
    %2158 = vmatmul.f32.gmra.mxu0 %v2140
    %v2159 = vpop.f32.mrf.mxu0
    %v2160 = vadd.f32 0.0, %v2159
    %2161 = vdwg.mxu0
    %v2162 = vadd.f32 %v1695, %v2160
    %v2163 = vxor.u32 %v2162, 2147483648
    %v2164 = vmul.f32 %v2163, 1.442695
    %v2165 = vpow.pop %v2164
    %v2166 = vadd.f32 %v2165, 1.0
    %v2167 = vrcp.pop %v2166
    %v2168 = vmul.f32 %v2166, %v2167
    %v2169 = vsub.f32 1.0, %v2168
    %v2170 = vmul.f32 %v2167, %v2169
    %v2171 = vadd.f32 %v2167, %v2170
    %vm2172 = vweird.f32 %v2166
    %vm2173 = vweird.f32 %v2167
    %vm2174 = vmor %vm2172, %vm2173
    %v2175 = vsel %vm2174, %v2167, %v2171
    %v2176 = vand.u32 2147483647, %v2166
    %vm2177 = vcmp.eq.f32.partialorder %v2176, 8.507059e+37
    %v2178 = vand.u32 %v2166, 2147483648
    %v2179 = vor.u32 1.1754944e-38, %v2178
    %v2180 = vsel %vm2177, %v2179, %v2175
    %v2181 = vmul.f32 1.0, %v2180
    %v2182 = vtanh.pop %v2162
    %v2183 = vmul.f32 %v2181, %v2130
    %2185 = vrot.lane.b32.xlu0 %v2182, 32
    %v2186 = vpop.permute.xlu0 %2185
    %v2188 = vmul.f32 %v2181, %v2186
    %2190 = vrot.lane.b32.xlu0 %v2188, 32
    %v2191 = vpop.permute.xlu0 %2190
    %v2193 = vadd.f32 %v2183, %v2191
    %v2194 = vtanh.pop %v2193
    %2196 = vrot.lane.b32.xlu0 %v2194, 32
    %v2197 = vpop.permute.xlu0 %2196
    %v2199 = vmul.f32 %v2181, %v2197
    %v2200 = vrot.slane %v1821, 6
    %v2202 = vrot.slane %v1884, 4
    %v2204 = vrot.slane %v1947, 2
    %v2206 = vrot.slane %v2073, 6
    %v2208 = vrot.slane %v2136, 4
    %v2211 = vrot.slane %v2199, 2
    %v2213 = vsel %vm1063, %v1758, %v2200
    %v2214 = vsel %vm1065, %v2213, %v2202
    %v2215 = vsel %vm1067, %v2214, %v2204
    %v2216 = vsel %vm1063, %v2010, %v2206
    %v2217 = vsel %vm1065, %v2216, %v2208
    %v2218 = vsel %vm1067, %v2217, %v2211
    %v2219 = vld [vmem:[#allocation10] sm:$0xff]
    %v2220 = vld [vmem:[#allocation10 + $0x8] sm:$0xff]
    %v2221 = vld [vmem:[#allocation10 + $0x10] sm:$0xff]
    %v2222 = vld [vmem:[#allocation10 + $0x18] sm:$0xff]
    %v2223 = vld [vmem:[#allocation10 + $0x20] sm:$0xff]
    %v2224 = vld [vmem:[#allocation10 + $0x28] sm:$0xff]
    %v2225 = vld [vmem:[#allocation10 + $0x30] sm:$0xff]
    %v2226 = vld [vmem:[#allocation10 + $0x38] sm:$0xff]
    %v2227 = vld [vmem:[%s12] sm:$0x3]
    %v2229 = vperm.slane %v2227, 0
    %v2230 = vperm.slane %v2227, 1
    %2235 = vrot.lane.b32.xlu0 %v2215, 64
    %v2236 = vpop.permute.xlu0 %2235
    %2237 = vrot.lane.b32.xlu0 %v2218, 64
    %v2238 = vpop.permute.xlu0 %2237
    %v2239 = vsel %vm1117, %v2236, 0
    %v2241 = vsel %vm1117, %v2238, 0
    %2243 = vmatpush.msra.mxu0 0.0
    %2244 = vmatpush.msra.mxu0 0.0
    %2245 = vmatpush.msra.mxu0 0.0
    %2246 = vmatpush.msra.mxu0 0.0
    %2247 = vmatpush.msra.mxu0 0.0
    %2248 = vmatpush.msra.mxu0 0.0
    %2249 = vmatpush.msra.mxu0 0.0
    %2250 = vmatpush.msra.mxu0 0.0
    %2251 = vmatpush.msra.mxu0 0.0
    %2252 = vmatpush.msra.mxu0 0.0
    %2253 = vmatpush.msra.mxu0 0.0
    %2254 = vmatpush.msra.mxu0 0.0
    %2255 = vmatpush.msra.mxu0 %v2225
    %2256 = vmatpush.msra.mxu0 %v2223
    %2257 = vmatpush.msra.mxu0 %v2221
    %2258 = vmatpush.msra.mxu0 %v2219
    %2259 = vmatmul.f32.gmra.mxu0 %v2239
    %v2260 = vpop.f32.mrf.mxu0
    %v2261 = vadd.f32 %v2229, %v2260
    %2262 = vmatmul.f32.gmra.mxu0 %v2241
    %v2263 = vpop.f32.mrf.mxu0
    %v2264 = vadd.f32 %v2229, %v2263
    %2265 = vdwg.mxu0
    %2266 = vmatpush.msra.mxu0 0.0
    %2267 = vmatpush.msra.mxu0 0.0
    %2268 = vmatpush.msra.mxu0 0.0
    %2269 = vmatpush.msra.mxu0 0.0
    %2270 = vmatpush.msra.mxu0 0.0
    %2271 = vmatpush.msra.mxu0 0.0
    %2272 = vmatpush.msra.mxu0 0.0
    %2273 = vmatpush.msra.mxu0 0.0
    %2274 = vmatpush.msra.mxu0 0.0
    %2275 = vmatpush.msra.mxu0 0.0
    %2276 = vmatpush.msra.mxu0 0.0
    %2277 = vmatpush.msra.mxu0 0.0
    %2278 = vmatpush.msra.mxu0 %v2226
    %2279 = vmatpush.msra.mxu0 %v2224
    %2280 = vmatpush.msra.mxu0 %v2222
    %2281 = vmatpush.msra.mxu0 %v2220
    %2282 = vmatmul.f32.gmra.mxu0 %v2239
    %v2283 = vpop.f32.mrf.mxu0
    %v2284 = vadd.f32 %v2230, %v2283
    %2285 = vmatmul.f32.gmra.mxu0 %v2241
    %v2286 = vpop.f32.mrf.mxu0
    %v2287 = vadd.f32 %v2230, %v2286
    %2288 = vdwg.mxu0
    %v2289 = vld [vmem:[#allocation11] sm:$0xff]
    %v2290 = vld [vmem:[#allocation11 + $0x8] sm:$0xff]
    %v2291 = vld [vmem:[#allocation11 + $0x10] sm:$0xff]
    %v2292 = vld [vmem:[#allocation11 + $0x18] sm:$0xff]
    %v2293 = vld [vmem:[#allocation11 + $0x20] sm:$0xff]
    %v2294 = vld [vmem:[#allocation11 + $0x28] sm:$0xff]
    %v2295 = vld [vmem:[#allocation11 + $0x30] sm:$0xff]
    %v2296 = vld [vmem:[#allocation11 + $0x38] sm:$0xff]
    %v2297 = vld [vmem:[#allocation11 + $0x40] sm:$0xff]
    %v2298 = vld [vmem:[#allocation11 + $0x48] sm:$0xff]
    %v2299 = vld [vmem:[#allocation11 + $0x50] sm:$0xff]
    %v2300 = vld [vmem:[#allocation11 + $0x58] sm:$0xff]
    %v2301 = vld [vmem:[#allocation11 + $0x60] sm:$0xff]
    %v2302 = vld [vmem:[#allocation11 + $0x68] sm:$0xff]
    %v2303 = vld [vmem:[#allocation11 + $0x70] sm:$0xff]
    %v2304 = vld [vmem:[#allocation11 + $0x78] sm:$0xff]
    %2305 = vmatpush.msra.mxu0 0.0
    %2306 = vmatpush.msra.mxu0 0.0
    %2307 = vmatpush.msra.mxu0 0.0
    %2308 = vmatpush.msra.mxu0 0.0
    %2309 = vmatpush.msra.mxu0 0.0
    %2310 = vmatpush.msra.mxu0 0.0
    %2311 = vmatpush.msra.mxu0 0.0
    %2312 = vmatpush.msra.mxu0 0.0
    %2313 = vmatpush.msra.mxu0 %v2303
    %2314 = vmatpush.msra.mxu0 %v2301
    %2315 = vmatpush.msra.mxu0 %v2299
    %2316 = vmatpush.msra.mxu0 %v2297
    %2317 = vmatpush.msra.mxu0 %v2295
    %2318 = vmatpush.msra.mxu0 %v2293
    %2319 = vmatpush.msra.mxu0 %v2291
    %2320 = vmatpush.msra.mxu0 %v2289
    %2321 = vmatmul.f32.gmra.mxu0 %v194
    %v2322 = vpop.f32.mrf.mxu0
    %v2323 = vadd.f32 0.0, %v2322
    %2324 = vdwg.mxu0
    %2325 = vmatpush.msra.mxu0 0.0
    %2326 = vmatpush.msra.mxu0 0.0
    %2327 = vmatpush.msra.mxu0 0.0
    %2328 = vmatpush.msra.mxu0 0.0
    %2329 = vmatpush.msra.mxu0 0.0
    %2330 = vmatpush.msra.mxu0 0.0
    %2331 = vmatpush.msra.mxu0 0.0
    %2332 = vmatpush.msra.mxu0 0.0
    %2333 = vmatpush.msra.mxu0 %v2304
    %2334 = vmatpush.msra.mxu0 %v2302
    %2335 = vmatpush.msra.mxu0 %v2300
    %2336 = vmatpush.msra.mxu0 %v2298
    %2337 = vmatpush.msra.mxu0 %v2296
    %2338 = vmatpush.msra.mxu0 %v2294
    %2339 = vmatpush.msra.mxu0 %v2292
    %2340 = vmatpush.msra.mxu0 %v2290
    %2341 = vmatmul.f32.gmra.mxu0 %v194
    %v2342 = vpop.f32.mrf.mxu0
    %v2343 = vadd.f32 0.0, %v2342
    %2344 = vdwg.mxu0
    %v2345 = vadd.f32 %v2261, %v2323
    %v2346 = vadd.f32 %v2284, %v2343
    %v2347 = vxor.u32 %v2345, 2147483648
    %v2348 = vxor.u32 %v2346, 2147483648
    %v2349 = vmul.f32 %v2347, 1.442695
    %v2350 = vpow.pop %v2349
    %v2351 = vmul.f32 %v2348, 1.442695
    %v2352 = vpow.pop %v2351
    %v2353 = vadd.f32 %v2350, 1.0
    %v2354 = vadd.f32 %v2352, 1.0
    %v2355 = vrcp.pop %v2353
    %v2356 = vmul.f32 %v2353, %v2355
    %v2357 = vsub.f32 1.0, %v2356
    %v2358 = vmul.f32 %v2355, %v2357
    %v2359 = vadd.f32 %v2355, %v2358
    %vm2360 = vweird.f32 %v2353
    %vm2361 = vweird.f32 %v2355
    %vm2362 = vmor %vm2360, %vm2361
    %v2363 = vsel %vm2362, %v2355, %v2359
    %v2364 = vand.u32 2147483647, %v2353
    %vm2365 = vcmp.eq.f32.partialorder %v2364, 8.507059e+37
    %v2366 = vand.u32 %v2353, 2147483648
    %v2367 = vor.u32 1.1754944e-38, %v2366
    %v2368 = vsel %vm2365, %v2367, %v2363
    %v2369 = vmul.f32 1.0, %v2368
    %v2370 = vrcp.pop %v2354
    %v2371 = vmul.f32 %v2354, %v2370
    %v2372 = vsub.f32 1.0, %v2371
    %v2373 = vmul.f32 %v2370, %v2372
    %v2374 = vadd.f32 %v2370, %v2373
    %vm2375 = vweird.f32 %v2354
    %vm2376 = vweird.f32 %v2370
    %vm2377 = vmor %vm2375, %vm2376
    %v2378 = vsel %vm2377, %v2370, %v2374
    %v2379 = vand.u32 2147483647, %v2354
    %vm2380 = vcmp.eq.f32.partialorder %v2379, 8.507059e+37
    %v2381 = vand.u32 %v2354, 2147483648
    %v2382 = vor.u32 1.1754944e-38, %v2381
    %v2383 = vsel %vm2380, %v2382, %v2378
    %v2384 = vmul.f32 1.0, %v2383
    %v2385 = vtanh.pop %v2346
    %v2386 = vmul.f32 %v2369, 0.0
    %2388 = vrot.lane.b32.xlu0 %v2385, 64
    %v2389 = vpop.permute.xlu0 %2388
    %v2391 = vmul.f32 %v2369, %v2389
    %2393 = vrot.lane.b32.xlu0 %v2391, 64
    %v2394 = vpop.permute.xlu0 %2393
    %v2396 = vadd.f32 %v2386, %v2394
    %v2397 = vtanh.pop %v2396
    %2399 = vrot.lane.b32.xlu0 %v2397, 64
    %v2400 = vpop.permute.xlu0 %2399
    %v2402 = vmul.f32 %v2384, %v2400
    %v2404 = vsel %vm192, %v2402, 0
    %2406 = vmatpush.msra.mxu0 0.0
    %2407 = vmatpush.msra.mxu0 0.0
    %2408 = vmatpush.msra.mxu0 0.0
    %2409 = vmatpush.msra.mxu0 0.0
    %2410 = vmatpush.msra.mxu0 0.0
    %2411 = vmatpush.msra.mxu0 0.0
    %2412 = vmatpush.msra.mxu0 0.0
    %2413 = vmatpush.msra.mxu0 0.0
    %2414 = vmatpush.msra.mxu0 %v2303
    %2415 = vmatpush.msra.mxu0 %v2301
    %2416 = vmatpush.msra.mxu0 %v2299
    %2417 = vmatpush.msra.mxu0 %v2297
    %2418 = vmatpush.msra.mxu0 %v2295
    %2419 = vmatpush.msra.mxu0 %v2293
    %2420 = vmatpush.msra.mxu0 %v2291
    %2421 = vmatpush.msra.mxu0 %v2289
    %2422 = vmatmul.f32.gmra.mxu0 %v2404
    %v2423 = vpop.f32.mrf.mxu0
    %v2424 = vadd.f32 0.0, %v2423
    %2425 = vdwg.mxu0
    %2426 = vmatpush.msra.mxu0 0.0
    %2427 = vmatpush.msra.mxu0 0.0
    %2428 = vmatpush.msra.mxu0 0.0
    %2429 = vmatpush.msra.mxu0 0.0
    %2430 = vmatpush.msra.mxu0 0.0
    %2431 = vmatpush.msra.mxu0 0.0
    %2432 = vmatpush.msra.mxu0 0.0
    %2433 = vmatpush.msra.mxu0 0.0
    %2434 = vmatpush.msra.mxu0 %v2304
    %2435 = vmatpush.msra.mxu0 %v2302
    %2436 = vmatpush.msra.mxu0 %v2300
    %2437 = vmatpush.msra.mxu0 %v2298
    %2438 = vmatpush.msra.mxu0 %v2296
    %2439 = vmatpush.msra.mxu0 %v2294
    %2440 = vmatpush.msra.mxu0 %v2292
    %2441 = vmatpush.msra.mxu0 %v2290
    %2442 = vmatmul.f32.gmra.mxu0 %v2404
    %v2443 = vpop.f32.mrf.mxu0
    %v2444 = vadd.f32 0.0, %v2443
    %2445 = vdwg.mxu0
    %v2448 = vrot.slane %v2424, 6
    %v2449 = vrot.slane %v2444, 6
    %v2452 = vadd.f32 %v2261, %v2448
    %v2453 = vadd.f32 %v2284, %v2449
    %v2454 = vxor.u32 %v2452, 2147483648
    %v2455 = vxor.u32 %v2453, 2147483648
    %v2456 = vmul.f32 %v2454, 1.442695
    %v2457 = vpow.pop %v2456
    %v2458 = vmul.f32 %v2455, 1.442695
    %v2459 = vpow.pop %v2458
    %v2460 = vadd.f32 %v2457, 1.0
    %v2461 = vadd.f32 %v2459, 1.0
    %v2462 = vrcp.pop %v2460
    %v2463 = vmul.f32 %v2460, %v2462
    %v2464 = vsub.f32 1.0, %v2463
    %v2465 = vmul.f32 %v2462, %v2464
    %v2466 = vadd.f32 %v2462, %v2465
    %vm2467 = vweird.f32 %v2460
    %vm2468 = vweird.f32 %v2462
    %vm2469 = vmor %vm2467, %vm2468
    %v2470 = vsel %vm2469, %v2462, %v2466
    %v2471 = vand.u32 2147483647, %v2460
    %vm2472 = vcmp.eq.f32.partialorder %v2471, 8.507059e+37
    %v2473 = vand.u32 %v2460, 2147483648
    %v2474 = vor.u32 1.1754944e-38, %v2473
    %v2475 = vsel %vm2472, %v2474, %v2470
    %v2476 = vmul.f32 1.0, %v2475
    %v2477 = vrcp.pop %v2461
    %v2478 = vmul.f32 %v2461, %v2477
    %v2479 = vsub.f32 1.0, %v2478
    %v2480 = vmul.f32 %v2477, %v2479
    %v2481 = vadd.f32 %v2477, %v2480
    %vm2482 = vweird.f32 %v2461
    %vm2483 = vweird.f32 %v2477
    %vm2484 = vmor %vm2482, %vm2483
    %v2485 = vsel %vm2484, %v2477, %v2481
    %v2486 = vand.u32 2147483647, %v2461
    %vm2487 = vcmp.eq.f32.partialorder %v2486, 8.507059e+37
    %v2488 = vand.u32 %v2461, 2147483648
    %v2489 = vor.u32 1.1754944e-38, %v2488
    %v2490 = vsel %vm2487, %v2489, %v2485
    %v2491 = vmul.f32 1.0, %v2490
    %v2492 = vtanh.pop %v2453
    %v2494 = vrot.slane %v2396, 6
    %v2496 = vmul.f32 %v2476, %v2494
    %2498 = vrot.lane.b32.xlu0 %v2492, 64
    %v2499 = vpop.permute.xlu0 %2498
    %v2501 = vmul.f32 %v2476, %v2499
    %2503 = vrot.lane.b32.xlu0 %v2501, 64
    %v2504 = vpop.permute.xlu0 %2503
    %v2506 = vadd.f32 %v2496, %v2504
    %v2507 = vtanh.pop %v2506
    %2509 = vrot.lane.b32.xlu0 %v2507, 64
    %v2510 = vpop.permute.xlu0 %2509
    %v2512 = vmul.f32 %v2491, %v2510
    %v2514 = vrot.slane %v2512, 2
    %v2515 = vsel %vm192, %v2514, 0
    %2517 = vmatpush.msra.mxu0 0.0
    %2518 = vmatpush.msra.mxu0 0.0
    %2519 = vmatpush.msra.mxu0 0.0
    %2520 = vmatpush.msra.mxu0 0.0
    %2521 = vmatpush.msra.mxu0 0.0
    %2522 = vmatpush.msra.mxu0 0.0
    %2523 = vmatpush.msra.mxu0 0.0
    %2524 = vmatpush.msra.mxu0 0.0
    %2525 = vmatpush.msra.mxu0 %v2303
    %2526 = vmatpush.msra.mxu0 %v2301
    %2527 = vmatpush.msra.mxu0 %v2299
    %2528 = vmatpush.msra.mxu0 %v2297
    %2529 = vmatpush.msra.mxu0 %v2295
    %2530 = vmatpush.msra.mxu0 %v2293
    %2531 = vmatpush.msra.mxu0 %v2291
    %2532 = vmatpush.msra.mxu0 %v2289
    %2533 = vmatmul.f32.gmra.mxu0 %v2515
    %v2534 = vpop.f32.mrf.mxu0
    %v2535 = vadd.f32 0.0, %v2534
    %2536 = vdwg.mxu0
    %2537 = vmatpush.msra.mxu0 0.0
    %2538 = vmatpush.msra.mxu0 0.0
    %2539 = vmatpush.msra.mxu0 0.0
    %2540 = vmatpush.msra.mxu0 0.0
    %2541 = vmatpush.msra.mxu0 0.0
    %2542 = vmatpush.msra.mxu0 0.0
    %2543 = vmatpush.msra.mxu0 0.0
    %2544 = vmatpush.msra.mxu0 0.0
    %2545 = vmatpush.msra.mxu0 %v2304
    %2546 = vmatpush.msra.mxu0 %v2302
    %2547 = vmatpush.msra.mxu0 %v2300
    %2548 = vmatpush.msra.mxu0 %v2298
    %2549 = vmatpush.msra.mxu0 %v2296
    %2550 = vmatpush.msra.mxu0 %v2294
    %2551 = vmatpush.msra.mxu0 %v2292
    %2552 = vmatpush.msra.mxu0 %v2290
    %2553 = vmatmul.f32.gmra.mxu0 %v2515
    %v2554 = vpop.f32.mrf.mxu0
    %v2555 = vadd.f32 0.0, %v2554
    %2556 = vdwg.mxu0
    %v2559 = vrot.slane %v2535, 4
    %v2560 = vrot.slane %v2555, 4
    %v2563 = vadd.f32 %v2261, %v2559
    %v2564 = vadd.f32 %v2284, %v2560
    %v2565 = vxor.u32 %v2563, 2147483648
    %v2566 = vxor.u32 %v2564, 2147483648
    %v2567 = vmul.f32 %v2565, 1.442695
    %v2568 = vpow.pop %v2567
    %v2569 = vmul.f32 %v2566, 1.442695
    %v2570 = vpow.pop %v2569
    %v2571 = vadd.f32 %v2568, 1.0
    %v2572 = vadd.f32 %v2570, 1.0
    %v2573 = vrcp.pop %v2571
    %v2574 = vmul.f32 %v2571, %v2573
    %v2575 = vsub.f32 1.0, %v2574
    %v2576 = vmul.f32 %v2573, %v2575
    %v2577 = vadd.f32 %v2573, %v2576
    %vm2578 = vweird.f32 %v2571
    %vm2579 = vweird.f32 %v2573
    %vm2580 = vmor %vm2578, %vm2579
    %v2581 = vsel %vm2580, %v2573, %v2577
    %v2582 = vand.u32 2147483647, %v2571
    %vm2583 = vcmp.eq.f32.partialorder %v2582, 8.507059e+37
    %v2584 = vand.u32 %v2571, 2147483648
    %v2585 = vor.u32 1.1754944e-38, %v2584
    %v2586 = vsel %vm2583, %v2585, %v2581
    %v2587 = vmul.f32 1.0, %v2586
    %v2588 = vrcp.pop %v2572
    %v2589 = vmul.f32 %v2572, %v2588
    %v2590 = vsub.f32 1.0, %v2589
    %v2591 = vmul.f32 %v2588, %v2590
    %v2592 = vadd.f32 %v2588, %v2591
    %vm2593 = vweird.f32 %v2572
    %vm2594 = vweird.f32 %v2588
    %vm2595 = vmor %vm2593, %vm2594
    %v2596 = vsel %vm2595, %v2588, %v2592
    %v2597 = vand.u32 2147483647, %v2572
    %vm2598 = vcmp.eq.f32.partialorder %v2597, 8.507059e+37
    %v2599 = vand.u32 %v2572, 2147483648
    %v2600 = vor.u32 1.1754944e-38, %v2599
    %v2601 = vsel %vm2598, %v2600, %v2596
    %v2602 = vmul.f32 1.0, %v2601
    %v2603 = vtanh.pop %v2564
    %v2605 = vrot.slane %v2506, 6
    %v2607 = vmul.f32 %v2587, %v2605
    %2609 = vrot.lane.b32.xlu0 %v2603, 64
    %v2610 = vpop.permute.xlu0 %2609
    %v2612 = vmul.f32 %v2587, %v2610
    %2614 = vrot.lane.b32.xlu0 %v2612, 64
    %v2615 = vpop.permute.xlu0 %2614
    %v2617 = vadd.f32 %v2607, %v2615
    %v2618 = vtanh.pop %v2617
    %2620 = vrot.lane.b32.xlu0 %v2618, 64
    %v2621 = vpop.permute.xlu0 %2620
    %v2623 = vmul.f32 %v2602, %v2621
    %v2625 = vrot.slane %v2623, 4
    %v2626 = vsel %vm192, %v2625, 0
    %2628 = vmatpush.msra.mxu0 0.0
    %2629 = vmatpush.msra.mxu0 0.0
    %2630 = vmatpush.msra.mxu0 0.0
    %2631 = vmatpush.msra.mxu0 0.0
    %2632 = vmatpush.msra.mxu0 0.0
    %2633 = vmatpush.msra.mxu0 0.0
    %2634 = vmatpush.msra.mxu0 0.0
    %2635 = vmatpush.msra.mxu0 0.0
    %2636 = vmatpush.msra.mxu0 %v2303
    %2637 = vmatpush.msra.mxu0 %v2301
    %2638 = vmatpush.msra.mxu0 %v2299
    %2639 = vmatpush.msra.mxu0 %v2297
    %2640 = vmatpush.msra.mxu0 %v2295
    %2641 = vmatpush.msra.mxu0 %v2293
    %2642 = vmatpush.msra.mxu0 %v2291
    %2643 = vmatpush.msra.mxu0 %v2289
    %2644 = vmatmul.f32.gmra.mxu0 %v2626
    %v2645 = vpop.f32.mrf.mxu0
    %v2646 = vadd.f32 0.0, %v2645
    %2647 = vdwg.mxu0
    %2648 = vmatpush.msra.mxu0 0.0
    %2649 = vmatpush.msra.mxu0 0.0
    %2650 = vmatpush.msra.mxu0 0.0
    %2651 = vmatpush.msra.mxu0 0.0
    %2652 = vmatpush.msra.mxu0 0.0
    %2653 = vmatpush.msra.mxu0 0.0
    %2654 = vmatpush.msra.mxu0 0.0
    %2655 = vmatpush.msra.mxu0 0.0
    %2656 = vmatpush.msra.mxu0 %v2304
    %2657 = vmatpush.msra.mxu0 %v2302
    %2658 = vmatpush.msra.mxu0 %v2300
    %2659 = vmatpush.msra.mxu0 %v2298
    %2660 = vmatpush.msra.mxu0 %v2296
    %2661 = vmatpush.msra.mxu0 %v2294
    %2662 = vmatpush.msra.mxu0 %v2292
    %2663 = vmatpush.msra.mxu0 %v2290
    %2664 = vmatmul.f32.gmra.mxu0 %v2626
    %v2665 = vpop.f32.mrf.mxu0
    %v2666 = vadd.f32 0.0, %v2665
    %2667 = vdwg.mxu0
    %v2670 = vrot.slane %v2646, 2
    %v2671 = vrot.slane %v2666, 2
    %v2674 = vadd.f32 %v2261, %v2670
    %v2675 = vadd.f32 %v2284, %v2671
    %v2676 = vxor.u32 %v2674, 2147483648
    %v2677 = vxor.u32 %v2675, 2147483648
    %v2678 = vmul.f32 %v2676, 1.442695
    %v2679 = vpow.pop %v2678
    %v2680 = vmul.f32 %v2677, 1.442695
    %v2681 = vpow.pop %v2680
    %v2682 = vadd.f32 %v2679, 1.0
    %v2683 = vadd.f32 %v2681, 1.0
    %v2684 = vrcp.pop %v2682
    %v2685 = vmul.f32 %v2682, %v2684
    %v2686 = vsub.f32 1.0, %v2685
    %v2687 = vmul.f32 %v2684, %v2686
    %v2688 = vadd.f32 %v2684, %v2687
    %vm2689 = vweird.f32 %v2682
    %vm2690 = vweird.f32 %v2684
    %vm2691 = vmor %vm2689, %vm2690
    %v2692 = vsel %vm2691, %v2684, %v2688
    %v2693 = vand.u32 2147483647, %v2682
    %vm2694 = vcmp.eq.f32.partialorder %v2693, 8.507059e+37
    %v2695 = vand.u32 %v2682, 2147483648
    %v2696 = vor.u32 1.1754944e-38, %v2695
    %v2697 = vsel %vm2694, %v2696, %v2692
    %v2698 = vmul.f32 1.0, %v2697
    %v2699 = vrcp.pop %v2683
    %v2700 = vmul.f32 %v2683, %v2699
    %v2701 = vsub.f32 1.0, %v2700
    %v2702 = vmul.f32 %v2699, %v2701
    %v2703 = vadd.f32 %v2699, %v2702
    %vm2704 = vweird.f32 %v2683
    %vm2705 = vweird.f32 %v2699
    %vm2706 = vmor %vm2704, %vm2705
    %v2707 = vsel %vm2706, %v2699, %v2703
    %v2708 = vand.u32 2147483647, %v2683
    %vm2709 = vcmp.eq.f32.partialorder %v2708, 8.507059e+37
    %v2710 = vand.u32 %v2683, 2147483648
    %v2711 = vor.u32 1.1754944e-38, %v2710
    %v2712 = vsel %vm2709, %v2711, %v2707
    %v2713 = vmul.f32 1.0, %v2712
    %v2714 = vtanh.pop %v2675
    %v2716 = vrot.slane %v2617, 6
    %v2718 = vmul.f32 %v2698, %v2716
    %2720 = vrot.lane.b32.xlu0 %v2714, 64
    %v2721 = vpop.permute.xlu0 %2720
    %v2723 = vmul.f32 %v2698, %v2721
    %2725 = vrot.lane.b32.xlu0 %v2723, 64
    %v2726 = vpop.permute.xlu0 %2725
    %v2728 = vadd.f32 %v2718, %v2726
    %v2729 = vtanh.pop %v2728
    %2731 = vrot.lane.b32.xlu0 %v2729, 64
    %v2732 = vpop.permute.xlu0 %2731
    %v2734 = vmul.f32 %v2713, %v2732
    %v2736 = vrot.slane %v2734, 6
    %v2737 = vsel %vm192, %v2736, 0
    %2739 = vmatpush.msra.mxu0 0.0
    %2740 = vmatpush.msra.mxu0 0.0
    %2741 = vmatpush.msra.mxu0 0.0
    %2742 = vmatpush.msra.mxu0 0.0
    %2743 = vmatpush.msra.mxu0 0.0
    %2744 = vmatpush.msra.mxu0 0.0
    %2745 = vmatpush.msra.mxu0 0.0
    %2746 = vmatpush.msra.mxu0 0.0
    %2747 = vmatpush.msra.mxu0 %v2303
    %2748 = vmatpush.msra.mxu0 %v2301
    %2749 = vmatpush.msra.mxu0 %v2299
    %2750 = vmatpush.msra.mxu0 %v2297
    %2751 = vmatpush.msra.mxu0 %v2295
    %2752 = vmatpush.msra.mxu0 %v2293
    %2753 = vmatpush.msra.mxu0 %v2291
    %2754 = vmatpush.msra.mxu0 %v2289
    %2755 = vmatmul.f32.gmra.mxu0 %v2737
    %v2756 = vpop.f32.mrf.mxu0
    %v2757 = vadd.f32 0.0, %v2756
    %2758 = vdwg.mxu0
    %2759 = vmatpush.msra.mxu0 0.0
    %2760 = vmatpush.msra.mxu0 0.0
    %2761 = vmatpush.msra.mxu0 0.0
    %2762 = vmatpush.msra.mxu0 0.0
    %2763 = vmatpush.msra.mxu0 0.0
    %2764 = vmatpush.msra.mxu0 0.0
    %2765 = vmatpush.msra.mxu0 0.0
    %2766 = vmatpush.msra.mxu0 0.0
    %2767 = vmatpush.msra.mxu0 %v2304
    %2768 = vmatpush.msra.mxu0 %v2302
    %2769 = vmatpush.msra.mxu0 %v2300
    %2770 = vmatpush.msra.mxu0 %v2298
    %2771 = vmatpush.msra.mxu0 %v2296
    %2772 = vmatpush.msra.mxu0 %v2294
    %2773 = vmatpush.msra.mxu0 %v2292
    %2774 = vmatpush.msra.mxu0 %v2290
    %2775 = vmatmul.f32.gmra.mxu0 %v2737
    %v2776 = vpop.f32.mrf.mxu0
    %v2777 = vadd.f32 0.0, %v2776
    %2778 = vdwg.mxu0
    %v2779 = vadd.f32 %v2264, %v2757
    %v2780 = vadd.f32 %v2287, %v2777
    %v2781 = vxor.u32 %v2779, 2147483648
    %v2782 = vxor.u32 %v2780, 2147483648
    %v2783 = vmul.f32 %v2781, 1.442695
    %v2784 = vpow.pop %v2783
    %v2785 = vmul.f32 %v2782, 1.442695
    %v2786 = vpow.pop %v2785
    %v2787 = vadd.f32 %v2784, 1.0
    %v2788 = vadd.f32 %v2786, 1.0
    %v2789 = vrcp.pop %v2787
    %v2790 = vmul.f32 %v2787, %v2789
    %v2791 = vsub.f32 1.0, %v2790
    %v2792 = vmul.f32 %v2789, %v2791
    %v2793 = vadd.f32 %v2789, %v2792
    %vm2794 = vweird.f32 %v2787
    %vm2795 = vweird.f32 %v2789
    %vm2796 = vmor %vm2794, %vm2795
    %v2797 = vsel %vm2796, %v2789, %v2793
    %v2798 = vand.u32 2147483647, %v2787
    %vm2799 = vcmp.eq.f32.partialorder %v2798, 8.507059e+37
    %v2800 = vand.u32 %v2787, 2147483648
    %v2801 = vor.u32 1.1754944e-38, %v2800
    %v2802 = vsel %vm2799, %v2801, %v2797
    %v2803 = vmul.f32 1.0, %v2802
    %v2804 = vrcp.pop %v2788
    %v2805 = vmul.f32 %v2788, %v2804
    %v2806 = vsub.f32 1.0, %v2805
    %v2807 = vmul.f32 %v2804, %v2806
    %v2808 = vadd.f32 %v2804, %v2807
    %vm2809 = vweird.f32 %v2788
    %vm2810 = vweird.f32 %v2804
    %vm2811 = vmor %vm2809, %vm2810
    %v2812 = vsel %vm2811, %v2804, %v2808
    %v2813 = vand.u32 2147483647, %v2788
    %vm2814 = vcmp.eq.f32.partialorder %v2813, 8.507059e+37
    %v2815 = vand.u32 %v2788, 2147483648
    %v2816 = vor.u32 1.1754944e-38, %v2815
    %v2817 = vsel %vm2814, %v2816, %v2812
    %v2818 = vmul.f32 1.0, %v2817
    %v2819 = vtanh.pop %v2780
    %v2821 = vrot.slane %v2728, 6
    %v2823 = vmul.f32 %v2803, %v2821
    %2825 = vrot.lane.b32.xlu0 %v2819, 64
    %v2826 = vpop.permute.xlu0 %2825
    %v2828 = vmul.f32 %v2803, %v2826
    %2830 = vrot.lane.b32.xlu0 %v2828, 64
    %v2831 = vpop.permute.xlu0 %2830
    %v2833 = vadd.f32 %v2823, %v2831
    %v2834 = vtanh.pop %v2833
    %2836 = vrot.lane.b32.xlu0 %v2834, 64
    %v2837 = vpop.permute.xlu0 %2836
    %v2839 = vmul.f32 %v2818, %v2837
    %v2841 = vsel %vm192, %v2839, 0
    %2843 = vmatpush.msra.mxu0 0.0
    %2844 = vmatpush.msra.mxu0 0.0
    %2845 = vmatpush.msra.mxu0 0.0
    %2846 = vmatpush.msra.mxu0 0.0
    %2847 = vmatpush.msra.mxu0 0.0
    %2848 = vmatpush.msra.mxu0 0.0
    %2849 = vmatpush.msra.mxu0 0.0
    %2850 = vmatpush.msra.mxu0 0.0
    %2851 = vmatpush.msra.mxu0 %v2303
    %2852 = vmatpush.msra.mxu0 %v2301
    %2853 = vmatpush.msra.mxu0 %v2299
    %2854 = vmatpush.msra.mxu0 %v2297
    %2855 = vmatpush.msra.mxu0 %v2295
    %2856 = vmatpush.msra.mxu0 %v2293
    %2857 = vmatpush.msra.mxu0 %v2291
    %2858 = vmatpush.msra.mxu0 %v2289
    %2859 = vmatmul.f32.gmra.mxu0 %v2841
    %v2860 = vpop.f32.mrf.mxu0
    %v2861 = vadd.f32 0.0, %v2860
    %2862 = vdwg.mxu0
    %2863 = vmatpush.msra.mxu0 0.0
    %2864 = vmatpush.msra.mxu0 0.0
    %2865 = vmatpush.msra.mxu0 0.0
    %2866 = vmatpush.msra.mxu0 0.0
    %2867 = vmatpush.msra.mxu0 0.0
    %2868 = vmatpush.msra.mxu0 0.0
    %2869 = vmatpush.msra.mxu0 0.0
    %2870 = vmatpush.msra.mxu0 0.0
    %2871 = vmatpush.msra.mxu0 %v2304
    %2872 = vmatpush.msra.mxu0 %v2302
    %2873 = vmatpush.msra.mxu0 %v2300
    %2874 = vmatpush.msra.mxu0 %v2298
    %2875 = vmatpush.msra.mxu0 %v2296
    %2876 = vmatpush.msra.mxu0 %v2294
    %2877 = vmatpush.msra.mxu0 %v2292
    %2878 = vmatpush.msra.mxu0 %v2290
    %2879 = vmatmul.f32.gmra.mxu0 %v2841
    %v2880 = vpop.f32.mrf.mxu0
    %v2881 = vadd.f32 0.0, %v2880
    %2882 = vdwg.mxu0
    %v2885 = vrot.slane %v2861, 6
    %v2886 = vrot.slane %v2881, 6
    %v2889 = vadd.f32 %v2264, %v2885
    %v2890 = vadd.f32 %v2287, %v2886
    %v2891 = vxor.u32 %v2889, 2147483648
    %v2892 = vxor.u32 %v2890, 2147483648
    %v2893 = vmul.f32 %v2891, 1.442695
    %v2894 = vpow.pop %v2893
    %v2895 = vmul.f32 %v2892, 1.442695
    %v2896 = vpow.pop %v2895
    %v2897 = vadd.f32 %v2894, 1.0
    %v2898 = vadd.f32 %v2896, 1.0
    %v2899 = vrcp.pop %v2897
    %v2900 = vmul.f32 %v2897, %v2899
    %v2901 = vsub.f32 1.0, %v2900
    %v2902 = vmul.f32 %v2899, %v2901
    %v2903 = vadd.f32 %v2899, %v2902
    %vm2904 = vweird.f32 %v2897
    %vm2905 = vweird.f32 %v2899
    %vm2906 = vmor %vm2904, %vm2905
    %v2907 = vsel %vm2906, %v2899, %v2903
    %v2908 = vand.u32 2147483647, %v2897
    %vm2909 = vcmp.eq.f32.partialorder %v2908, 8.507059e+37
    %v2910 = vand.u32 %v2897, 2147483648
    %v2911 = vor.u32 1.1754944e-38, %v2910
    %v2912 = vsel %vm2909, %v2911, %v2907
    %v2913 = vmul.f32 1.0, %v2912
    %v2914 = vrcp.pop %v2898
    %v2915 = vmul.f32 %v2898, %v2914
    %v2916 = vsub.f32 1.0, %v2915
    %v2917 = vmul.f32 %v2914, %v2916
    %v2918 = vadd.f32 %v2914, %v2917
    %vm2919 = vweird.f32 %v2898
    %vm2920 = vweird.f32 %v2914
    %vm2921 = vmor %vm2919, %vm2920
    %v2922 = vsel %vm2921, %v2914, %v2918
    %v2923 = vand.u32 2147483647, %v2898
    %vm2924 = vcmp.eq.f32.partialorder %v2923, 8.507059e+37
    %v2925 = vand.u32 %v2898, 2147483648
    %v2926 = vor.u32 1.1754944e-38, %v2925
    %v2927 = vsel %vm2924, %v2926, %v2922
    %v2928 = vmul.f32 1.0, %v2927
    %v2929 = vtanh.pop %v2890
    %v2931 = vrot.slane %v2833, 6
    %v2933 = vmul.f32 %v2913, %v2931
    %2935 = vrot.lane.b32.xlu0 %v2929, 64
    %v2936 = vpop.permute.xlu0 %2935
    %v2938 = vmul.f32 %v2913, %v2936
    %2940 = vrot.lane.b32.xlu0 %v2938, 64
    %v2941 = vpop.permute.xlu0 %2940
    %v2943 = vadd.f32 %v2933, %v2941
    %v2944 = vtanh.pop %v2943
    %2946 = vrot.lane.b32.xlu0 %v2944, 64
    %v2947 = vpop.permute.xlu0 %2946
    %v2949 = vmul.f32 %v2928, %v2947
    %v2951 = vrot.slane %v2949, 2
    %v2952 = vsel %vm192, %v2951, 0
    %2954 = vmatpush.msra.mxu0 0.0
    %2955 = vmatpush.msra.mxu0 0.0
    %2956 = vmatpush.msra.mxu0 0.0
    %2957 = vmatpush.msra.mxu0 0.0
    %2958 = vmatpush.msra.mxu0 0.0
    %2959 = vmatpush.msra.mxu0 0.0
    %2960 = vmatpush.msra.mxu0 0.0
    %2961 = vmatpush.msra.mxu0 0.0
    %2962 = vmatpush.msra.mxu0 %v2303
    %2963 = vmatpush.msra.mxu0 %v2301
    %2964 = vmatpush.msra.mxu0 %v2299
    %2965 = vmatpush.msra.mxu0 %v2297
    %2966 = vmatpush.msra.mxu0 %v2295
    %2967 = vmatpush.msra.mxu0 %v2293
    %2968 = vmatpush.msra.mxu0 %v2291
    %2969 = vmatpush.msra.mxu0 %v2289
    %2970 = vmatmul.f32.gmra.mxu0 %v2952
    %v2971 = vpop.f32.mrf.mxu0
    %v2972 = vadd.f32 0.0, %v2971
    %2973 = vdwg.mxu0
    %2974 = vmatpush.msra.mxu0 0.0
    %2975 = vmatpush.msra.mxu0 0.0
    %2976 = vmatpush.msra.mxu0 0.0
    %2977 = vmatpush.msra.mxu0 0.0
    %2978 = vmatpush.msra.mxu0 0.0
    %2979 = vmatpush.msra.mxu0 0.0
    %2980 = vmatpush.msra.mxu0 0.0
    %2981 = vmatpush.msra.mxu0 0.0
    %2982 = vmatpush.msra.mxu0 %v2304
    %2983 = vmatpush.msra.mxu0 %v2302
    %2984 = vmatpush.msra.mxu0 %v2300
    %2985 = vmatpush.msra.mxu0 %v2298
    %2986 = vmatpush.msra.mxu0 %v2296
    %2987 = vmatpush.msra.mxu0 %v2294
    %2988 = vmatpush.msra.mxu0 %v2292
    %2989 = vmatpush.msra.mxu0 %v2290
    %2990 = vmatmul.f32.gmra.mxu0 %v2952
    %v2991 = vpop.f32.mrf.mxu0
    %v2992 = vadd.f32 0.0, %v2991
    %2993 = vdwg.mxu0
    %v2996 = vrot.slane %v2972, 4
    %v2997 = vrot.slane %v2992, 4
    %v3000 = vadd.f32 %v2264, %v2996
    %v3001 = vadd.f32 %v2287, %v2997
    %v3002 = vxor.u32 %v3000, 2147483648
    %v3003 = vxor.u32 %v3001, 2147483648
    %v3004 = vmul.f32 %v3002, 1.442695
    %v3005 = vpow.pop %v3004
    %v3006 = vmul.f32 %v3003, 1.442695
    %v3007 = vpow.pop %v3006
    %v3008 = vadd.f32 %v3005, 1.0
    %v3009 = vadd.f32 %v3007, 1.0
    %v3010 = vrcp.pop %v3008
    %v3011 = vmul.f32 %v3008, %v3010
    %v3012 = vsub.f32 1.0, %v3011
    %v3013 = vmul.f32 %v3010, %v3012
    %v3014 = vadd.f32 %v3010, %v3013
    %vm3015 = vweird.f32 %v3008
    %vm3016 = vweird.f32 %v3010
    %vm3017 = vmor %vm3015, %vm3016
    %v3018 = vsel %vm3017, %v3010, %v3014
    %v3019 = vand.u32 2147483647, %v3008
    %vm3020 = vcmp.eq.f32.partialorder %v3019, 8.507059e+37
    %v3021 = vand.u32 %v3008, 2147483648
    %v3022 = vor.u32 1.1754944e-38, %v3021
    %v3023 = vsel %vm3020, %v3022, %v3018
    %v3024 = vmul.f32 1.0, %v3023
    %v3025 = vrcp.pop %v3009
    %v3026 = vmul.f32 %v3009, %v3025
    %v3027 = vsub.f32 1.0, %v3026
    %v3028 = vmul.f32 %v3025, %v3027
    %v3029 = vadd.f32 %v3025, %v3028
    %vm3030 = vweird.f32 %v3009
    %vm3031 = vweird.f32 %v3025
    %vm3032 = vmor %vm3030, %vm3031
    %v3033 = vsel %vm3032, %v3025, %v3029
    %v3034 = vand.u32 2147483647, %v3009
    %vm3035 = vcmp.eq.f32.partialorder %v3034, 8.507059e+37
    %v3036 = vand.u32 %v3009, 2147483648
    %v3037 = vor.u32 1.1754944e-38, %v3036
    %v3038 = vsel %vm3035, %v3037, %v3033
    %v3039 = vmul.f32 1.0, %v3038
    %v3040 = vtanh.pop %v3001
    %v3042 = vrot.slane %v2943, 6
    %v3044 = vmul.f32 %v3024, %v3042
    %3046 = vrot.lane.b32.xlu0 %v3040, 64
    %v3047 = vpop.permute.xlu0 %3046
    %v3049 = vmul.f32 %v3024, %v3047
    %3051 = vrot.lane.b32.xlu0 %v3049, 64
    %v3052 = vpop.permute.xlu0 %3051
    %v3054 = vadd.f32 %v3044, %v3052
    %v3055 = vtanh.pop %v3054
    %3057 = vrot.lane.b32.xlu0 %v3055, 64
    %v3058 = vpop.permute.xlu0 %3057
    %v3060 = vmul.f32 %v3039, %v3058
    %v3062 = vrot.slane %v3060, 4
    %v3063 = vsel %vm192, %v3062, 0
    %3065 = vmatpush.msra.mxu0 0.0
    %3066 = vmatpush.msra.mxu0 0.0
    %3067 = vmatpush.msra.mxu0 0.0
    %3068 = vmatpush.msra.mxu0 0.0
    %3069 = vmatpush.msra.mxu0 0.0
    %3070 = vmatpush.msra.mxu0 0.0
    %3071 = vmatpush.msra.mxu0 0.0
    %3072 = vmatpush.msra.mxu0 0.0
    %3073 = vmatpush.msra.mxu0 %v2303
    %3074 = vmatpush.msra.mxu0 %v2301
    %3075 = vmatpush.msra.mxu0 %v2299
    %3076 = vmatpush.msra.mxu0 %v2297
    %3077 = vmatpush.msra.mxu0 %v2295
    %3078 = vmatpush.msra.mxu0 %v2293
    %3079 = vmatpush.msra.mxu0 %v2291
    %3080 = vmatpush.msra.mxu0 %v2289
    %3081 = vmatmul.f32.gmra.mxu0 %v3063
    %v3082 = vpop.f32.mrf.mxu0
    %v3083 = vadd.f32 0.0, %v3082
    %3084 = vdwg.mxu0
    %3085 = vmatpush.msra.mxu0 0.0
    %3086 = vmatpush.msra.mxu0 0.0
    %3087 = vmatpush.msra.mxu0 0.0
    %3088 = vmatpush.msra.mxu0 0.0
    %3089 = vmatpush.msra.mxu0 0.0
    %3090 = vmatpush.msra.mxu0 0.0
    %3091 = vmatpush.msra.mxu0 0.0
    %3092 = vmatpush.msra.mxu0 0.0
    %3093 = vmatpush.msra.mxu0 %v2304
    %3094 = vmatpush.msra.mxu0 %v2302
    %3095 = vmatpush.msra.mxu0 %v2300
    %3096 = vmatpush.msra.mxu0 %v2298
    %3097 = vmatpush.msra.mxu0 %v2296
    %3098 = vmatpush.msra.mxu0 %v2294
    %3099 = vmatpush.msra.mxu0 %v2292
    %3100 = vmatpush.msra.mxu0 %v2290
    %3101 = vmatmul.f32.gmra.mxu0 %v3063
    %v3102 = vpop.f32.mrf.mxu0
    %v3103 = vadd.f32 0.0, %v3102
    %3104 = vdwg.mxu0
    %v3107 = vrot.slane %v3083, 2
    %v3108 = vrot.slane %v3103, 2
    %v3111 = vadd.f32 %v2264, %v3107
    %v3112 = vadd.f32 %v2287, %v3108
    %v3113 = vxor.u32 %v3111, 2147483648
    %v3114 = vxor.u32 %v3112, 2147483648
    %v3115 = vmul.f32 %v3113, 1.442695
    %v3116 = vpow.pop %v3115
    %v3117 = vmul.f32 %v3114, 1.442695
    %v3118 = vpow.pop %v3117
    %v3119 = vadd.f32 %v3116, 1.0
    %v3120 = vadd.f32 %v3118, 1.0
    %v3121 = vrcp.pop %v3119
    %v3122 = vmul.f32 %v3119, %v3121
    %v3123 = vsub.f32 1.0, %v3122
    %v3124 = vmul.f32 %v3121, %v3123
    %v3125 = vadd.f32 %v3121, %v3124
    %vm3126 = vweird.f32 %v3119
    %vm3127 = vweird.f32 %v3121
    %vm3128 = vmor %vm3126, %vm3127
    %v3129 = vsel %vm3128, %v3121, %v3125
    %v3130 = vand.u32 2147483647, %v3119
    %vm3131 = vcmp.eq.f32.partialorder %v3130, 8.507059e+37
    %v3132 = vand.u32 %v3119, 2147483648
    %v3133 = vor.u32 1.1754944e-38, %v3132
    %v3134 = vsel %vm3131, %v3133, %v3129
    %v3135 = vmul.f32 1.0, %v3134
    %v3136 = vrcp.pop %v3120
    %v3137 = vmul.f32 %v3120, %v3136
    %v3138 = vsub.f32 1.0, %v3137
    %v3139 = vmul.f32 %v3136, %v3138
    %v3140 = vadd.f32 %v3136, %v3139
    %vm3141 = vweird.f32 %v3120
    %vm3142 = vweird.f32 %v3136
    %vm3143 = vmor %vm3141, %vm3142
    %v3144 = vsel %vm3143, %v3136, %v3140
    %v3145 = vand.u32 2147483647, %v3120
    %vm3146 = vcmp.eq.f32.partialorder %v3145, 8.507059e+37
    %v3147 = vand.u32 %v3120, 2147483648
    %v3148 = vor.u32 1.1754944e-38, %v3147
    %v3149 = vsel %vm3146, %v3148, %v3144
    %v3150 = vmul.f32 1.0, %v3149
    %v3151 = vtanh.pop %v3112
    %v3153 = vrot.slane %v3054, 6
    %v3155 = vmul.f32 %v3135, %v3153
    %3157 = vrot.lane.b32.xlu0 %v3151, 64
    %v3158 = vpop.permute.xlu0 %3157
    %v3160 = vmul.f32 %v3135, %v3158
    %3162 = vrot.lane.b32.xlu0 %v3160, 64
    %v3163 = vpop.permute.xlu0 %3162
    %v3165 = vadd.f32 %v3155, %v3163
    %v3166 = vtanh.pop %v3165
    %3168 = vrot.lane.b32.xlu0 %v3166, 64
    %v3169 = vpop.permute.xlu0 %3168
    %v3171 = vmul.f32 %v3150, %v3169
    %v3172 = vsel %vm1063, %v2402, %v2512
    %v3173 = vsel %vm1065, %v3172, %v2623
    %v3174 = vsel %vm1067, %v3173, %v2734
    %v3175 = vsel %vm1063, %v2839, %v2949
    %v3176 = vsel %vm1065, %v3175, %v3060
    %v3177 = vsel %vm1067, %v3176, %v3171
    %v3178 = vld [vmem:[%s13] sm:$0xff]
    %v3179 = vld [vmem:[%s13 + $0x8] sm:$0xff]
    %v3180 = vld [vmem:[%s13 + $0x10] sm:$0xff]
    %v3181 = vld [vmem:[%s13 + $0x18] sm:$0xff]
    %v3182 = vld [vmem:[%s13 + $0x20] sm:$0xff]
    %v3183 = vld [vmem:[%s13 + $0x28] sm:$0xff]
    %v3184 = vld [vmem:[%s13 + $0x30] sm:$0xff]
    %v3185 = vld [vmem:[%s13 + $0x38] sm:$0xff]
    %v3186 = vld [vmem:[#allocation2] sm:$0x1]
    %v3188 = vperm.slane %v3186, 0
    %v3191 = vsel %vm192, %v3174, 0
    %v3194 = vsel %vm192, %v3177, 0
    %3196 = vmatpush.msra.mxu0 0.0
    %3197 = vmatpush.msra.mxu0 0.0
    %3198 = vmatpush.msra.mxu0 0.0
    %3199 = vmatpush.msra.mxu0 0.0
    %3200 = vmatpush.msra.mxu0 0.0
    %3201 = vmatpush.msra.mxu0 0.0
    %3202 = vmatpush.msra.mxu0 0.0
    %3203 = vmatpush.msra.mxu0 0.0
    %3204 = vmatpush.msra.mxu0 %v3185
    %3205 = vmatpush.msra.mxu0 %v3184
    %3206 = vmatpush.msra.mxu0 %v3183
    %3207 = vmatpush.msra.mxu0 %v3182
    %3208 = vmatpush.msra.mxu0 %v3181
    %3209 = vmatpush.msra.mxu0 %v3180
    %3210 = vmatpush.msra.mxu0 %v3179
    %3211 = vmatpush.msra.mxu0 %v3178
    %3212 = vmatmul.f32.gmra.mxu0 %v3191
    %v3213 = vpop.f32.mrf.mxu0
    %v3214 = vadd.f32 %v3188, %v3213
    %3215 = vmatmul.f32.gmra.mxu0 %v3194
    %v3216 = vpop.f32.mrf.mxu0
    %v3217 = vadd.f32 %v3188, %v3216
    %3218 = vdwg.mxu0
    %vm3219 = vcmask 7168
    %3220 = vst.msk [vmem:[%s15] sm:$0xff] %vm3219, %v3214
    %3221 = vst.msk [vmem:[%s15 + $0x8] sm:$0xff] %vm3219, %v3217
    // Predicated region
    $region86: #{recurrent_autoencoder_forward.1} parent=1 // pred_check
      _
    $region87: #{recurrent_autoencoder_forward.1} parent=1 // pred_check_branch
      %3223 = sbr.rel (0) target = $region89
    $region88: #{recurrent_autoencoder_forward.1} parent=1 // pred_region
      _
    $region89: #{recurrent_autoencoder_forward.1} parent=1 // pred_fallthru
      _
    // Predicated region
    $region90: #{recurrent_autoencoder_forward.1} parent=1 // pred_check
      _
    $region91: #{recurrent_autoencoder_forward.1} parent=1 // pred_check_branch
      %3225 = sbr.rel (0) target = $region93
    $region92: #{recurrent_autoencoder_forward.1} parent=1 // pred_region
      _
    $region93: #{recurrent_autoencoder_forward.1} parent=1 // pred_fallthru
      _
    %3226 = vsyncpa [#allocation4], 1
    %3227 = vsyncpa [#allocation6], 1
    %3228 = vsyncpa [#allocation9], 1
    %3229 = vsyncpa [#allocation12], 1

</llo_original>
